<compile_context>
chip_gen: v5e
topology: v5e:2x2
jax: 0.10.0
libtpu: 0.0.40
codegen_flags: <defaults>
</compile_context>

<pallas_src>
import functools

import jax
import jax.numpy as jnp
import numpy as np
from jax.experimental import pallas as pl
from jax.experimental.pallas import tpu as pltpu

VMEM_SPEC = pl.BlockSpec(memory_space=pltpu.MemorySpace.VMEM)
_EPS = 1e-5


def _ru(x, m):  # round up to multiple of m
    return -(-x // m) * m


# --------------------------------------------------------------------------
# static geometry + constant helpers (numpy, built once at trace time)
# --------------------------------------------------------------------------

def _stage_cfg(batch, h):
    hp = h + 2                                  # padded height / width
    p = _ru(hp * hp, 128)                       # 128-lane aligned per-image block
    o = hp + 1                                  # flat offset of 1st interior px
    lt = (batch - 1) * p + (h - 1) * hp + h     # conv output span (all images)
    return dict(h=h, hp=hp, p=p, o=o, lt=lt,
                L=batch * p - hp - 1, bp=batch * p)


def _mask_full_np(batch, st):
    """(1, batch*P) mask: 1 at real pixels, 0 at pad border and block tail."""
    g = np.zeros((st["hp"], st["hp"]), np.float32)
    g[1:st["h"] + 1, 1:st["h"] + 1] = 1.0
    row = np.zeros((st["p"],), np.float32)
    row[:st["hp"] * st["hp"]] = g.reshape(-1)
    return np.tile(row, batch).reshape(1, batch * st["p"])


def _pool_sel_np(batch, st_in, st_out):
    """Block-diagonal 0/1 (L_in, batch*P_out): picks 2x2-pool anchor positions
    of every image and scatters them into the next stage's padded layout."""
    hp_i, p_i = st_in["hp"], st_in["p"]
    hp_o, p_o, h_o = st_out["hp"], st_out["p"], st_out["h"]
    s = np.zeros((st_in["L"], batch * p_o), np.float32)
    for bi in range(batch):
        for i2 in range(h_o):
            for j2 in range(h_o):
                q = bi * p_i + (2 * i2 + 1) * hp_i + (2 * j2 + 1)
                r = bi * p_o + (i2 + 1) * hp_o + (j2 + 1)
                s[q, r] = 1.0
    return s


def _block_ind_np(batch, p):
    """(batch*P, batch) indicator: 1 on rows of image bi in column bi."""
    m = np.zeros((batch * p, batch), np.float32)
    for bi in range(batch):
        m[bi * p:(bi + 1) * p, bi] = 1.0
    return m


def _group_mat_np(c, groups):
    """(C, C) indicator: 1 where two channels share a GroupNorm group."""
    gid = np.arange(c) // (c // groups)
    return (gid[:, None] == gid[None, :]).astype(np.float32)


# --------------------------------------------------------------------------
# weight prep (traceable) + slab packing
# --------------------------------------------------------------------------

def _w3x3_merged(w, cin_p, cout_p):
    """torch (Cout,Cin,3,3) -> (Cout_p, 9*Cin_p), column index t*Cin_p+ci,
    t = 3*dy + dx (matches the stacked shifted-slice operand)."""
    cout, cin = int(w.shape[0]), int(w.shape[1])
    wt = jnp.transpose(w, (0, 2, 3, 1)).reshape(cout, 9, cin)
    wt = jnp.pad(wt, ((0, cout_p - cout), (0, 0), (0, cin_p - cin)))
    return wt.reshape(cout_p, 9 * cin_p)


def _w1x1_p(w, cin_p, cout_p):
    cout, cin = int(w.shape[0]), int(w.shape[1])
    return jnp.pad(w.reshape(cout, cin), ((0, cout_p - cout), (0, cin_p - cin)))


def _vec_p(v, n_p):
    return jnp.pad(v, (0, n_p - int(v.shape[0])))


def _build_slab(entries):
    """Pack 2-D matrices into one (R, W) slab, rows padded to multiples of 8.
    Returns (slab, {name: (row_off, rows, cols)}) -- static ref slices in-kernel."""
    width = max(int(m.shape[1]) for _, m in entries)
    smap, parts, off = {}, [], 0
    for name, m in entries:
        r, c = int(m.shape[0]), int(m.shape[1])
        rp = _ru(r, 8)
        parts.append(jnp.pad(m, ((0, rp - r), (0, width - c))))
        smap[name] = (off, r, c)
        off += rp
    return jnp.concatenate(parts, axis=0), smap


# --------------------------------------------------------------------------
# the fused kernel
# --------------------------------------------------------------------------

def _fused_kernel(x_ref, w_ref, v_ref,
                  m1lt_ref, m2lt_ref, m3lt_ref,
                  m1f_ref, m2f_ref, m3f_ref,
                  sel1_ref, sel2_ref,
                  out_ref,
                  buf1, buf2, buf3, *, cfg):
    st1, st2, st3 = cfg["s1"], cfg["s2"], cfg["s3"]
    wofs, vofs = cfg["wofs"], cfg["vofs"]

    def wget(name):
        r0, nr, nc = wofs[name]
        return w_ref[r0:r0 + nr, 0:nc]

    def vget(name):
        r0, nr, _ = vofs[name]
        return v_ref[r0:r0 + nr, 0:1]

    def conv3x3(buf, cin, name, mlt_ref, st):
        # merged-K conv: stack 9 shifted slices -> one (Cout, 9*Cin)x(9*Cin, lt)
        o, lt, hp = st["o"], st["lt"], st["hp"]
        a = buf[0:cin, :]
        stacked = jnp.concatenate(
            [a[:, o + (dy - 1) * hp + (dx - 1):
                  o + (dy - 1) * hp + (dx - 1) + lt]
             for dy in range(3) for dx in range(3)], axis=0)
        w = wget(name + "_w")
        y = jnp.dot(w, stacked, preferred_element_type=jnp.float32)
        y = jnp.maximum(y + vget(name + "_b"), 0.0) * mlt_ref[...]
        buf[0:w.shape[0], o:o + lt] = y          # interior only; borders stay 0

    def conv1x1(buf, cin, name, mf_ref):
        a = buf[0:cin, :]
        w = wget(name + "_w")
        y = jnp.dot(w, a, preferred_element_type=jnp.float32)
        y = jnp.maximum(y + vget(name + "_b"), 0.0) * mf_ref[...]
        buf[0:w.shape[0], :] = y

    def groupnorm_relu(buf, c, groups, gn, gmat_name, blk_name, exp_name,
                       mf_ref, st):
        # batched moments: one block-indicator matmul per pass, two-pass var.
        a = buf[0:c, :]
        mask = mf_ref[...]
        blk = wget(blk_name)                      # (B*P, B)
        expt = wget(exp_name)                     # (B, B*P)
        gmat = wget(gmat_name)                    # (C, C)
        inv_cnt = 1.0 / float(st["h"] * st["h"] * (c // groups))
        s = jnp.dot(a, blk, preferred_element_type=jnp.float32)          # (C,B)
        mean = jnp.dot(gmat, s, preferred_element_type=jnp.float32) * inv_cnt
        mean_f = jnp.dot(mean, expt, preferred_element_type=jnp.float32)  # (C,B*P)
        xc = (a - mean_f) * mask                                          # centered
        ss = jnp.dot(xc * xc, blk, preferred_element_type=jnp.float32)    # (C,B)
        var = jnp.dot(gmat, ss, preferred_element_type=jnp.float32) * inv_cnt
        inv = jax.lax.rsqrt(var + _EPS)                                   # (C,B)
        inv_f = jnp.dot(inv, expt, preferred_element_type=jnp.float32)    # (C,B*P)
        y = xc * inv_f * vget(gn + "_g") + vget(gn + "_b")
        buf[0:c, :] = jnp.maximum(y, 0.0) * mask

    def maxpool(buf_in, buf_out, c, sel_ref, st_in):
        hp, L = st_in["hp"], st_in["L"]
        a = buf_in[0:c, :]
        m = jnp.maximum(jnp.maximum(a[:, 0:L], a[:, 1:1 + L]),
                        jnp.maximum(a[:, hp:hp + L], a[:, hp + 1:hp + 1 + L]))
        buf_out[0:c, :] = jnp.dot(m, sel_ref[...],
                                  preferred_element_type=jnp.float32)

    # buf3 rows 32..63 have border columns that are read (conv10 / GAP operate
    # full-slab) before ever being written -> zero it once.
    buf3[...] = jnp.zeros_like(buf3)

    # ---- stage 1 : 16x16 ----
    buf1[0:cfg["c_in"], :] = x_ref[...]
    conv3x3(buf1, cfg["c_in"], "conv1", m1lt_ref, st1)
    conv3x3(buf1, 8, "conv2", m1lt_ref, st1)
    conv1x1(buf1, 8, "conv3", m1f_ref)
    maxpool(buf1, buf2, 16, sel1_ref, st1)

    # ---- stage 2 : 8x8 ----
    conv3x3(buf2, 16, "conv4", m2lt_ref, st2)
    groupnorm_relu(buf2, 16, 4, "gn1", "gmat1", "blk2", "exp2", m2f_ref, st2)
    conv3x3(buf2, 16, "conv5", m2lt_ref, st2)
    conv1x1(buf2, 16, "conv6", m2f_ref)
    conv1x1(buf2, 16, "conv7", m2f_ref)
    maxpool(buf2, buf3, 32, sel2_ref, st2)

    # ---- stage 3 : 4x4 ----
    conv3x3(buf3, 32, "conv8", m3lt_ref, st3)
    groupnorm_relu(buf3, 32, 8, "gn2", "gmat2", "blk3", "exp3", m3f_ref, st3)
    conv3x3(buf3, 32, "conv9", m3lt_ref, st3)
    conv1x1(buf3, 64, "conv10", m3f_ref)

    # ---- global average pool + final 1x1 conv (logits, transposed) ----
    a = buf3[0:64, :]
    gap = jnp.dot(a, wget("blk3"), preferred_element_type=jnp.float32)
    gap = gap * (1.0 / float(st3["h"] * st3["h"]))               # (64, batch)
    out_ref[...] = (jnp.dot(wget("final_w"), gap,
                            preferred_element_type=jnp.float32)
                    + vget("final_b"))                           # (ncp, batch)


# --------------------------------------------------------------------------
# wrapper
# --------------------------------------------------------------------------

def forward(params, x_nchw):
    batch, cin, h, w = x_nchw.shape
    assert h == w and h % 4 == 0 and cin == 3
    num_classes = int(params["final_conv_w"].shape[0])
    ncp = _ru(num_classes, 8)
    cin_p = 8

    st1 = _stage_cfg(batch, h)
    st2 = _stage_cfg(batch, h // 2)
    st3 = _stage_cfg(batch, h // 4)

    # NCHW -> (Cin_p, batch*P1) zero-padded, lane-aligned flat slab.
    xp = jnp.pad(x_nchw, ((0, 0), (0, cin_p - cin), (1, 1), (1, 1)))
    xp = xp.reshape(batch, cin_p, st1["hp"] * st1["hp"])
    xp = jnp.pad(xp, ((0, 0), (0, 0), (0, st1["p"] - st1["hp"] * st1["hp"])))
    x_slab = jnp.transpose(xp, (1, 0, 2)).reshape(cin_p, st1["bp"])

    # ---- packed weight slab (all matrices) ----
    w_entries = [
        ("conv1_w", _w3x3_merged(params["conv1_w"], 8, 8)),
        ("conv2_w", _w3x3_merged(params["conv2_w"], 8, 8)),
        ("conv3_w", _w1x1_p(params["conv3_w"], 8, 16)),
        ("conv4_w", _w3x3_merged(params["conv4_w"], 16, 16)),
        ("conv5_w", _w3x3_merged(params["conv5_w"], 16, 16)),
        ("conv6_w", _w1x1_p(params["conv6_w"], 16, 16)),
        ("conv7_w", _w1x1_p(params["conv7_w"], 16, 32)),
        ("conv8_w", _w3x3_merged(params["conv8_w"], 32, 32)),
        ("conv9_w", _w3x3_merged(params["conv9_w"], 32, 64)),
        ("conv10_w", _w1x1_p(params["conv10_w"], 64, 64)),
        ("final_w", _w1x1_p(params["final_conv_w"], 64, ncp)),
        ("gmat1", jnp.asarray(_group_mat_np(16, 4))),
        ("gmat2", jnp.asarray(_group_mat_np(32, 8))),
        ("blk2", jnp.asarray(_block_ind_np(batch, st2["p"]))),
        ("exp2", jnp.asarray(_block_ind_np(batch, st2["p"]).T)),
        ("blk3", jnp.asarray(_block_ind_np(batch, st3["p"]))),
        ("exp3", jnp.asarray(_block_ind_np(batch, st3["p"]).T)),
    ]
    wslab, wofs = _build_slab(w_entries)

    # ---- packed bias / GN-parameter column slab ----
    v_entries = [
        ("conv1_b", _vec_p(params["conv1_b"], 8)),
        ("conv2_b", _vec_p(params["conv2_b"], 8)),
        ("conv3_b", _vec_p(params["conv3_b"], 16)),
        ("conv4_b", _vec_p(params["conv4_b"], 16)),
        ("conv5_b", _vec_p(params["conv5_b"], 16)),
        ("conv6_b", _vec_p(params["conv6_b"], 16)),
        ("conv7_b", _vec_p(params["conv7_b"], 32)),
        ("conv8_b", _vec_p(params["conv8_b"], 32)),
        ("conv9_b", _vec_p(params["conv9_b"], 64)),
        ("conv10_b", _vec_p(params["conv10_b"], 64)),
        ("final_b", _vec_p(params["final_conv_b"], ncp)),
        ("gn1_g", params["gn1_gamma"]), ("gn1_b", params["gn1_beta"]),
        ("gn2_g", params["gn2_gamma"]), ("gn2_b", params["gn2_beta"]),
    ]
    v_entries = [(n, v.reshape(-1, 1)) for n, v in v_entries]
    vslab, vofs = _build_slab(v_entries)

    # ---- pre-sliced interior masks + pool select matrices ----
    m1f_np, m2f_np, m3f_np = (_mask_full_np(batch, s) for s in (st1, st2, st3))
    m1lt = jnp.asarray(m1f_np[:, st1["o"]:st1["o"] + st1["lt"]])
    m2lt = jnp.asarray(m2f_np[:, st2["o"]:st2["o"] + st2["lt"]])
    m3lt = jnp.asarray(m3f_np[:, st3["o"]:st3["o"] + st3["lt"]])
    sel1 = jnp.asarray(_pool_sel_np(batch, st1, st2))
    sel2 = jnp.asarray(_pool_sel_np(batch, st2, st3))

    cfg = dict(s1=st1, s2=st2, s3=st3, wofs=wofs, vofs=vofs, c_in=cin_p)

    operands = [x_slab, wslab, vslab,
                m1lt, m2lt, m3lt,
                jnp.asarray(m1f_np), jnp.asarray(m2f_np), jnp.asarray(m3f_np),
                sel1, sel2]

    logits_t = pl.pallas_call(
        functools.partial(_fused_kernel, cfg=cfg),
        out_shape=jax.ShapeDtypeStruct((ncp, batch), jnp.float32),
        in_specs=[VMEM_SPEC] * len(operands),
        out_specs=VMEM_SPEC,
        scratch_shapes=[
            pltpu.VMEM((16, st1["bp"]), jnp.float32),   # stage-1 slab
            pltpu.VMEM((32, st2["bp"]), jnp.float32),   # stage-2 slab
            pltpu.VMEM((64, st3["bp"]), jnp.float32),   # stage-3 slab
        ],
    )(*operands)
    return logits_t.T[:, :num_classes]                  # (batch, num_classes)


# --------------------------------------------------------------------------
# parameters + pure-JAX reference (for the self-check)
# --------------------------------------------------------------------------

def init_params(key, num_classes):
    conv_defs = {
        "conv1": (6, 3, 3), "conv2": (6, 6, 3), "conv3": (12, 6, 1),
        "conv4": (16, 12, 3), "conv5": (16, 16, 3), "conv6": (16, 16, 1),
        "conv7": (32, 16, 1), "conv8": (32, 32, 3), "conv9": (64, 32, 3),
        "conv10": (64, 64, 1), "final_conv": (num_classes, 64, 1),
        # residual1 / residual2 exist in __init__ but are unused in forward().
        "residual1": (12, 12, 1), "residual2": (32, 32, 1),
    }
    params = {}
    keys = jax.random.split(key, len(conv_defs))
    for k, (name, (cout, cin, ks)) in zip(keys, conv_defs.items()):
        kw, kb = jax.random.split(k)
        bound = 1.0 / jnp.sqrt(float(cin * ks * ks))
        params[name + "_w"] = jax.random.uniform(
            kw, (cout, cin, ks, ks), jnp.float32, -bound, bound)
        params[name + "_b"] = jax.random.uniform(
            kb, (cout,), jnp.float32, -bound, bound)
    params["gn1_gamma"] = jnp.ones((16,), jnp.float32)
    params["gn1_beta"] = jnp.zeros((16,), jnp.float32)
    params["gn2_gamma"] = jnp.ones((32,), jnp.float32)
    params["gn2_beta"] = jnp.zeros((32,), jnp.float32)
    return params


def _reference_forward(params, x):
    def conv(x, w, b, pad):
        y = jax.lax.conv_general_dilated(
            x, w, window_strides=(1, 1), padding=[(pad, pad), (pad, pad)],
            dimension_numbers=("NCHW", "OIHW", "NCHW"))
        return y + b.reshape(1, -1, 1, 1)

    def gn(x, gamma, beta, groups, eps=_EPS):
        n, c, h, w = x.shape
        xg = x.reshape(n, groups, c // groups, h, w)
        mean = xg.mean(axis=(2, 3, 4), keepdims=True)
        var = ((xg - mean) ** 2).mean(axis=(2, 3, 4), keepdims=True)
        xn = ((xg - mean) / jnp.sqrt(var + eps)).reshape(n, c, h, w)
        return xn * gamma.reshape(1, -1, 1, 1) + beta.reshape(1, -1, 1, 1)

    def pool(x):
        n, c, h, w = x.shape
        return x.reshape(n, c, h // 2, 2, w // 2, 2).max(axis=(3, 5))

    r = jax.nn.relu
    out = r(conv(x, params["conv1_w"], params["conv1_b"], 1))
    out = r(conv(out, params["conv2_w"], params["conv2_b"], 1))
    out = r(conv(out, params["conv3_w"], params["conv3_b"], 0))
    out = pool(out)
    out = r(conv(out, params["conv4_w"], params["conv4_b"], 1))
    out = r(gn(out, params["gn1_gamma"], params["gn1_beta"], 4))
    out = r(conv(out, params["conv5_w"], params["conv5_b"], 1))
    out = r(conv(out, params["conv6_w"], params["conv6_b"], 0))
    out = r(conv(out, params["conv7_w"], params["conv7_b"], 0))
    out = pool(out)
    out = r(conv(out, params["conv8_w"], params["conv8_b"], 1))
    out = r(gn(out, params["gn2_gamma"], params["gn2_beta"], 8))
    out = r(conv(out, params["conv9_w"], params["conv9_b"], 1))
    out = r(conv(out, params["conv10_w"], params["conv10_b"], 0))
    out = out.mean(axis=(2, 3), keepdims=True)
    out = conv(out, params["final_conv_w"], params["final_conv_b"], 0)
    return out.reshape(out.shape[0], -1)


if __name__ == "__main__":
    key = jax.random.PRNGKey(0)
    pkey, xkey = jax.random.split(key)
    num_classes = 10
    params = init_params(pkey, num_classes)
    x = jax.random.normal(xkey, (2, 3, 16, 16), jnp.float32)   # NCHW like torch

    out = jax.block_until_ready(jax.jit(forward)(params, x))
    assert out.shape == (2, num_classes), out.shape
    assert bool(jnp.all(jnp.isfinite(out)))

    ref = jax.block_until_ready(jax.jit(_reference_forward)(params, x))
    rel_err = float(jnp.max(jnp.abs(out - ref))) / (float(jnp.max(jnp.abs(ref))) + 1e-6)
    assert rel_err < 5e-2, rel_err

    print("KERNEL_OK")
</pallas_src>

<mosaic_0001>
module attributes {stable_mosaic.version = 11 : i64} {
  func.func @_fused_kernel(%arg0: memref<8x768xf32, #tpu.memory_space<vmem>>, %arg1: memref<864x288xf32, #tpu.memory_space<vmem>>, %arg2: memref<384x1xf32, #tpu.memory_space<vmem>>, %arg3: memref<1x670xf32, #tpu.memory_space<vmem>>, %arg4: memref<1x206xf32, #tpu.memory_space<vmem>>, %arg5: memref<1x150xf32, #tpu.memory_space<vmem>>, %arg6: memref<1x768xf32, #tpu.memory_space<vmem>>, %arg7: memref<1x256xf32, #tpu.memory_space<vmem>>, %arg8: memref<1x256xf32, #tpu.memory_space<vmem>>, %arg9: memref<749x256xf32, #tpu.memory_space<vmem>>, %arg10: memref<245x256xf32, #tpu.memory_space<vmem>>, %arg11: memref<16x2xf32, #tpu.memory_space<vmem>>, %arg12: memref<16x768xf32, #tpu.memory_space<vmem>>, %arg13: memref<32x256xf32, #tpu.memory_space<vmem>>, %arg14: memref<64x256xf32, #tpu.memory_space<vmem>>) attributes {dimension_semantics = [], scalar_prefetch = 0 : i64, scratch_operands = 3 : i64, tpu.core_type = #tpu.core_type<tc>} {
    %cst = arith.constant 0.000000e+00 : f32
    %0 = vector.broadcast %cst : f32 to vector<64x256xf32>
    %c0 = arith.constant 0 : index
    %c0_0 = arith.constant 0 : index
    %1 = vector.load %arg14[%c0, %c0_0] : memref<64x256xf32, #tpu.memory_space<vmem>>, vector<64x256xf32>
    tpu.vector_store %arg14[%c0, %c0_0], %0 {strides = array<i32>} : memref<64x256xf32, #tpu.memory_space<vmem>>, vector<64x256xf32>,
    %c0_1 = arith.constant 0 : index
    %c0_2 = arith.constant 0 : index
    %2 = vector.load %arg0[%c0_1, %c0_2] : memref<8x768xf32, #tpu.memory_space<vmem>>, vector<8x768xf32>
    %c0_3 = arith.constant 0 : index
    %c0_4 = arith.constant 0 : index
    %3 = vector.load %arg12[%c0_3, %c0_4] : memref<16x768xf32, #tpu.memory_space<vmem>>, vector<8x768xf32>
    tpu.vector_store %arg12[%c0_3, %c0_4], %2 {strides = array<i32>} : memref<16x768xf32, #tpu.memory_space<vmem>>, vector<8x768xf32>,
    %c0_5 = arith.constant 0 : index
    %c0_6 = arith.constant 0 : index
    %4 = vector.load %arg12[%c0_5, %c0_6] : memref<16x768xf32, #tpu.memory_space<vmem>>, vector<8x768xf32>
    %5 = vector.extract_strided_slice %4 {offsets = [0, 0], sizes = [8, 670], strides = [1, 1]} : vector<8x768xf32> to vector<8x670xf32>
    %6 = vector.extract_strided_slice %4 {offsets = [0, 1], sizes = [8, 670], strides = [1, 1]} : vector<8x768xf32> to vector<8x670xf32>
    %7 = vector.extract_strided_slice %4 {offsets = [0, 2], sizes = [8, 670], strides = [1, 1]} : vector<8x768xf32> to vector<8x670xf32>
    %8 = vector.extract_strided_slice %4 {offsets = [0, 18], sizes = [8, 670], strides = [1, 1]} : vector<8x768xf32> to vector<8x670xf32>
    %9 = vector.extract_strided_slice %4 {offsets = [0, 19], sizes = [8, 670], strides = [1, 1]} : vector<8x768xf32> to vector<8x670xf32>
    %10 = vector.extract_strided_slice %4 {offsets = [0, 20], sizes = [8, 670], strides = [1, 1]} : vector<8x768xf32> to vector<8x670xf32>
    %11 = vector.extract_strided_slice %4 {offsets = [0, 36], sizes = [8, 670], strides = [1, 1]} : vector<8x768xf32> to vector<8x670xf32>
    %12 = vector.extract_strided_slice %4 {offsets = [0, 37], sizes = [8, 670], strides = [1, 1]} : vector<8x768xf32> to vector<8x670xf32>
    %13 = vector.extract_strided_slice %4 {offsets = [0, 38], sizes = [8, 670], strides = [1, 1]} : vector<8x768xf32> to vector<8x670xf32>
    %14 = tpu.concatenate %5, %6, %7, %8, %9, %10, %11, %12, %13 in 0 : vector<8x670xf32>, vector<8x670xf32>, vector<8x670xf32>, vector<8x670xf32>, vector<8x670xf32>, vector<8x670xf32>, vector<8x670xf32>, vector<8x670xf32>, vector<8x670xf32> -> vector<72x670xf32>
    %c0_7 = arith.constant 0 : index
    %c0_8 = arith.constant 0 : index
    %15 = vector.load %arg1[%c0_7, %c0_8] : memref<864x288xf32, #tpu.memory_space<vmem>>, vector<8x72xf32>
    %cst_9 = arith.constant dense<0.000000e+00> : vector<8x670xf32>
    %16 = tpu.matmul %15, %14, %cst_9 {dimension_numbers = #tpu.dot_dimension_numbers<[1], [0], [0], [1], [0, 0, 1, 1], [], []>} : vector<8x72xf32>, vector<72x670xf32>, vector<8x670xf32> -> vector<8x670xf32>
    %c0_10 = arith.constant 0 : index
    %c0_11 = arith.constant 0 : index
    %17 = vector.load %arg2[%c0_10, %c0_11] : memref<384x1xf32, #tpu.memory_space<vmem>>, vector<8x1xf32>
    %18 = vector.broadcast %17 : vector<8x1xf32> to vector<8x670xf32>
    %19 = arith.addf %16, %18 : vector<8x670xf32>
    %cst_12 = arith.constant 0.000000e+00 : f32
    %20 = vector.broadcast %cst_12 : f32 to vector<8x670xf32>
    %21 = arith.maximumf %19, %20 : vector<8x670xf32>
    %c0_13 = arith.constant 0 : index
    %c0_14 = arith.constant 0 : index
    %22 = vector.load %arg3[%c0_13, %c0_14] : memref<1x670xf32, #tpu.memory_space<vmem>>, vector<1x670xf32>
    %23 = vector.broadcast %22 : vector<1x670xf32> to vector<8x670xf32>
    %24 = arith.mulf %21, %23 : vector<8x670xf32>
    %c0_15 = arith.constant 0 : index
    %c19 = arith.constant 19 : index
    %25 = vector.load %arg12[%c0_15, %c19] : memref<16x768xf32, #tpu.memory_space<vmem>>, vector<8x670xf32>
    tpu.vector_store %arg12[%c0_15, %c19], %24 {strides = array<i32>} : memref<16x768xf32, #tpu.memory_space<vmem>>, vector<8x670xf32>,
    %c0_16 = arith.constant 0 : index
    %c0_17 = arith.constant 0 : index
    %26 = vector.load %arg12[%c0_16, %c0_17] : memref<16x768xf32, #tpu.memory_space<vmem>>, vector<8x768xf32>
    %27 = vector.extract_strided_slice %26 {offsets = [0, 0], sizes = [8, 670], strides = [1, 1]} : vector<8x768xf32> to vector<8x670xf32>
    %28 = vector.extract_strided_slice %26 {offsets = [0, 1], sizes = [8, 670], strides = [1, 1]} : vector<8x768xf32> to vector<8x670xf32>
    %29 = vector.extract_strided_slice %26 {offsets = [0, 2], sizes = [8, 670], strides = [1, 1]} : vector<8x768xf32> to vector<8x670xf32>
    %30 = vector.extract_strided_slice %26 {offsets = [0, 18], sizes = [8, 670], strides = [1, 1]} : vector<8x768xf32> to vector<8x670xf32>
    %31 = vector.extract_strided_slice %26 {offsets = [0, 19], sizes = [8, 670], strides = [1, 1]} : vector<8x768xf32> to vector<8x670xf32>
    %32 = vector.extract_strided_slice %26 {offsets = [0, 20], sizes = [8, 670], strides = [1, 1]} : vector<8x768xf32> to vector<8x670xf32>
    %33 = vector.extract_strided_slice %26 {offsets = [0, 36], sizes = [8, 670], strides = [1, 1]} : vector<8x768xf32> to vector<8x670xf32>
    %34 = vector.extract_strided_slice %26 {offsets = [0, 37], sizes = [8, 670], strides = [1, 1]} : vector<8x768xf32> to vector<8x670xf32>
    %35 = vector.extract_strided_slice %26 {offsets = [0, 38], sizes = [8, 670], strides = [1, 1]} : vector<8x768xf32> to vector<8x670xf32>
    %36 = tpu.concatenate %27, %28, %29, %30, %31, %32, %33, %34, %35 in 0 : vector<8x670xf32>, vector<8x670xf32>, vector<8x670xf32>, vector<8x670xf32>, vector<8x670xf32>, vector<8x670xf32>, vector<8x670xf32>, vector<8x670xf32>, vector<8x670xf32> -> vector<72x670xf32>
    %c8 = arith.constant 8 : index
    %c0_18 = arith.constant 0 : index
    %37 = vector.load %arg1[%c8, %c0_18] : memref<864x288xf32, #tpu.memory_space<vmem>>, vector<8x72xf32>
    %cst_19 = arith.constant dense<0.000000e+00> : vector<8x670xf32>
    %38 = tpu.matmul %37, %36, %cst_19 {dimension_numbers = #tpu.dot_dimension_numbers<[1], [0], [0], [1], [0, 0, 1, 1], [], []>} : vector<8x72xf32>, vector<72x670xf32>, vector<8x670xf32> -> vector<8x670xf32>
    %c8_20 = arith.constant 8 : index
    %c0_21 = arith.constant 0 : index
    %39 = vector.load %arg2[%c8_20, %c0_21] : memref<384x1xf32, #tpu.memory_space<vmem>>, vector<8x1xf32>
    %40 = vector.broadcast %39 : vector<8x1xf32> to vector<8x670xf32>
    %41 = arith.addf %38, %40 : vector<8x670xf32>
    %cst_22 = arith.constant 0.000000e+00 : f32
    %42 = vector.broadcast %cst_22 : f32 to vector<8x670xf32>
    %43 = arith.maximumf %41, %42 : vector<8x670xf32>
    %c0_23 = arith.constant 0 : index
    %c0_24 = arith.constant 0 : index
    %44 = vector.load %arg3[%c0_23, %c0_24] : memref<1x670xf32, #tpu.memory_space<vmem>>, vector<1x670xf32>
    %45 = vector.broadcast %44 : vector<1x670xf32> to vector<8x670xf32>
    %46 = arith.mulf %43, %45 : vector<8x670xf32>
    %c0_25 = arith.constant 0 : index
    %c19_26 = arith.constant 19 : index
    %47 = vector.load %arg12[%c0_25, %c19_26] : memref<16x768xf32, #tpu.memory_space<vmem>>, vector<8x670xf32>
    tpu.vector_store %arg12[%c0_25, %c19_26], %46 {strides = array<i32>} : memref<16x768xf32, #tpu.memory_space<vmem>>, vector<8x670xf32>,
    %c0_27 = arith.constant 0 : index
    %c0_28 = arith.constant 0 : index
    %48 = vector.load %arg12[%c0_27, %c0_28] : memref<16x768xf32, #tpu.memory_space<vmem>>, vector<8x768xf32>
    %c16 = arith.constant 16 : index
    %c0_29 = arith.constant 0 : index
    %49 = vector.load %arg1[%c16, %c0_29] : memref<864x288xf32, #tpu.memory_space<vmem>>, vector<16x8xf32>
    %cst_30 = arith.constant dense<0.000000e+00> : vector<16x768xf32>
    %50 = tpu.matmul %49, %48, %cst_30 {dimension_numbers = #tpu.dot_dimension_numbers<[1], [0], [0], [1], [0, 0, 1, 1], [], []>} : vector<16x8xf32>, vector<8x768xf32>, vector<16x768xf32> -> vector<16x768xf32>
    %c16_31 = arith.constant 16 : index
    %c0_32 = arith.constant 0 : index
    %51 = vector.load %arg2[%c16_31, %c0_32] : memref<384x1xf32, #tpu.memory_space<vmem>>, vector<16x1xf32>
    %52 = vector.broadcast %51 : vector<16x1xf32> to vector<16x768xf32>
    %53 = arith.addf %50, %52 : vector<16x768xf32>
    %cst_33 = arith.constant 0.000000e+00 : f32
    %54 = vector.broadcast %cst_33 : f32 to vector<16x768xf32>
    %55 = arith.maximumf %53, %54 : vector<16x768xf32>
    %c0_34 = arith.constant 0 : index
    %c0_35 = arith.constant 0 : index
    %56 = vector.load %arg6[%c0_34, %c0_35] : memref<1x768xf32, #tpu.memory_space<vmem>>, vector<1x768xf32>
    %57 = vector.broadcast %56 : vector<1x768xf32> to vector<16x768xf32>
    %58 = arith.mulf %55, %57 : vector<16x768xf32>
    %c0_36 = arith.constant 0 : index
    %c0_37 = arith.constant 0 : index
    %59 = vector.load %arg12[%c0_36, %c0_37] : memref<16x768xf32, #tpu.memory_space<vmem>>, vector<16x768xf32>
    tpu.vector_store %arg12[%c0_36, %c0_37], %58 {strides = array<i32>} : memref<16x768xf32, #tpu.memory_space<vmem>>, vector<16x768xf32>,
    %c0_38 = arith.constant 0 : index
    %c0_39 = arith.constant 0 : index
    %60 = vector.load %arg12[%c0_38, %c0_39] : memref<16x768xf32, #tpu.memory_space<vmem>>, vector<16x768xf32>
    %61 = vector.extract_strided_slice %60 {offsets = [0, 0], sizes = [16, 749], strides = [1, 1]} : vector<16x768xf32> to vector<16x749xf32>
    %62 = vector.extract_strided_slice %60 {offsets = [0, 1], sizes = [16, 749], strides = [1, 1]} : vector<16x768xf32> to vector<16x749xf32>
    %63 = arith.maximumf %61, %62 : vector<16x749xf32>
    %64 = vector.extract_strided_slice %60 {offsets = [0, 18], sizes = [16, 749], strides = [1, 1]} : vector<16x768xf32> to vector<16x749xf32>
    %65 = vector.extract_strided_slice %60 {offsets = [0, 19], sizes = [16, 749], strides = [1, 1]} : vector<16x768xf32> to vector<16x749xf32>
    %66 = arith.maximumf %64, %65 : vector<16x749xf32>
    %67 = arith.maximumf %63, %66 : vector<16x749xf32>
    %c0_40 = arith.constant 0 : index
    %c0_41 = arith.constant 0 : index
    %68 = vector.load %arg9[%c0_40, %c0_41] : memref<749x256xf32, #tpu.memory_space<vmem>>, vector<749x256xf32>
    %cst_42 = arith.constant dense<0.000000e+00> : vector<16x256xf32>
    %69 = tpu.matmul %67, %68, %cst_42 {dimension_numbers = #tpu.dot_dimension_numbers<[1], [0], [0], [1], [0, 0, 1, 1], [], []>} : vector<16x749xf32>, vector<749x256xf32>, vector<16x256xf32> -> vector<16x256xf32>
    %c0_43 = arith.constant 0 : index
    %c0_44 = arith.constant 0 : index
    %70 = vector.load %arg13[%c0_43, %c0_44] : memref<32x256xf32, #tpu.memory_space<vmem>>, vector<16x256xf32>
    tpu.vector_store %arg13[%c0_43, %c0_44], %69 {strides = array<i32>} : memref<32x256xf32, #tpu.memory_space<vmem>>, vector<16x256xf32>,
    %c0_45 = arith.constant 0 : index
    %c0_46 = arith.constant 0 : index
    %71 = vector.load %arg13[%c0_45, %c0_46] : memref<32x256xf32, #tpu.memory_space<vmem>>, vector<16x256xf32>
    %72 = vector.extract_strided_slice %71 {offsets = [0, 0], sizes = [16, 206], strides = [1, 1]} : vector<16x256xf32> to vector<16x206xf32>
    %73 = vector.extract_strided_slice %71 {offsets = [0, 1], sizes = [16, 206], strides = [1, 1]} : vector<16x256xf32> to vector<16x206xf32>
    %74 = vector.extract_strided_slice %71 {offsets = [0, 2], sizes = [16, 206], strides = [1, 1]} : vector<16x256xf32> to vector<16x206xf32>
    %75 = vector.extract_strided_slice %71 {offsets = [0, 10], sizes = [16, 206], strides = [1, 1]} : vector<16x256xf32> to vector<16x206xf32>
    %76 = vector.extract_strided_slice %71 {offsets = [0, 11], sizes = [16, 206], strides = [1, 1]} : vector<16x256xf32> to vector<16x206xf32>
    %77 = vector.extract_strided_slice %71 {offsets = [0, 12], sizes = [16, 206], strides = [1, 1]} : vector<16x256xf32> to vector<16x206xf32>
    %78 = vector.extract_strided_slice %71 {offsets = [0, 20], sizes = [16, 206], strides = [1, 1]} : vector<16x256xf32> to vector<16x206xf32>
    %79 = vector.extract_strided_slice %71 {offsets = [0, 21], sizes = [16, 206], strides = [1, 1]} : vector<16x256xf32> to vector<16x206xf32>
    %80 = vector.extract_strided_slice %71 {offsets = [0, 22], sizes = [16, 206], strides = [1, 1]} : vector<16x256xf32> to vector<16x206xf32>
    %81 = tpu.concatenate %72, %73, %74, %75, %76, %77, %78, %79, %80 in 0 : vector<16x206xf32>, vector<16x206xf32>, vector<16x206xf32>, vector<16x206xf32>, vector<16x206xf32>, vector<16x206xf32>, vector<16x206xf32>, vector<16x206xf32>, vector<16x206xf32> -> vector<144x206xf32>
    %c32 = arith.constant 32 : index
    %c0_47 = arith.constant 0 : index
    %82 = vector.load %arg1[%c32, %c0_47] : memref<864x288xf32, #tpu.memory_space<vmem>>, vector<16x144xf32>
    %cst_48 = arith.constant dense<0.000000e+00> : vector<16x206xf32>
    %83 = tpu.matmul %82, %81, %cst_48 {dimension_numbers = #tpu.dot_dimension_numbers<[1], [0], [0], [1], [0, 0, 1, 1], [], []>} : vector<16x144xf32>, vector<144x206xf32>, vector<16x206xf32> -> vector<16x206xf32>
    %c32_49 = arith.constant 32 : index
    %c0_50 = arith.constant 0 : index
    %84 = vector.load %arg2[%c32_49, %c0_50] : memref<384x1xf32, #tpu.memory_space<vmem>>, vector<16x1xf32>
    %85 = vector.broadcast %84 : vector<16x1xf32> to vector<16x206xf32>
    %86 = arith.addf %83, %85 : vector<16x206xf32>
    %cst_51 = arith.constant 0.000000e+00 : f32
    %87 = vector.broadcast %cst_51 : f32 to vector<16x206xf32>
    %88 = arith.maximumf %86, %87 : vector<16x206xf32>
    %c0_52 = arith.constant 0 : index
    %c0_53 = arith.constant 0 : index
    %89 = vector.load %arg4[%c0_52, %c0_53] : memref<1x206xf32, #tpu.memory_space<vmem>>, vector<1x206xf32>
    %90 = vector.broadcast %89 : vector<1x206xf32> to vector<16x206xf32>
    %91 = arith.mulf %88, %90 : vector<16x206xf32>
    %c0_54 = arith.constant 0 : index
    %c11 = arith.constant 11 : index
    %92 = vector.load %arg13[%c0_54, %c11] : memref<32x256xf32, #tpu.memory_space<vmem>>, vector<16x206xf32>
    tpu.vector_store %arg13[%c0_54, %c11], %91 {strides = array<i32>} : memref<32x256xf32, #tpu.memory_space<vmem>>, vector<16x206xf32>,
    %c0_55 = arith.constant 0 : index
    %c0_56 = arith.constant 0 : index
    %93 = vector.load %arg13[%c0_55, %c0_56] : memref<32x256xf32, #tpu.memory_space<vmem>>, vector<16x256xf32>
    %c0_57 = arith.constant 0 : index
    %c0_58 = arith.constant 0 : index
    %94 = vector.load %arg7[%c0_57, %c0_58] : memref<1x256xf32, #tpu.memory_space<vmem>>, vector<1x256xf32>
    %c336 = arith.constant 336 : index
    %c0_59 = arith.constant 0 : index
    %95 = vector.load %arg1[%c336, %c0_59] : memref<864x288xf32, #tpu.memory_space<vmem>>, vector<256x2xf32>
    %c592 = arith.constant 592 : index
    %c0_60 = arith.constant 0 : index
    %96 = vector.load %arg1[%c592, %c0_60] : memref<864x288xf32, #tpu.memory_space<vmem>>, vector<2x256xf32>
    %c288 = arith.constant 288 : index
    %c0_61 = arith.constant 0 : index
    %97 = vector.load %arg1[%c288, %c0_61] : memref<864x288xf32, #tpu.memory_space<vmem>>, vector<16x16xf32>
    %cst_62 = arith.constant dense<0.000000e+00> : vector<16x2xf32>
    %98 = tpu.matmul %93, %95, %cst_62 {dimension_numbers = #tpu.dot_dimension_numbers<[1], [0], [0], [1], [0, 0, 1, 1], [], []>} : vector<16x256xf32>, vector<256x2xf32>, vector<16x2xf32> -> vector<16x2xf32>
    %cst_63 = arith.constant dense<0.000000e+00> : vector<16x2xf32>
    %99 = tpu.matmul %97, %98, %cst_63 {dimension_numbers = #tpu.dot_dimension_numbers<[1], [0], [0], [1], [0, 0, 1, 1], [], []>} : vector<16x16xf32>, vector<16x2xf32>, vector<16x2xf32> -> vector<16x2xf32>
    %cst_64 = arith.constant 3.906250e-03 : f32
    %100 = vector.broadcast %cst_64 : f32 to vector<16x2xf32>
    %101 = arith.mulf %99, %100 : vector<16x2xf32>
    %cst_65 = arith.constant dense<0.000000e+00> : vector<16x256xf32>
    %102 = tpu.matmul %101, %96, %cst_65 {dimension_numbers = #tpu.dot_dimension_numbers<[1], [0], [0], [1], [0, 0, 1, 1], [], []>} : vector<16x2xf32>, vector<2x256xf32>, vector<16x256xf32> -> vector<16x256xf32>
    %103 = arith.subf %93, %102 : vector<16x256xf32>
    %104 = vector.broadcast %94 : vector<1x256xf32> to vector<16x256xf32>
    %105 = arith.mulf %103, %104 : vector<16x256xf32>
    %106 = arith.mulf %105, %105 : vector<16x256xf32>
    %cst_66 = arith.constant dense<0.000000e+00> : vector<16x2xf32>
    %107 = tpu.matmul %106, %95, %cst_66 {dimension_numbers = #tpu.dot_dimension_numbers<[1], [0], [0], [1], [0, 0, 1, 1], [], []>} : vector<16x256xf32>, vector<256x2xf32>, vector<16x2xf32> -> vector<16x2xf32>
    %cst_67 = arith.constant dense<0.000000e+00> : vector<16x2xf32>
    %108 = tpu.matmul %97, %107, %cst_67 {dimension_numbers = #tpu.dot_dimension_numbers<[1], [0], [0], [1], [0, 0, 1, 1], [], []>} : vector<16x16xf32>, vector<16x2xf32>, vector<16x2xf32> -> vector<16x2xf32>
    %cst_68 = arith.constant 3.906250e-03 : f32
    %109 = vector.broadcast %cst_68 : f32 to vector<16x2xf32>
    %110 = arith.mulf %108, %109 : vector<16x2xf32>
    %cst_69 = arith.constant 9.99999974E-6 : f32
    %111 = vector.broadcast %cst_69 : f32 to vector<16x2xf32>
    %112 = arith.addf %110, %111 : vector<16x2xf32>
    %113 = math.rsqrt %112 : vector<16x2xf32>
    %cst_70 = arith.constant dense<0.000000e+00> : vector<16x256xf32>
    %114 = tpu.matmul %113, %96, %cst_70 {dimension_numbers = #tpu.dot_dimension_numbers<[1], [0], [0], [1], [0, 0, 1, 1], [], []>} : vector<16x2xf32>, vector<2x256xf32>, vector<16x256xf32> -> vector<16x256xf32>
    %115 = arith.mulf %105, %114 : vector<16x256xf32>
    %c288_71 = arith.constant 288 : index
    %c0_72 = arith.constant 0 : index
    %116 = vector.load %arg2[%c288_71, %c0_72] : memref<384x1xf32, #tpu.memory_space<vmem>>, vector<16x1xf32>
    %117 = vector.broadcast %116 : vector<16x1xf32> to vector<16x256xf32>
    %118 = arith.mulf %115, %117 : vector<16x256xf32>
    %c304 = arith.constant 304 : index
    %c0_73 = arith.constant 0 : index
    %119 = vector.load %arg2[%c304, %c0_73] : memref<384x1xf32, #tpu.memory_space<vmem>>, vector<16x1xf32>
    %120 = vector.broadcast %119 : vector<16x1xf32> to vector<16x256xf32>
    %121 = arith.addf %118, %120 : vector<16x256xf32>
    %cst_74 = arith.constant 0.000000e+00 : f32
    %122 = vector.broadcast %cst_74 : f32 to vector<16x256xf32>
    %123 = arith.maximumf %121, %122 : vector<16x256xf32>
    %124 = vector.broadcast %94 : vector<1x256xf32> to vector<16x256xf32>
    %125 = arith.mulf %123, %124 : vector<16x256xf32>
    %c0_75 = arith.constant 0 : index
    %c0_76 = arith.constant 0 : index
    %126 = vector.load %arg13[%c0_75, %c0_76] : memref<32x256xf32, #tpu.memory_space<vmem>>, vector<16x256xf32>
    tpu.vector_store %arg13[%c0_75, %c0_76], %125 {strides = array<i32>} : memref<32x256xf32, #tpu.memory_space<vmem>>, vector<16x256xf32>,
    %c0_77 = arith.constant 0 : index
    %c0_78 = arith.constant 0 : index
    %127 = vector.load %arg13[%c0_77, %c0_78] : memref<32x256xf32, #tpu.memory_space<vmem>>, vector<16x256xf32>
    %128 = vector.extract_strided_slice %127 {offsets = [0, 0], sizes = [16, 206], strides = [1, 1]} : vector<16x256xf32> to vector<16x206xf32>
    %129 = vector.extract_strided_slice %127 {offsets = [0, 1], sizes = [16, 206], strides = [1, 1]} : vector<16x256xf32> to vector<16x206xf32>
    %130 = vector.extract_strided_slice %127 {offsets = [0, 2], sizes = [16, 206], strides = [1, 1]} : vector<16x256xf32> to vector<16x206xf32>
    %131 = vector.extract_strided_slice %127 {offsets = [0, 10], sizes = [16, 206], strides = [1, 1]} : vector<16x256xf32> to vector<16x206xf32>
    %132 = vector.extract_strided_slice %127 {offsets = [0, 11], sizes = [16, 206], strides = [1, 1]} : vector<16x256xf32> to vector<16x206xf32>
    %133 = vector.extract_strided_slice %127 {offsets = [0, 12], sizes = [16, 206], strides = [1, 1]} : vector<16x256xf32> to vector<16x206xf32>
    %134 = vector.extract_strided_slice %127 {offsets = [0, 20], sizes = [16, 206], strides = [1, 1]} : vector<16x256xf32> to vector<16x206xf32>
    %135 = vector.extract_strided_slice %127 {offsets = [0, 21], sizes = [16, 206], strides = [1, 1]} : vector<16x256xf32> to vector<16x206xf32>
    %136 = vector.extract_strided_slice %127 {offsets = [0, 22], sizes = [16, 206], strides = [1, 1]} : vector<16x256xf32> to vector<16x206xf32>
    %137 = tpu.concatenate %128, %129, %130, %131, %132, %133, %134, %135, %136 in 0 : vector<16x206xf32>, vector<16x206xf32>, vector<16x206xf32>, vector<16x206xf32>, vector<16x206xf32>, vector<16x206xf32>, vector<16x206xf32>, vector<16x206xf32>, vector<16x206xf32> -> vector<144x206xf32>
    %c48 = arith.constant 48 : index
    %c0_79 = arith.constant 0 : index
    %138 = vector.load %arg1[%c48, %c0_79] : memref<864x288xf32, #tpu.memory_space<vmem>>, vector<16x144xf32>
    %cst_80 = arith.constant dense<0.000000e+00> : vector<16x206xf32>
    %139 = tpu.matmul %138, %137, %cst_80 {dimension_numbers = #tpu.dot_dimension_numbers<[1], [0], [0], [1], [0, 0, 1, 1], [], []>} : vector<16x144xf32>, vector<144x206xf32>, vector<16x206xf32> -> vector<16x206xf32>
    %c48_81 = arith.constant 48 : index
    %c0_82 = arith.constant 0 : index
    %140 = vector.load %arg2[%c48_81, %c0_82] : memref<384x1xf32, #tpu.memory_space<vmem>>, vector<16x1xf32>
    %141 = vector.broadcast %140 : vector<16x1xf32> to vector<16x206xf32>
    %142 = arith.addf %139, %141 : vector<16x206xf32>
    %cst_83 = arith.constant 0.000000e+00 : f32
    %143 = vector.broadcast %cst_83 : f32 to vector<16x206xf32>
    %144 = arith.maximumf %142, %143 : vector<16x206xf32>
    %c0_84 = arith.constant 0 : index
    %c0_85 = arith.constant 0 : index
    %145 = vector.load %arg4[%c0_84, %c0_85] : memref<1x206xf32, #tpu.memory_space<vmem>>, vector<1x206xf32>
    %146 = vector.broadcast %145 : vector<1x206xf32> to vector<16x206xf32>
    %147 = arith.mulf %144, %146 : vector<16x206xf32>
    %c0_86 = arith.constant 0 : index
    %c11_87 = arith.constant 11 : index
    %148 = vector.load %arg13[%c0_86, %c11_87] : memref<32x256xf32, #tpu.memory_space<vmem>>, vector<16x206xf32>
    tpu.vector_store %arg13[%c0_86, %c11_87], %147 {strides = array<i32>} : memref<32x256xf32, #tpu.memory_space<vmem>>, vector<16x206xf32>,
    %c0_88 = arith.constant 0 : index
    %c0_89 = arith.constant 0 : index
    %149 = vector.load %arg13[%c0_88, %c0_89] : memref<32x256xf32, #tpu.memory_space<vmem>>, vector<16x256xf32>
    %c64 = arith.constant 64 : index
    %c0_90 = arith.constant 0 : index
    %150 = vector.load %arg1[%c64, %c0_90] : memref<864x288xf32, #tpu.memory_space<vmem>>, vector<16x16xf32>
    %cst_91 = arith.constant dense<0.000000e+00> : vector<16x256xf32>
    %151 = tpu.matmul %150, %149, %cst_91 {dimension_numbers = #tpu.dot_dimension_numbers<[1], [0], [0], [1], [0, 0, 1, 1], [], []>} : vector<16x16xf32>, vector<16x256xf32>, vector<16x256xf32> -> vector<16x256xf32>
    %c64_92 = arith.constant 64 : index
    %c0_93 = arith.constant 0 : index
    %152 = vector.load %arg2[%c64_92, %c0_93] : memref<384x1xf32, #tpu.memory_space<vmem>>, vector<16x1xf32>
    %153 = vector.broadcast %152 : vector<16x1xf32> to vector<16x256xf32>
    %154 = arith.addf %151, %153 : vector<16x256xf32>
    %cst_94 = arith.constant 0.000000e+00 : f32
    %155 = vector.broadcast %cst_94 : f32 to vector<16x256xf32>
    %156 = arith.maximumf %154, %155 : vector<16x256xf32>
    %c0_95 = arith.constant 0 : index
    %c0_96 = arith.constant 0 : index
    %157 = vector.load %arg7[%c0_95, %c0_96] : memref<1x256xf32, #tpu.memory_space<vmem>>, vector<1x256xf32>
    %158 = vector.broadcast %157 : vector<1x256xf32> to vector<16x256xf32>
    %159 = arith.mulf %156, %158 : vector<16x256xf32>
    %c0_97 = arith.constant 0 : index
    %c0_98 = arith.constant 0 : index
    %160 = vector.load %arg13[%c0_97, %c0_98] : memref<32x256xf32, #tpu.memory_space<vmem>>, vector<16x256xf32>
    tpu.vector_store %arg13[%c0_97, %c0_98], %159 {strides = array<i32>} : memref<32x256xf32, #tpu.memory_space<vmem>>, vector<16x256xf32>,
    %c0_99 = arith.constant 0 : index
    %c0_100 = arith.constant 0 : index
    %161 = vector.load %arg13[%c0_99, %c0_100] : memref<32x256xf32, #tpu.memory_space<vmem>>, vector<16x256xf32>
    %c80 = arith.constant 80 : index
    %c0_101 = arith.constant 0 : index
    %162 = vector.load %arg1[%c80, %c0_101] : memref<864x288xf32, #tpu.memory_space<vmem>>, vector<32x16xf32>
    %cst_102 = arith.constant dense<0.000000e+00> : vector<32x256xf32>
    %163 = tpu.matmul %162, %161, %cst_102 {dimension_numbers = #tpu.dot_dimension_numbers<[1], [0], [0], [1], [0, 0, 1, 1], [], []>} : vector<32x16xf32>, vector<16x256xf32>, vector<32x256xf32> -> vector<32x256xf32>
    %c80_103 = arith.constant 80 : index
    %c0_104 = arith.constant 0 : index
    %164 = vector.load %arg2[%c80_103, %c0_104] : memref<384x1xf32, #tpu.memory_space<vmem>>, vector<32x1xf32>
    %165 = vector.broadcast %164 : vector<32x1xf32> to vector<32x256xf32>
    %166 = arith.addf %163, %165 : vector<32x256xf32>
    %cst_105 = arith.constant 0.000000e+00 : f32
    %167 = vector.broadcast %cst_105 : f32 to vector<32x256xf32>
    %168 = arith.maximumf %166, %167 : vector<32x256xf32>
    %c0_106 = arith.constant 0 : index
    %c0_107 = arith.constant 0 : index
    %169 = vector.load %arg7[%c0_106, %c0_107] : memref<1x256xf32, #tpu.memory_space<vmem>>, vector<1x256xf32>
    %170 = vector.broadcast %169 : vector<1x256xf32> to vector<32x256xf32>
    %171 = arith.mulf %168, %170 : vector<32x256xf32>
    %c0_108 = arith.constant 0 : index
    %c0_109 = arith.constant 0 : index
    %172 = vector.load %arg13[%c0_108, %c0_109] : memref<32x256xf32, #tpu.memory_space<vmem>>, vector<32x256xf32>
    tpu.vector_store %arg13[%c0_108, %c0_109], %171 {strides = array<i32>} : memref<32x256xf32, #tpu.memory_space<vmem>>, vector<32x256xf32>,
    %c0_110 = arith.constant 0 : index
    %c0_111 = arith.constant 0 : index
    %173 = vector.load %arg13[%c0_110, %c0_111] : memref<32x256xf32, #tpu.memory_space<vmem>>, vector<32x256xf32>
    %174 = vector.extract_strided_slice %173 {offsets = [0, 0], sizes = [32, 245], strides = [1, 1]} : vector<32x256xf32> to vector<32x245xf32>
    %175 = vector.extract_strided_slice %173 {offsets = [0, 1], sizes = [32, 245], strides = [1, 1]} : vector<32x256xf32> to vector<32x245xf32>
    %176 = arith.maximumf %174, %175 : vector<32x245xf32>
    %177 = vector.extract_strided_slice %173 {offsets = [0, 10], sizes = [32, 245], strides = [1, 1]} : vector<32x256xf32> to vector<32x245xf32>
    %178 = vector.extract_strided_slice %173 {offsets = [0, 11], sizes = [32, 245], strides = [1, 1]} : vector<32x256xf32> to vector<32x245xf32>
    %179 = arith.maximumf %177, %178 : vector<32x245xf32>
    %180 = arith.maximumf %176, %179 : vector<32x245xf32>
    %c0_112 = arith.constant 0 : index
    %c0_113 = arith.constant 0 : index
    %181 = vector.load %arg10[%c0_112, %c0_113] : memref<245x256xf32, #tpu.memory_space<vmem>>, vector<245x256xf32>
    %cst_114 = arith.constant dense<0.000000e+00> : vector<32x256xf32>
    %182 = tpu.matmul %180, %181, %cst_114 {dimension_numbers = #tpu.dot_dimension_numbers<[1], [0], [0], [1], [0, 0, 1, 1], [], []>} : vector<32x245xf32>, vector<245x256xf32>, vector<32x256xf32> -> vector<32x256xf32>
    %c0_115 = arith.constant 0 : index
    %c0_116 = arith.constant 0 : index
    %183 = vector.load %arg14[%c0_115, %c0_116] : memref<64x256xf32, #tpu.memory_space<vmem>>, vector<32x256xf32>
    tpu.vector_store %arg14[%c0_115, %c0_116], %182 {strides = array<i32>} : memref<64x256xf32, #tpu.memory_space<vmem>>, vector<32x256xf32>,
    %c0_117 = arith.constant 0 : index
    %c0_118 = arith.constant 0 : index
    %184 = vector.load %arg14[%c0_117, %c0_118] : memref<64x256xf32, #tpu.memory_space<vmem>>, vector<32x256xf32>
    %185 = vector.extract_strided_slice %184 {offsets = [0, 0], sizes = [32, 150], strides = [1, 1]} : vector<32x256xf32> to vector<32x150xf32>
    %186 = vector.extract_strided_slice %184 {offsets = [0, 1], sizes = [32, 150], strides = [1, 1]} : vector<32x256xf32> to vector<32x150xf32>
    %187 = vector.extract_strided_slice %184 {offsets = [0, 2], sizes = [32, 150], strides = [1, 1]} : vector<32x256xf32> to vector<32x150xf32>
    %188 = vector.extract_strided_slice %184 {offsets = [0, 6], sizes = [32, 150], strides = [1, 1]} : vector<32x256xf32> to vector<32x150xf32>
    %189 = vector.extract_strided_slice %184 {offsets = [0, 7], sizes = [32, 150], strides = [1, 1]} : vector<32x256xf32> to vector<32x150xf32>
    %190 = vector.extract_strided_slice %184 {offsets = [0, 8], sizes = [32, 150], strides = [1, 1]} : vector<32x256xf32> to vector<32x150xf32>
    %191 = vector.extract_strided_slice %184 {offsets = [0, 12], sizes = [32, 150], strides = [1, 1]} : vector<32x256xf32> to vector<32x150xf32>
    %192 = vector.extract_strided_slice %184 {offsets = [0, 13], sizes = [32, 150], strides = [1, 1]} : vector<32x256xf32> to vector<32x150xf32>
    %193 = vector.extract_strided_slice %184 {offsets = [0, 14], sizes = [32, 150], strides = [1, 1]} : vector<32x256xf32> to vector<32x150xf32>
    %194 = tpu.concatenate %185, %186, %187, %188, %189, %190, %191, %192, %193 in 0 : vector<32x150xf32>, vector<32x150xf32>, vector<32x150xf32>, vector<32x150xf32>, vector<32x150xf32>, vector<32x150xf32>, vector<32x150xf32>, vector<32x150xf32>, vector<32x150xf32> -> vector<288x150xf32>
    %c112 = arith.constant 112 : index
    %c0_119 = arith.constant 0 : index
    %195 = vector.load %arg1[%c112, %c0_119] : memref<864x288xf32, #tpu.memory_space<vmem>>, vector<32x288xf32>
    %cst_120 = arith.constant dense<0.000000e+00> : vector<32x150xf32>
    %196 = tpu.matmul %195, %194, %cst_120 {dimension_numbers = #tpu.dot_dimension_numbers<[1], [0], [0], [1], [0, 0, 1, 1], [], []>} : vector<32x288xf32>, vector<288x150xf32>, vector<32x150xf32> -> vector<32x150xf32>
    %c112_121 = arith.constant 112 : index
    %c0_122 = arith.constant 0 : index
    %197 = vector.load %arg2[%c112_121, %c0_122] : memref<384x1xf32, #tpu.memory_space<vmem>>, vector<32x1xf32>
    %198 = vector.broadcast %197 : vector<32x1xf32> to vector<32x150xf32>
    %199 = arith.addf %196, %198 : vector<32x150xf32>
    %cst_123 = arith.constant 0.000000e+00 : f32
    %200 = vector.broadcast %cst_123 : f32 to vector<32x150xf32>
    %201 = arith.maximumf %199, %200 : vector<32x150xf32>
    %c0_124 = arith.constant 0 : index
    %c0_125 = arith.constant 0 : index
    %202 = vector.load %arg5[%c0_124, %c0_125] : memref<1x150xf32, #tpu.memory_space<vmem>>, vector<1x150xf32>
    %203 = vector.broadcast %202 : vector<1x150xf32> to vector<32x150xf32>
    %204 = arith.mulf %201, %203 : vector<32x150xf32>
    %c0_126 = arith.constant 0 : index
    %c7 = arith.constant 7 : index
    %205 = vector.load %arg14[%c0_126, %c7] : memref<64x256xf32, #tpu.memory_space<vmem>>, vector<32x150xf32>
    tpu.vector_store %arg14[%c0_126, %c7], %204 {strides = array<i32>} : memref<64x256xf32, #tpu.memory_space<vmem>>, vector<32x150xf32>,
    %c0_127 = arith.constant 0 : index
    %c0_128 = arith.constant 0 : index
    %206 = vector.load %arg14[%c0_127, %c0_128] : memref<64x256xf32, #tpu.memory_space<vmem>>, vector<32x256xf32>
    %c0_129 = arith.constant 0 : index
    %c0_130 = arith.constant 0 : index
    %207 = vector.load %arg8[%c0_129, %c0_130] : memref<1x256xf32, #tpu.memory_space<vmem>>, vector<1x256xf32>
    %c600 = arith.constant 600 : index
    %c0_131 = arith.constant 0 : index
    %208 = vector.load %arg1[%c600, %c0_131] : memref<864x288xf32, #tpu.memory_space<vmem>>, vector<256x2xf32>
    %c856 = arith.constant 856 : index
    %c0_132 = arith.constant 0 : index
    %209 = vector.load %arg1[%c856, %c0_132] : memref<864x288xf32, #tpu.memory_space<vmem>>, vector<2x256xf32>
    %c304_133 = arith.constant 304 : index
    %c0_134 = arith.constant 0 : index
    %210 = vector.load %arg1[%c304_133, %c0_134] : memref<864x288xf32, #tpu.memory_space<vmem>>, vector<32x32xf32>
    %cst_135 = arith.constant dense<0.000000e+00> : vector<32x2xf32>
    %211 = tpu.matmul %206, %208, %cst_135 {dimension_numbers = #tpu.dot_dimension_numbers<[1], [0], [0], [1], [0, 0, 1, 1], [], []>} : vector<32x256xf32>, vector<256x2xf32>, vector<32x2xf32> -> vector<32x2xf32>
    %cst_136 = arith.constant dense<0.000000e+00> : vector<32x2xf32>
    %212 = tpu.matmul %210, %211, %cst_136 {dimension_numbers = #tpu.dot_dimension_numbers<[1], [0], [0], [1], [0, 0, 1, 1], [], []>} : vector<32x32xf32>, vector<32x2xf32>, vector<32x2xf32> -> vector<32x2xf32>
    %cst_137 = arith.constant 1.562500e-02 : f32
    %213 = vector.broadcast %cst_137 : f32 to vector<32x2xf32>
    %214 = arith.mulf %212, %213 : vector<32x2xf32>
    %cst_138 = arith.constant dense<0.000000e+00> : vector<32x256xf32>
    %215 = tpu.matmul %214, %209, %cst_138 {dimension_numbers = #tpu.dot_dimension_numbers<[1], [0], [0], [1], [0, 0, 1, 1], [], []>} : vector<32x2xf32>, vector<2x256xf32>, vector<32x256xf32> -> vector<32x256xf32>
    %216 = arith.subf %206, %215 : vector<32x256xf32>
    %217 = vector.broadcast %207 : vector<1x256xf32> to vector<32x256xf32>
    %218 = arith.mulf %216, %217 : vector<32x256xf32>
    %219 = arith.mulf %218, %218 : vector<32x256xf32>
    %cst_139 = arith.constant dense<0.000000e+00> : vector<32x2xf32>
    %220 = tpu.matmul %219, %208, %cst_139 {dimension_numbers = #tpu.dot_dimension_numbers<[1], [0], [0], [1], [0, 0, 1, 1], [], []>} : vector<32x256xf32>, vector<256x2xf32>, vector<32x2xf32> -> vector<32x2xf32>
    %cst_140 = arith.constant dense<0.000000e+00> : vector<32x2xf32>
    %221 = tpu.matmul %210, %220, %cst_140 {dimension_numbers = #tpu.dot_dimension_numbers<[1], [0], [0], [1], [0, 0, 1, 1], [], []>} : vector<32x32xf32>, vector<32x2xf32>, vector<32x2xf32> -> vector<32x2xf32>
    %cst_141 = arith.constant 1.562500e-02 : f32
    %222 = vector.broadcast %cst_141 : f32 to vector<32x2xf32>
    %223 = arith.mulf %221, %222 : vector<32x2xf32>
    %cst_142 = arith.constant 9.99999974E-6 : f32
    %224 = vector.broadcast %cst_142 : f32 to vector<32x2xf32>
    %225 = arith.addf %223, %224 : vector<32x2xf32>
    %226 = math.rsqrt %225 : vector<32x2xf32>
    %cst_143 = arith.constant dense<0.000000e+00> : vector<32x256xf32>
    %227 = tpu.matmul %226, %209, %cst_143 {dimension_numbers = #tpu.dot_dimension_numbers<[1], [0], [0], [1], [0, 0, 1, 1], [], []>} : vector<32x2xf32>, vector<2x256xf32>, vector<32x256xf32> -> vector<32x256xf32>
    %228 = arith.mulf %218, %227 : vector<32x256xf32>
    %c320 = arith.constant 320 : index
    %c0_144 = arith.constant 0 : index
    %229 = vector.load %arg2[%c320, %c0_144] : memref<384x1xf32, #tpu.memory_space<vmem>>, vector<32x1xf32>
    %230 = vector.broadcast %229 : vector<32x1xf32> to vector<32x256xf32>
    %231 = arith.mulf %228, %230 : vector<32x256xf32>
    %c352 = arith.constant 352 : index
    %c0_145 = arith.constant 0 : index
    %232 = vector.load %arg2[%c352, %c0_145] : memref<384x1xf32, #tpu.memory_space<vmem>>, vector<32x1xf32>
    %233 = vector.broadcast %232 : vector<32x1xf32> to vector<32x256xf32>
    %234 = arith.addf %231, %233 : vector<32x256xf32>
    %cst_146 = arith.constant 0.000000e+00 : f32
    %235 = vector.broadcast %cst_146 : f32 to vector<32x256xf32>
    %236 = arith.maximumf %234, %235 : vector<32x256xf32>
    %237 = vector.broadcast %207 : vector<1x256xf32> to vector<32x256xf32>
    %238 = arith.mulf %236, %237 : vector<32x256xf32>
    %c0_147 = arith.constant 0 : index
    %c0_148 = arith.constant 0 : index
    %239 = vector.load %arg14[%c0_147, %c0_148] : memref<64x256xf32, #tpu.memory_space<vmem>>, vector<32x256xf32>
    tpu.vector_store %arg14[%c0_147, %c0_148], %238 {strides = array<i32>} : memref<64x256xf32, #tpu.memory_space<vmem>>, vector<32x256xf32>,
    %c0_149 = arith.constant 0 : index
    %c0_150 = arith.constant 0 : index
    %240 = vector.load %arg14[%c0_149, %c0_150] : memref<64x256xf32, #tpu.memory_space<vmem>>, vector<32x256xf32>
    %241 = vector.extract_strided_slice %240 {offsets = [0, 0], sizes = [32, 150], strides = [1, 1]} : vector<32x256xf32> to vector<32x150xf32>
    %242 = vector.extract_strided_slice %240 {offsets = [0, 1], sizes = [32, 150], strides = [1, 1]} : vector<32x256xf32> to vector<32x150xf32>
    %243 = vector.extract_strided_slice %240 {offsets = [0, 2], sizes = [32, 150], strides = [1, 1]} : vector<32x256xf32> to vector<32x150xf32>
    %244 = vector.extract_strided_slice %240 {offsets = [0, 6], sizes = [32, 150], strides = [1, 1]} : vector<32x256xf32> to vector<32x150xf32>
    %245 = vector.extract_strided_slice %240 {offsets = [0, 7], sizes = [32, 150], strides = [1, 1]} : vector<32x256xf32> to vector<32x150xf32>
    %246 = vector.extract_strided_slice %240 {offsets = [0, 8], sizes = [32, 150], strides = [1, 1]} : vector<32x256xf32> to vector<32x150xf32>
    %247 = vector.extract_strided_slice %240 {offsets = [0, 12], sizes = [32, 150], strides = [1, 1]} : vector<32x256xf32> to vector<32x150xf32>
    %248 = vector.extract_strided_slice %240 {offsets = [0, 13], sizes = [32, 150], strides = [1, 1]} : vector<32x256xf32> to vector<32x150xf32>
    %249 = vector.extract_strided_slice %240 {offsets = [0, 14], sizes = [32, 150], strides = [1, 1]} : vector<32x256xf32> to vector<32x150xf32>
    %250 = tpu.concatenate %241, %242, %243, %244, %245, %246, %247, %248, %249 in 0 : vector<32x150xf32>, vector<32x150xf32>, vector<32x150xf32>, vector<32x150xf32>, vector<32x150xf32>, vector<32x150xf32>, vector<32x150xf32>, vector<32x150xf32>, vector<32x150xf32> -> vector<288x150xf32>
    %c144 = arith.constant 144 : index
    %c0_151 = arith.constant 0 : index
    %251 = vector.load %arg1[%c144, %c0_151] : memref<864x288xf32, #tpu.memory_space<vmem>>, vector<64x288xf32>
    %cst_152 = arith.constant dense<0.000000e+00> : vector<64x150xf32>
    %252 = tpu.matmul %251, %250, %cst_152 {dimension_numbers = #tpu.dot_dimension_numbers<[1], [0], [0], [1], [0, 0, 1, 1], [], []>} : vector<64x288xf32>, vector<288x150xf32>, vector<64x150xf32> -> vector<64x150xf32>
    %c144_153 = arith.constant 144 : index
    %c0_154 = arith.constant 0 : index
    %253 = vector.load %arg2[%c144_153, %c0_154] : memref<384x1xf32, #tpu.memory_space<vmem>>, vector<64x1xf32>
    %254 = vector.broadcast %253 : vector<64x1xf32> to vector<64x150xf32>
    %255 = arith.addf %252, %254 : vector<64x150xf32>
    %cst_155 = arith.constant 0.000000e+00 : f32
    %256 = vector.broadcast %cst_155 : f32 to vector<64x150xf32>
    %257 = arith.maximumf %255, %256 : vector<64x150xf32>
    %c0_156 = arith.constant 0 : index
    %c0_157 = arith.constant 0 : index
    %258 = vector.load %arg5[%c0_156, %c0_157] : memref<1x150xf32, #tpu.memory_space<vmem>>, vector<1x150xf32>
    %259 = vector.broadcast %258 : vector<1x150xf32> to vector<64x150xf32>
    %260 = arith.mulf %257, %259 : vector<64x150xf32>
    %c0_158 = arith.constant 0 : index
    %c7_159 = arith.constant 7 : index
    %261 = vector.load %arg14[%c0_158, %c7_159] : memref<64x256xf32, #tpu.memory_space<vmem>>, vector<64x150xf32>
    tpu.vector_store %arg14[%c0_158, %c7_159], %260 {strides = array<i32>} : memref<64x256xf32, #tpu.memory_space<vmem>>, vector<64x150xf32>,
    %c0_160 = arith.constant 0 : index
    %c0_161 = arith.constant 0 : index
    %262 = vector.load %arg14[%c0_160, %c0_161] : memref<64x256xf32, #tpu.memory_space<vmem>>, vector<64x256xf32>
    %c208 = arith.constant 208 : index
    %c0_162 = arith.constant 0 : index
    %263 = vector.load %arg1[%c208, %c0_162] : memref<864x288xf32, #tpu.memory_space<vmem>>, vector<64x64xf32>
    %cst_163 = arith.constant dense<0.000000e+00> : vector<64x256xf32>
    %264 = tpu.matmul %263, %262, %cst_163 {dimension_numbers = #tpu.dot_dimension_numbers<[1], [0], [0], [1], [0, 0, 1, 1], [], []>} : vector<64x64xf32>, vector<64x256xf32>, vector<64x256xf32> -> vector<64x256xf32>
    %c208_164 = arith.constant 208 : index
    %c0_165 = arith.constant 0 : index
    %265 = vector.load %arg2[%c208_164, %c0_165] : memref<384x1xf32, #tpu.memory_space<vmem>>, vector<64x1xf32>
    %266 = vector.broadcast %265 : vector<64x1xf32> to vector<64x256xf32>
    %267 = arith.addf %264, %266 : vector<64x256xf32>
    %cst_166 = arith.constant 0.000000e+00 : f32
    %268 = vector.broadcast %cst_166 : f32 to vector<64x256xf32>
    %269 = arith.maximumf %267, %268 : vector<64x256xf32>
    %c0_167 = arith.constant 0 : index
    %c0_168 = arith.constant 0 : index
    %270 = vector.load %arg8[%c0_167, %c0_168] : memref<1x256xf32, #tpu.memory_space<vmem>>, vector<1x256xf32>
    %271 = vector.broadcast %270 : vector<1x256xf32> to vector<64x256xf32>
    %272 = arith.mulf %269, %271 : vector<64x256xf32>
    %c0_169 = arith.constant 0 : index
    %c0_170 = arith.constant 0 : index
    %273 = vector.load %arg14[%c0_169, %c0_170] : memref<64x256xf32, #tpu.memory_space<vmem>>, vector<64x256xf32>
    tpu.vector_store %arg14[%c0_169, %c0_170], %272 {strides = array<i32>} : memref<64x256xf32, #tpu.memory_space<vmem>>, vector<64x256xf32>,
    %c0_171 = arith.constant 0 : index
    %c0_172 = arith.constant 0 : index
    %274 = vector.load %arg14[%c0_171, %c0_172] : memref<64x256xf32, #tpu.memory_space<vmem>>, vector<64x256xf32>
    %c600_173 = arith.constant 600 : index
    %c0_174 = arith.constant 0 : index
    %275 = vector.load %arg1[%c600_173, %c0_174] : memref<864x288xf32, #tpu.memory_space<vmem>>, vector<256x2xf32>
    %cst_175 = arith.constant dense<0.000000e+00> : vector<64x2xf32>
    %276 = tpu.matmul %274, %275, %cst_175 {dimension_numbers = #tpu.dot_dimension_numbers<[1], [0], [0], [1], [0, 0, 1, 1], [], []>} : vector<64x256xf32>, vector<256x2xf32>, vector<64x2xf32> -> vector<64x2xf32>
    %cst_176 = arith.constant 6.250000e-02 : f32
    %277 = vector.broadcast %cst_176 : f32 to vector<64x2xf32>
    %278 = arith.mulf %276, %277 : vector<64x2xf32>
    %c272 = arith.constant 272 : index
    %c0_177 = arith.constant 0 : index
    %279 = vector.load %arg1[%c272, %c0_177] : memref<864x288xf32, #tpu.memory_space<vmem>>, vector<16x64xf32>
    %cst_178 = arith.constant dense<0.000000e+00> : vector<16x2xf32>
    %280 = tpu.matmul %279, %278, %cst_178 {dimension_numbers = #tpu.dot_dimension_numbers<[1], [0], [0], [1], [0, 0, 1, 1], [], []>} : vector<16x64xf32>, vector<64x2xf32>, vector<16x2xf32> -> vector<16x2xf32>
    %c272_179 = arith.constant 272 : index
    %c0_180 = arith.constant 0 : index
    %281 = vector.load %arg2[%c272_179, %c0_180] : memref<384x1xf32, #tpu.memory_space<vmem>>, vector<16x1xf32>
    %282 = vector.broadcast %281 : vector<16x1xf32> to vector<16x2xf32>
    %283 = arith.addf %280, %282 : vector<16x2xf32>
    %c0_181 = arith.constant 0 : index
    %c0_182 = arith.constant 0 : index
    %284 = vector.load %arg11[%c0_181, %c0_182] : memref<16x2xf32, #tpu.memory_space<vmem>>, vector<16x2xf32>
    tpu.vector_store %arg11[%c0_181, %c0_182], %283 {strides = array<i32>} : memref<16x2xf32, #tpu.memory_space<vmem>>, vector<16x2xf32>,
    return
  }
}

</mosaic_0001>

<llo_original>
// kernel: forward.1
$region0: #{forward.1}
  #allocation0 [shape = 'u32[]', space=smem, size = 0x4, offset = 0x4, fixed_abs, tag = 'smem constant byte address 0x4 - core index']
  #allocation1 [shape = 'u32[72,128]{1,0:T(1,128)}', space=vmem, size = 0x9000, scoped, tag = 'internal scratch']
  #allocation2 [shape = 'f32[16,768]{1,0:T(8,128)}', space=vmem, size = 0xc000, scoped, tag = 'scratch operand']
  #allocation3 [shape = 'f32[32,256]{1,0:T(8,128)}', space=vmem, size = 0x8000, scoped, tag = 'scratch operand']
  #allocation4 [shape = 'f32[64,256]{1,0:T(8,128)}', space=vmem, size = 0x10000, scoped, tag = 'scratch operand']
  %s0 = inlined_call_operand.vmem [shape: f32[8,768], index: 0, kind: input, shape index: {}]
  %s1 = inlined_call_operand.vmem [shape: f32[864,288], index: 1, kind: input, shape index: {}]
  %s2 = inlined_call_operand.vmem [shape: f32[384,1], index: 2, kind: input, shape index: {}]
  %s3 = inlined_call_operand.vmem [shape: f32[1,670], index: 3, kind: input, shape index: {}]
  %s4 = inlined_call_operand.vmem [shape: f32[1,206], index: 4, kind: input, shape index: {}]
  %s5 = inlined_call_operand.vmem [shape: f32[1,150], index: 5, kind: input, shape index: {}]
  %s6 = inlined_call_operand.vmem [shape: f32[1,768], index: 6, kind: input, shape index: {}]
  %s7 = inlined_call_operand.vmem [shape: f32[1,256], index: 7, kind: input, shape index: {}]
  %s8 = inlined_call_operand.vmem [shape: f32[1,256], index: 8, kind: input, shape index: {}]
  %s9 = inlined_call_operand.vmem [shape: f32[749,256], index: 9, kind: input, shape index: {}]
  %s10 = inlined_call_operand.vmem [shape: f32[245,256], index: 10, kind: input, shape index: {}]
  %s11 = inlined_call_operand.vmem [shape: f32[16,2], index: 11, kind: output, shape index: {}]
  %s12 = sld [smem:[#allocation0]]
  $region54: #{forward.1} parent=0
    _
  %s14 = ssub.s32 1, %s12
  %s15 = scalar_select 0, %s14, %s12
  // Predicated region
  $region2: #{forward.1} parent=0 // pred_check
    _
  $region3: #{forward.1} parent=0 // pred_check_branch
    %17 = sbr.rel (0) target = $region5
  $region4: #{forward.1} parent=0 // pred_region
    _
  $region5: #{forward.1} parent=0 // pred_fallthru
    _
  // Predicated region
  $region6: #{forward.1} parent=0 // pred_check
    _
  $region7: #{forward.1} parent=0 // pred_check_branch
    %19 = sbr.rel (0) target = $region9
  $region8: #{forward.1} parent=0 // pred_region
    _
  $region9: #{forward.1} parent=0 // pred_fallthru
    _
  // Predicated region
  $region10: #{forward.1} parent=0 // pred_check
    _
  $region11: #{forward.1} parent=0 // pred_check_branch
    %21 = sbr.rel (0) target = $region13
  $region12: #{forward.1} parent=0 // pred_region
    _
  $region13: #{forward.1} parent=0 // pred_fallthru
    _
  // Predicated region
  $region14: #{forward.1} parent=0 // pred_check
    _
  $region15: #{forward.1} parent=0 // pred_check_branch
    %23 = sbr.rel (0) target = $region17
  $region16: #{forward.1} parent=0 // pred_region
    _
  $region17: #{forward.1} parent=0 // pred_fallthru
    _
  // Predicated region
  $region18: #{forward.1} parent=0 // pred_check
    _
  $region19: #{forward.1} parent=0 // pred_check_branch
    %25 = sbr.rel (0) target = $region21
  $region20: #{forward.1} parent=0 // pred_region
    _
  $region21: #{forward.1} parent=0 // pred_fallthru
    _
  // Predicated region
  $region22: #{forward.1} parent=0 // pred_check
    _
  $region23: #{forward.1} parent=0 // pred_check_branch
    %27 = sbr.rel (0) target = $region25
  $region24: #{forward.1} parent=0 // pred_region
    _
  $region25: #{forward.1} parent=0 // pred_fallthru
    _
  // Predicated region
  $region26: #{forward.1} parent=0 // pred_check
    _
  $region27: #{forward.1} parent=0 // pred_check_branch
    %29 = sbr.rel (0) target = $region29
  $region28: #{forward.1} parent=0 // pred_region
    _
  $region29: #{forward.1} parent=0 // pred_fallthru
    _
  // Predicated region
  $region30: #{forward.1} parent=0 // pred_check
    _
  $region31: #{forward.1} parent=0 // pred_check_branch
    %31 = sbr.rel (0) target = $region33
  $region32: #{forward.1} parent=0 // pred_region
    _
  $region33: #{forward.1} parent=0 // pred_fallthru
    _
  // Predicated region
  $region34: #{forward.1} parent=0 // pred_check
    _
  $region35: #{forward.1} parent=0 // pred_check_branch
    %33 = sbr.rel (0) target = $region37
  $region36: #{forward.1} parent=0 // pred_region
    _
  $region37: #{forward.1} parent=0 // pred_fallthru
    _
  // Predicated region
  $region38: #{forward.1} parent=0 // pred_check
    _
  $region39: #{forward.1} parent=0 // pred_check_branch
    %35 = sbr.rel (0) target = $region41
  $region40: #{forward.1} parent=0 // pred_region
    _
  $region41: #{forward.1} parent=0 // pred_fallthru
    _
  // Predicated region
  $region42: #{forward.1} parent=0 // pred_check
    _
  $region43: #{forward.1} parent=0 // pred_check_branch
    %37 = sbr.rel (0) target = $region45
  $region44: #{forward.1} parent=0 // pred_region
    _
  $region45: #{forward.1} parent=0 // pred_fallthru
    _
  %38 = vst [vmem:[#allocation4] sm:$0xff] 0.0
  %39 = vst [vmem:[#allocation4 + $0x8] sm:$0xff] 0.0
  %40 = vst [vmem:[#allocation4 + $0x10] sm:$0xff] 0.0
  %41 = vst [vmem:[#allocation4 + $0x18] sm:$0xff] 0.0
  %42 = vst [vmem:[#allocation4 + $0x20] sm:$0xff] 0.0
  %43 = vst [vmem:[#allocation4 + $0x28] sm:$0xff] 0.0
  %44 = vst [vmem:[#allocation4 + $0x30] sm:$0xff] 0.0
  %45 = vst [vmem:[#allocation4 + $0x38] sm:$0xff] 0.0
  %46 = vst [vmem:[#allocation4 + $0x40] sm:$0xff] 0.0
  %47 = vst [vmem:[#allocation4 + $0x48] sm:$0xff] 0.0
  %48 = vst [vmem:[#allocation4 + $0x50] sm:$0xff] 0.0
  %49 = vst [vmem:[#allocation4 + $0x58] sm:$0xff] 0.0
  %50 = vst [vmem:[#allocation4 + $0x60] sm:$0xff] 0.0
  %51 = vst [vmem:[#allocation4 + $0x68] sm:$0xff] 0.0
  %52 = vst [vmem:[#allocation4 + $0x70] sm:$0xff] 0.0
  %53 = vst [vmem:[#allocation4 + $0x78] sm:$0xff] 0.0
  %v54 = vld [vmem:[%s0] sm:$0xff]
  %v55 = vld [vmem:[%s0 + $0x8] sm:$0xff]
  %v56 = vld [vmem:[%s0 + $0x10] sm:$0xff]
  %v57 = vld [vmem:[%s0 + $0x18] sm:$0xff]
  %v58 = vld [vmem:[%s0 + $0x20] sm:$0xff]
  %v59 = vld [vmem:[%s0 + $0x28] sm:$0xff]
  %60 = vst [vmem:[#allocation2] sm:$0xff] %v54
  %61 = vst [vmem:[#allocation2 + $0x8] sm:$0xff] %v55
  %62 = vst [vmem:[#allocation2 + $0x10] sm:$0xff] %v56
  %63 = vst [vmem:[#allocation2 + $0x18] sm:$0xff] %v57
  %64 = vst [vmem:[#allocation2 + $0x20] sm:$0xff] %v58
  %65 = vst [vmem:[#allocation2 + $0x28] sm:$0xff] %v59
  %v66 = vld [vmem:[#allocation2] sm:$0xff]
  %v67 = vld [vmem:[#allocation2 + $0x8] sm:$0xff]
  %v68 = vld [vmem:[#allocation2 + $0x10] sm:$0xff]
  %v69 = vld [vmem:[#allocation2 + $0x18] sm:$0xff]
  %v70 = vld [vmem:[#allocation2 + $0x20] sm:$0xff]
  %v71 = vld [vmem:[#allocation2 + $0x28] sm:$0xff]
  %78 = vrot.lane.b32.xlu0 %v66, 127
  %v79 = vpop.permute.xlu0 %78
  %80 = vrot.lane.b32.xlu0 %v67, 127
  %v81 = vpop.permute.xlu0 %80
  %82 = vrot.lane.b32.xlu0 %v68, 127
  %v83 = vpop.permute.xlu0 %82
  %84 = vrot.lane.b32.xlu0 %v69, 127
  %v85 = vpop.permute.xlu0 %84
  %86 = vrot.lane.b32.xlu0 %v70, 127
  %v87 = vpop.permute.xlu0 %86
  %88 = vrot.lane.b32.xlu0 %v71, 127
  %v89 = vpop.permute.xlu0 %88
  %vm90 = vcmask 1039360
  %v91 = vsel %vm90, %v79, %v81
  %v92 = vsel %vm90, %v81, %v83
  %v93 = vsel %vm90, %v83, %v85
  %v94 = vsel %vm90, %v85, %v87
  %v95 = vsel %vm90, %v87, %v89
  %102 = vrot.lane.b32.xlu0 %v66, 126
  %v103 = vpop.permute.xlu0 %102
  %104 = vrot.lane.b32.xlu0 %v67, 126
  %v105 = vpop.permute.xlu0 %104
  %106 = vrot.lane.b32.xlu0 %v68, 126
  %v107 = vpop.permute.xlu0 %106
  %108 = vrot.lane.b32.xlu0 %v69, 126
  %v109 = vpop.permute.xlu0 %108
  %110 = vrot.lane.b32.xlu0 %v70, 126
  %v111 = vpop.permute.xlu0 %110
  %112 = vrot.lane.b32.xlu0 %v71, 126
  %v113 = vpop.permute.xlu0 %112
  %vm114 = vcmask 1031168
  %v115 = vsel %vm114, %v103, %v105
  %v116 = vsel %vm114, %v105, %v107
  %v117 = vsel %vm114, %v107, %v109
  %v118 = vsel %vm114, %v109, %v111
  %v119 = vsel %vm114, %v111, %v113
  %126 = vrot.lane.b32.xlu0 %v66, 110
  %v127 = vpop.permute.xlu0 %126
  %128 = vrot.lane.b32.xlu0 %v67, 110
  %v129 = vpop.permute.xlu0 %128
  %130 = vrot.lane.b32.xlu0 %v68, 110
  %v131 = vpop.permute.xlu0 %130
  %132 = vrot.lane.b32.xlu0 %v69, 110
  %v133 = vpop.permute.xlu0 %132
  %134 = vrot.lane.b32.xlu0 %v70, 110
  %v135 = vpop.permute.xlu0 %134
  %136 = vrot.lane.b32.xlu0 %v71, 110
  %v137 = vpop.permute.xlu0 %136
  %vm138 = vcmask 900096
  %v139 = vsel %vm138, %v127, %v129
  %v140 = vsel %vm138, %v129, %v131
  %v141 = vsel %vm138, %v131, %v133
  %v142 = vsel %vm138, %v133, %v135
  %v143 = vsel %vm138, %v135, %v137
  %150 = vrot.lane.b32.xlu0 %v66, 109
  %v151 = vpop.permute.xlu0 %150
  %152 = vrot.lane.b32.xlu0 %v67, 109
  %v153 = vpop.permute.xlu0 %152
  %154 = vrot.lane.b32.xlu0 %v68, 109
  %v155 = vpop.permute.xlu0 %154
  %156 = vrot.lane.b32.xlu0 %v69, 109
  %v157 = vpop.permute.xlu0 %156
  %158 = vrot.lane.b32.xlu0 %v70, 109
  %v159 = vpop.permute.xlu0 %158
  %160 = vrot.lane.b32.xlu0 %v71, 109
  %v161 = vpop.permute.xlu0 %160
  %vm162 = vcmask 891904
  %v163 = vsel %vm162, %v151, %v153
  %v164 = vsel %vm162, %v153, %v155
  %v165 = vsel %vm162, %v155, %v157
  %v166 = vsel %vm162, %v157, %v159
  %v167 = vsel %vm162, %v159, %v161
  %174 = vrot.lane.b32.xlu0 %v66, 108
  %v175 = vpop.permute.xlu0 %174
  %176 = vrot.lane.b32.xlu0 %v67, 108
  %v177 = vpop.permute.xlu0 %176
  %178 = vrot.lane.b32.xlu0 %v68, 108
  %v179 = vpop.permute.xlu0 %178
  %180 = vrot.lane.b32.xlu0 %v69, 108
  %v181 = vpop.permute.xlu0 %180
  %182 = vrot.lane.b32.xlu0 %v70, 108
  %v183 = vpop.permute.xlu0 %182
  %184 = vrot.lane.b32.xlu0 %v71, 108
  %v185 = vpop.permute.xlu0 %184
  %vm186 = vcmask 883712
  %v187 = vsel %vm186, %v175, %v177
  %v188 = vsel %vm186, %v177, %v179
  %v189 = vsel %vm186, %v179, %v181
  %v190 = vsel %vm186, %v181, %v183
  %v191 = vsel %vm186, %v183, %v185
  %198 = vrot.lane.b32.xlu0 %v66, 92
  %v199 = vpop.permute.xlu0 %198
  %200 = vrot.lane.b32.xlu0 %v67, 92
  %v201 = vpop.permute.xlu0 %200
  %202 = vrot.lane.b32.xlu0 %v68, 92
  %v203 = vpop.permute.xlu0 %202
  %204 = vrot.lane.b32.xlu0 %v69, 92
  %v205 = vpop.permute.xlu0 %204
  %206 = vrot.lane.b32.xlu0 %v70, 92
  %v207 = vpop.permute.xlu0 %206
  %208 = vrot.lane.b32.xlu0 %v71, 92
  %v209 = vpop.permute.xlu0 %208
  %vm210 = vcmask 752640
  %v211 = vsel %vm210, %v199, %v201
  %v212 = vsel %vm210, %v201, %v203
  %v213 = vsel %vm210, %v203, %v205
  %v214 = vsel %vm210, %v205, %v207
  %v215 = vsel %vm210, %v207, %v209
  %222 = vrot.lane.b32.xlu0 %v66, 91
  %v223 = vpop.permute.xlu0 %222
  %224 = vrot.lane.b32.xlu0 %v67, 91
  %v225 = vpop.permute.xlu0 %224
  %226 = vrot.lane.b32.xlu0 %v68, 91
  %v227 = vpop.permute.xlu0 %226
  %228 = vrot.lane.b32.xlu0 %v69, 91
  %v229 = vpop.permute.xlu0 %228
  %230 = vrot.lane.b32.xlu0 %v70, 91
  %v231 = vpop.permute.xlu0 %230
  %232 = vrot.lane.b32.xlu0 %v71, 91
  %v233 = vpop.permute.xlu0 %232
  %vm234 = vcmask 744448
  %v235 = vsel %vm234, %v223, %v225
  %v236 = vsel %vm234, %v225, %v227
  %v237 = vsel %vm234, %v227, %v229
  %v238 = vsel %vm234, %v229, %v231
  %v239 = vsel %vm234, %v231, %v233
  %246 = vrot.lane.b32.xlu0 %v66, 90
  %v247 = vpop.permute.xlu0 %246
  %248 = vrot.lane.b32.xlu0 %v67, 90
  %v249 = vpop.permute.xlu0 %248
  %250 = vrot.lane.b32.xlu0 %v68, 90
  %v251 = vpop.permute.xlu0 %250
  %252 = vrot.lane.b32.xlu0 %v69, 90
  %v253 = vpop.permute.xlu0 %252
  %254 = vrot.lane.b32.xlu0 %v70, 90
  %v255 = vpop.permute.xlu0 %254
  %256 = vrot.lane.b32.xlu0 %v71, 90
  %v257 = vpop.permute.xlu0 %256
  %vm258 = vcmask 736256
  %v259 = vsel %vm258, %v247, %v249
  %v260 = vsel %vm258, %v249, %v251
  %v261 = vsel %vm258, %v251, %v253
  %v262 = vsel %vm258, %v253, %v255
  %v263 = vsel %vm258, %v255, %v257
  %v270 = vld [vmem:[%s1] sm:$0xff]
  %v271 = vld [vmem:[%s2] sm:$0xff]
  %273 = vset.pattern.permute.xlu0 0
  %274 = vperm.xlu0 %273, %v271
  %v275 = vpop.permute.xlu0 %274
  %vm277 = vcmask 588800
  %v279 = vsel %vm277, %v270, 0
  %281 = vmatpush.msra.mxu0 0.0
  %282 = vmatpush.msra.mxu0 0.0
  %283 = vmatpush.msra.mxu0 0.0
  %284 = vmatpush.msra.mxu0 0.0
  %285 = vmatpush.msra.mxu0 0.0
  %286 = vmatpush.msra.mxu0 0.0
  %287 = vmatpush.msra.mxu0 0.0
  %288 = vmatpush.msra.mxu0 %v259
  %289 = vmatpush.msra.mxu0 %v235
  %290 = vmatpush.msra.mxu0 %v211
  %291 = vmatpush.msra.mxu0 %v187
  %292 = vmatpush.msra.mxu0 %v163
  %293 = vmatpush.msra.mxu0 %v139
  %294 = vmatpush.msra.mxu0 %v115
  %295 = vmatpush.msra.mxu0 %v91
  %296 = vmatpush.msra.mxu0 %v66
  %297 = vmatmul.f32.gmra.mxu0 %v279
  %v298 = vpop.f32.mrf.mxu0
  %v299 = vadd.f32 %v275, %v298
  %300 = vdwg.mxu0
  %301 = vmatpush.msra.mxu0 0.0
  %302 = vmatpush.msra.mxu0 0.0
  %303 = vmatpush.msra.mxu0 0.0
  %304 = vmatpush.msra.mxu0 0.0
  %305 = vmatpush.msra.mxu0 0.0
  %306 = vmatpush.msra.mxu0 0.0
  %307 = vmatpush.msra.mxu0 0.0
  %308 = vmatpush.msra.mxu0 %v260
  %309 = vmatpush.msra.mxu0 %v236
  %310 = vmatpush.msra.mxu0 %v212
  %311 = vmatpush.msra.mxu0 %v188
  %312 = vmatpush.msra.mxu0 %v164
  %313 = vmatpush.msra.mxu0 %v140
  %314 = vmatpush.msra.mxu0 %v116
  %315 = vmatpush.msra.mxu0 %v92
  %316 = vmatpush.msra.mxu0 %v67
  %317 = vmatmul.f32.gmra.mxu0 %v279
  %v318 = vpop.f32.mrf.mxu0
  %v319 = vadd.f32 %v275, %v318
  %320 = vdwg.mxu0
  %321 = vmatpush.msra.mxu0 0.0
  %322 = vmatpush.msra.mxu0 0.0
  %323 = vmatpush.msra.mxu0 0.0
  %324 = vmatpush.msra.mxu0 0.0
  %325 = vmatpush.msra.mxu0 0.0
  %326 = vmatpush.msra.mxu0 0.0
  %327 = vmatpush.msra.mxu0 0.0
  %328 = vmatpush.msra.mxu0 %v261
  %329 = vmatpush.msra.mxu0 %v237
  %330 = vmatpush.msra.mxu0 %v213
  %331 = vmatpush.msra.mxu0 %v189
  %332 = vmatpush.msra.mxu0 %v165
  %333 = vmatpush.msra.mxu0 %v141
  %334 = vmatpush.msra.mxu0 %v117
  %335 = vmatpush.msra.mxu0 %v93
  %336 = vmatpush.msra.mxu0 %v68
  %337 = vmatmul.f32.gmra.mxu0 %v279
  %v338 = vpop.f32.mrf.mxu0
  %v339 = vadd.f32 %v275, %v338
  %340 = vdwg.mxu0
  %341 = vmatpush.msra.mxu0 0.0
  %342 = vmatpush.msra.mxu0 0.0
  %343 = vmatpush.msra.mxu0 0.0
  %344 = vmatpush.msra.mxu0 0.0
  %345 = vmatpush.msra.mxu0 0.0
  %346 = vmatpush.msra.mxu0 0.0
  %347 = vmatpush.msra.mxu0 0.0
  %348 = vmatpush.msra.mxu0 %v262
  %349 = vmatpush.msra.mxu0 %v238
  %350 = vmatpush.msra.mxu0 %v214
  %351 = vmatpush.msra.mxu0 %v190
  %352 = vmatpush.msra.mxu0 %v166
  %353 = vmatpush.msra.mxu0 %v142
  %354 = vmatpush.msra.mxu0 %v118
  %355 = vmatpush.msra.mxu0 %v94
  %356 = vmatpush.msra.mxu0 %v69
  %357 = vmatmul.f32.gmra.mxu0 %v279
  %v358 = vpop.f32.mrf.mxu0
  %v359 = vadd.f32 %v275, %v358
  %360 = vdwg.mxu0
  %361 = vmatpush.msra.mxu0 0.0
  %362 = vmatpush.msra.mxu0 0.0
  %363 = vmatpush.msra.mxu0 0.0
  %364 = vmatpush.msra.mxu0 0.0
  %365 = vmatpush.msra.mxu0 0.0
  %366 = vmatpush.msra.mxu0 0.0
  %367 = vmatpush.msra.mxu0 0.0
  %368 = vmatpush.msra.mxu0 %v263
  %369 = vmatpush.msra.mxu0 %v239
  %370 = vmatpush.msra.mxu0 %v215
  %371 = vmatpush.msra.mxu0 %v191
  %372 = vmatpush.msra.mxu0 %v167
  %373 = vmatpush.msra.mxu0 %v143
  %374 = vmatpush.msra.mxu0 %v119
  %375 = vmatpush.msra.mxu0 %v95
  %376 = vmatpush.msra.mxu0 %v70
  %377 = vmatmul.f32.gmra.mxu0 %v279
  %v378 = vpop.f32.mrf.mxu0
  %v379 = vadd.f32 %v275, %v378
  %380 = vdwg.mxu0
  %381 = vmatpush.msra.mxu0 0.0
  %382 = vmatpush.msra.mxu0 0.0
  %383 = vmatpush.msra.mxu0 0.0
  %384 = vmatpush.msra.mxu0 0.0
  %385 = vmatpush.msra.mxu0 0.0
  %386 = vmatpush.msra.mxu0 0.0
  %387 = vmatpush.msra.mxu0 0.0
  %388 = vmatpush.msra.mxu0 %v257
  %389 = vmatpush.msra.mxu0 %v233
  %390 = vmatpush.msra.mxu0 %v209
  %391 = vmatpush.msra.mxu0 %v185
  %392 = vmatpush.msra.mxu0 %v161
  %393 = vmatpush.msra.mxu0 %v137
  %394 = vmatpush.msra.mxu0 %v113
  %395 = vmatpush.msra.mxu0 %v89
  %396 = vmatpush.msra.mxu0 %v71
  %397 = vmatmul.f32.gmra.mxu0 %v279
  %v398 = vpop.f32.mrf.mxu0
  %v399 = vadd.f32 %v275, %v398
  %400 = vdwg.mxu0
  %v401 = vmax.f32 %v299, 0.0
  %v402 = vmax.f32 %v319, 0.0
  %v403 = vmax.f32 %v339, 0.0
  %v404 = vmax.f32 %v359, 0.0
  %v405 = vmax.f32 %v379, 0.0
  %v406 = vmax.f32 %v399, 0.0
  %v407 = vld [vmem:[%s3] sm:$0x3f]
  %v409 = vperm.slane %v407, 0
  %v410 = vperm.slane %v407, 1
  %v411 = vperm.slane %v407, 2
  %v412 = vperm.slane %v407, 3
  %v413 = vperm.slane %v407, 4
  %v414 = vperm.slane %v407, 5
  %v421 = vmul.f32 %v401, %v409
  %v422 = vmul.f32 %v402, %v410
  %v423 = vmul.f32 %v403, %v411
  %v424 = vmul.f32 %v404, %v412
  %v425 = vmul.f32 %v405, %v413
  %v426 = vmul.f32 %v406, %v414
  %433 = vrot.lane.b32.xlu0 %v421, 19
  %v434 = vpop.permute.xlu0 %433
  %435 = vrot.lane.b32.xlu0 %v422, 19
  %v436 = vpop.permute.xlu0 %435
  %437 = vrot.lane.b32.xlu0 %v423, 19
  %v438 = vpop.permute.xlu0 %437
  %439 = vrot.lane.b32.xlu0 %v424, 19
  %v440 = vpop.permute.xlu0 %439
  %441 = vrot.lane.b32.xlu0 %v425, 19
  %v442 = vpop.permute.xlu0 %441
  %443 = vrot.lane.b32.xlu0 %v426, 19
  %v444 = vpop.permute.xlu0 %443
  %vm445 = vcmask 154624
  %v446 = vsel %vm445, %v434, %v436
  %v447 = vsel %vm445, %v436, %v438
  %v448 = vsel %vm445, %v438, %v440
  %v449 = vsel %vm445, %v440, %v442
  %v450 = vsel %vm445, %v442, %v444
  %vm457 = vcmask 1047704
  %458 = vst.msk [vmem:[#allocation2] sm:$0xff] %vm457, %v434
  %459 = vst [vmem:[#allocation2 + $0x8] sm:$0xff] %v446
  %460 = vst [vmem:[#allocation2 + $0x10] sm:$0xff] %v447
  %461 = vst [vmem:[#allocation2 + $0x18] sm:$0xff] %v448
  %462 = vst [vmem:[#allocation2 + $0x20] sm:$0xff] %v449
  %vm463 = vcmask 400384
  %464 = vst.msk [vmem:[#allocation2 + $0x28] sm:$0xff] %vm463, %v450
  %v465 = vld [vmem:[#allocation2] sm:$0xff]
  %v466 = vld [vmem:[#allocation2 + $0x8] sm:$0xff]
  %v467 = vld [vmem:[#allocation2 + $0x10] sm:$0xff]
  %v468 = vld [vmem:[#allocation2 + $0x18] sm:$0xff]
  %v469 = vld [vmem:[#allocation2 + $0x20] sm:$0xff]
  %v470 = vld [vmem:[#allocation2 + $0x28] sm:$0xff]
  %477 = vrot.lane.b32.xlu0 %v465, 127
  %v478 = vpop.permute.xlu0 %477
  %479 = vrot.lane.b32.xlu0 %v466, 127
  %v480 = vpop.permute.xlu0 %479
  %481 = vrot.lane.b32.xlu0 %v467, 127
  %v482 = vpop.permute.xlu0 %481
  %483 = vrot.lane.b32.xlu0 %v468, 127
  %v484 = vpop.permute.xlu0 %483
  %485 = vrot.lane.b32.xlu0 %v469, 127
  %v486 = vpop.permute.xlu0 %485
  %487 = vrot.lane.b32.xlu0 %v470, 127
  %v488 = vpop.permute.xlu0 %487
  %v489 = vsel %vm90, %v478, %v480
  %v490 = vsel %vm90, %v480, %v482
  %v491 = vsel %vm90, %v482, %v484
  %v492 = vsel %vm90, %v484, %v486
  %v493 = vsel %vm90, %v486, %v488
  %500 = vrot.lane.b32.xlu0 %v465, 126
  %v501 = vpop.permute.xlu0 %500
  %502 = vrot.lane.b32.xlu0 %v466, 126
  %v503 = vpop.permute.xlu0 %502
  %504 = vrot.lane.b32.xlu0 %v467, 126
  %v505 = vpop.permute.xlu0 %504
  %506 = vrot.lane.b32.xlu0 %v468, 126
  %v507 = vpop.permute.xlu0 %506
  %508 = vrot.lane.b32.xlu0 %v469, 126
  %v509 = vpop.permute.xlu0 %508
  %510 = vrot.lane.b32.xlu0 %v470, 126
  %v511 = vpop.permute.xlu0 %510
  %v512 = vsel %vm114, %v501, %v503
  %v513 = vsel %vm114, %v503, %v505
  %v514 = vsel %vm114, %v505, %v507
  %v515 = vsel %vm114, %v507, %v509
  %v516 = vsel %vm114, %v509, %v511
  %523 = vrot.lane.b32.xlu0 %v465, 110
  %v524 = vpop.permute.xlu0 %523
  %525 = vrot.lane.b32.xlu0 %v466, 110
  %v526 = vpop.permute.xlu0 %525
  %527 = vrot.lane.b32.xlu0 %v467, 110
  %v528 = vpop.permute.xlu0 %527
  %529 = vrot.lane.b32.xlu0 %v468, 110
  %v530 = vpop.permute.xlu0 %529
  %531 = vrot.lane.b32.xlu0 %v469, 110
  %v532 = vpop.permute.xlu0 %531
  %533 = vrot.lane.b32.xlu0 %v470, 110
  %v534 = vpop.permute.xlu0 %533
  %v535 = vsel %vm138, %v524, %v526
  %v536 = vsel %vm138, %v526, %v528
  %v537 = vsel %vm138, %v528, %v530
  %v538 = vsel %vm138, %v530, %v532
  %v539 = vsel %vm138, %v532, %v534
  %546 = vrot.lane.b32.xlu0 %v465, 109
  %v547 = vpop.permute.xlu0 %546
  %548 = vrot.lane.b32.xlu0 %v466, 109
  %v549 = vpop.permute.xlu0 %548
  %550 = vrot.lane.b32.xlu0 %v467, 109
  %v551 = vpop.permute.xlu0 %550
  %552 = vrot.lane.b32.xlu0 %v468, 109
  %v553 = vpop.permute.xlu0 %552
  %554 = vrot.lane.b32.xlu0 %v469, 109
  %v555 = vpop.permute.xlu0 %554
  %556 = vrot.lane.b32.xlu0 %v470, 109
  %v557 = vpop.permute.xlu0 %556
  %v558 = vsel %vm162, %v547, %v549
  %v559 = vsel %vm162, %v549, %v551
  %v560 = vsel %vm162, %v551, %v553
  %v561 = vsel %vm162, %v553, %v555
  %v562 = vsel %vm162, %v555, %v557
  %569 = vrot.lane.b32.xlu0 %v465, 108
  %v570 = vpop.permute.xlu0 %569
  %571 = vrot.lane.b32.xlu0 %v466, 108
  %v572 = vpop.permute.xlu0 %571
  %573 = vrot.lane.b32.xlu0 %v467, 108
  %v574 = vpop.permute.xlu0 %573
  %575 = vrot.lane.b32.xlu0 %v468, 108
  %v576 = vpop.permute.xlu0 %575
  %577 = vrot.lane.b32.xlu0 %v469, 108
  %v578 = vpop.permute.xlu0 %577
  %579 = vrot.lane.b32.xlu0 %v470, 108
  %v580 = vpop.permute.xlu0 %579
  %v581 = vsel %vm186, %v570, %v572
  %v582 = vsel %vm186, %v572, %v574
  %v583 = vsel %vm186, %v574, %v576
  %v584 = vsel %vm186, %v576, %v578
  %v585 = vsel %vm186, %v578, %v580
  %592 = vrot.lane.b32.xlu0 %v465, 92
  %v593 = vpop.permute.xlu0 %592
  %594 = vrot.lane.b32.xlu0 %v466, 92
  %v595 = vpop.permute.xlu0 %594
  %596 = vrot.lane.b32.xlu0 %v467, 92
  %v597 = vpop.permute.xlu0 %596
  %598 = vrot.lane.b32.xlu0 %v468, 92
  %v599 = vpop.permute.xlu0 %598
  %600 = vrot.lane.b32.xlu0 %v469, 92
  %v601 = vpop.permute.xlu0 %600
  %602 = vrot.lane.b32.xlu0 %v470, 92
  %v603 = vpop.permute.xlu0 %602
  %v604 = vsel %vm210, %v593, %v595
  %v605 = vsel %vm210, %v595, %v597
  %v606 = vsel %vm210, %v597, %v599
  %v607 = vsel %vm210, %v599, %v601
  %v608 = vsel %vm210, %v601, %v603
  %615 = vrot.lane.b32.xlu0 %v465, 91
  %v616 = vpop.permute.xlu0 %615
  %617 = vrot.lane.b32.xlu0 %v466, 91
  %v618 = vpop.permute.xlu0 %617
  %619 = vrot.lane.b32.xlu0 %v467, 91
  %v620 = vpop.permute.xlu0 %619
  %621 = vrot.lane.b32.xlu0 %v468, 91
  %v622 = vpop.permute.xlu0 %621
  %623 = vrot.lane.b32.xlu0 %v469, 91
  %v624 = vpop.permute.xlu0 %623
  %625 = vrot.lane.b32.xlu0 %v470, 91
  %v626 = vpop.permute.xlu0 %625
  %v627 = vsel %vm234, %v616, %v618
  %v628 = vsel %vm234, %v618, %v620
  %v629 = vsel %vm234, %v620, %v622
  %v630 = vsel %vm234, %v622, %v624
  %v631 = vsel %vm234, %v624, %v626
  %638 = vrot.lane.b32.xlu0 %v465, 90
  %v639 = vpop.permute.xlu0 %638
  %640 = vrot.lane.b32.xlu0 %v466, 90
  %v641 = vpop.permute.xlu0 %640
  %642 = vrot.lane.b32.xlu0 %v467, 90
  %v643 = vpop.permute.xlu0 %642
  %644 = vrot.lane.b32.xlu0 %v468, 90
  %v645 = vpop.permute.xlu0 %644
  %646 = vrot.lane.b32.xlu0 %v469, 90
  %v647 = vpop.permute.xlu0 %646
  %648 = vrot.lane.b32.xlu0 %v470, 90
  %v649 = vpop.permute.xlu0 %648
  %v650 = vsel %vm258, %v639, %v641
  %v651 = vsel %vm258, %v641, %v643
  %v652 = vsel %vm258, %v643, %v645
  %v653 = vsel %vm258, %v645, %v647
  %v654 = vsel %vm258, %v647, %v649
  %v661 = vld [vmem:[%s1 + $0x18] sm:$0xff]
  %v662 = vld [vmem:[%s2 + $0x8] sm:$0xff]
  %664 = vset.pattern.permute.xlu0 0
  %665 = vperm.xlu0 %664, %v662
  %v666 = vpop.permute.xlu0 %665
  %v669 = vsel %vm277, %v661, 0
  %671 = vmatpush.msra.mxu0 0.0
  %672 = vmatpush.msra.mxu0 0.0
  %673 = vmatpush.msra.mxu0 0.0
  %674 = vmatpush.msra.mxu0 0.0
  %675 = vmatpush.msra.mxu0 0.0
  %676 = vmatpush.msra.mxu0 0.0
  %677 = vmatpush.msra.mxu0 0.0
  %678 = vmatpush.msra.mxu0 %v650
  %679 = vmatpush.msra.mxu0 %v627
  %680 = vmatpush.msra.mxu0 %v604
  %681 = vmatpush.msra.mxu0 %v581
  %682 = vmatpush.msra.mxu0 %v558
  %683 = vmatpush.msra.mxu0 %v535
  %684 = vmatpush.msra.mxu0 %v512
  %685 = vmatpush.msra.mxu0 %v489
  %686 = vmatpush.msra.mxu0 %v465
  %687 = vmatmul.f32.gmra.mxu0 %v669
  %v688 = vpop.f32.mrf.mxu0
  %v689 = vadd.f32 %v666, %v688
  %690 = vdwg.mxu0
  %691 = vmatpush.msra.mxu0 0.0
  %692 = vmatpush.msra.mxu0 0.0
  %693 = vmatpush.msra.mxu0 0.0
  %694 = vmatpush.msra.mxu0 0.0
  %695 = vmatpush.msra.mxu0 0.0
  %696 = vmatpush.msra.mxu0 0.0
  %697 = vmatpush.msra.mxu0 0.0
  %698 = vmatpush.msra.mxu0 %v651
  %699 = vmatpush.msra.mxu0 %v628
  %700 = vmatpush.msra.mxu0 %v605
  %701 = vmatpush.msra.mxu0 %v582
  %702 = vmatpush.msra.mxu0 %v559
  %703 = vmatpush.msra.mxu0 %v536
  %704 = vmatpush.msra.mxu0 %v513
  %705 = vmatpush.msra.mxu0 %v490
  %706 = vmatpush.msra.mxu0 %v466
  %707 = vmatmul.f32.gmra.mxu0 %v669
  %v708 = vpop.f32.mrf.mxu0
  %v709 = vadd.f32 %v666, %v708
  %710 = vdwg.mxu0
  %711 = vmatpush.msra.mxu0 0.0
  %712 = vmatpush.msra.mxu0 0.0
  %713 = vmatpush.msra.mxu0 0.0
  %714 = vmatpush.msra.mxu0 0.0
  %715 = vmatpush.msra.mxu0 0.0
  %716 = vmatpush.msra.mxu0 0.0
  %717 = vmatpush.msra.mxu0 0.0
  %718 = vmatpush.msra.mxu0 %v652
  %719 = vmatpush.msra.mxu0 %v629
  %720 = vmatpush.msra.mxu0 %v606
  %721 = vmatpush.msra.mxu0 %v583
  %722 = vmatpush.msra.mxu0 %v560
  %723 = vmatpush.msra.mxu0 %v537
  %724 = vmatpush.msra.mxu0 %v514
  %725 = vmatpush.msra.mxu0 %v491
  %726 = vmatpush.msra.mxu0 %v467
  %727 = vmatmul.f32.gmra.mxu0 %v669
  %v728 = vpop.f32.mrf.mxu0
  %v729 = vadd.f32 %v666, %v728
  %730 = vdwg.mxu0
  %731 = vmatpush.msra.mxu0 0.0
  %732 = vmatpush.msra.mxu0 0.0
  %733 = vmatpush.msra.mxu0 0.0
  %734 = vmatpush.msra.mxu0 0.0
  %735 = vmatpush.msra.mxu0 0.0
  %736 = vmatpush.msra.mxu0 0.0
  %737 = vmatpush.msra.mxu0 0.0
  %738 = vmatpush.msra.mxu0 %v653
  %739 = vmatpush.msra.mxu0 %v630
  %740 = vmatpush.msra.mxu0 %v607
  %741 = vmatpush.msra.mxu0 %v584
  %742 = vmatpush.msra.mxu0 %v561
  %743 = vmatpush.msra.mxu0 %v538
  %744 = vmatpush.msra.mxu0 %v515
  %745 = vmatpush.msra.mxu0 %v492
  %746 = vmatpush.msra.mxu0 %v468
  %747 = vmatmul.f32.gmra.mxu0 %v669
  %v748 = vpop.f32.mrf.mxu0
  %v749 = vadd.f32 %v666, %v748
  %750 = vdwg.mxu0
  %751 = vmatpush.msra.mxu0 0.0
  %752 = vmatpush.msra.mxu0 0.0
  %753 = vmatpush.msra.mxu0 0.0
  %754 = vmatpush.msra.mxu0 0.0
  %755 = vmatpush.msra.mxu0 0.0
  %756 = vmatpush.msra.mxu0 0.0
  %757 = vmatpush.msra.mxu0 0.0
  %758 = vmatpush.msra.mxu0 %v654
  %759 = vmatpush.msra.mxu0 %v631
  %760 = vmatpush.msra.mxu0 %v608
  %761 = vmatpush.msra.mxu0 %v585
  %762 = vmatpush.msra.mxu0 %v562
  %763 = vmatpush.msra.mxu0 %v539
  %764 = vmatpush.msra.mxu0 %v516
  %765 = vmatpush.msra.mxu0 %v493
  %766 = vmatpush.msra.mxu0 %v469
  %767 = vmatmul.f32.gmra.mxu0 %v669
  %v768 = vpop.f32.mrf.mxu0
  %v769 = vadd.f32 %v666, %v768
  %770 = vdwg.mxu0
  %771 = vmatpush.msra.mxu0 0.0
  %772 = vmatpush.msra.mxu0 0.0
  %773 = vmatpush.msra.mxu0 0.0
  %774 = vmatpush.msra.mxu0 0.0
  %775 = vmatpush.msra.mxu0 0.0
  %776 = vmatpush.msra.mxu0 0.0
  %777 = vmatpush.msra.mxu0 0.0
  %778 = vmatpush.msra.mxu0 %v649
  %779 = vmatpush.msra.mxu0 %v626
  %780 = vmatpush.msra.mxu0 %v603
  %781 = vmatpush.msra.mxu0 %v580
  %782 = vmatpush.msra.mxu0 %v557
  %783 = vmatpush.msra.mxu0 %v534
  %784 = vmatpush.msra.mxu0 %v511
  %785 = vmatpush.msra.mxu0 %v488
  %786 = vmatpush.msra.mxu0 %v470
  %787 = vmatmul.f32.gmra.mxu0 %v669
  %v788 = vpop.f32.mrf.mxu0
  %v789 = vadd.f32 %v666, %v788
  %790 = vdwg.mxu0
  %v791 = vmax.f32 %v689, 0.0
  %v792 = vmax.f32 %v709, 0.0
  %v793 = vmax.f32 %v729, 0.0
  %v794 = vmax.f32 %v749, 0.0
  %v795 = vmax.f32 %v769, 0.0
  %v796 = vmax.f32 %v789, 0.0
  %v797 = vld [vmem:[%s3] sm:$0x3f]
  %v799 = vperm.slane %v797, 0
  %v800 = vperm.slane %v797, 1
  %v801 = vperm.slane %v797, 2
  %v802 = vperm.slane %v797, 3
  %v803 = vperm.slane %v797, 4
  %v804 = vperm.slane %v797, 5
  %v811 = vmul.f32 %v791, %v799
  %v812 = vmul.f32 %v792, %v800
  %v813 = vmul.f32 %v793, %v801
  %v814 = vmul.f32 %v794, %v802
  %v815 = vmul.f32 %v795, %v803
  %v816 = vmul.f32 %v796, %v804
  %823 = vrot.lane.b32.xlu0 %v811, 19
  %v824 = vpop.permute.xlu0 %823
  %825 = vrot.lane.b32.xlu0 %v812, 19
  %v826 = vpop.permute.xlu0 %825
  %827 = vrot.lane.b32.xlu0 %v813, 19
  %v828 = vpop.permute.xlu0 %827
  %829 = vrot.lane.b32.xlu0 %v814, 19
  %v830 = vpop.permute.xlu0 %829
  %831 = vrot.lane.b32.xlu0 %v815, 19
  %v832 = vpop.permute.xlu0 %831
  %833 = vrot.lane.b32.xlu0 %v816, 19
  %v834 = vpop.permute.xlu0 %833
  %v835 = vsel %vm445, %v824, %v826
  %v836 = vsel %vm445, %v826, %v828
  %v837 = vsel %vm445, %v828, %v830
  %v838 = vsel %vm445, %v830, %v832
  %v839 = vsel %vm445, %v832, %v834
  %846 = vst.msk [vmem:[#allocation2] sm:$0xff] %vm457, %v824
  %847 = vst [vmem:[#allocation2 + $0x8] sm:$0xff] %v835
  %848 = vst [vmem:[#allocation2 + $0x10] sm:$0xff] %v836
  %849 = vst [vmem:[#allocation2 + $0x18] sm:$0xff] %v837
  %850 = vst [vmem:[#allocation2 + $0x20] sm:$0xff] %v838
  %851 = vst.msk [vmem:[#allocation2 + $0x28] sm:$0xff] %vm463, %v839
  %v852 = vld [vmem:[#allocation2] sm:$0xff]
  %v853 = vld [vmem:[#allocation2 + $0x8] sm:$0xff]
  %v854 = vld [vmem:[#allocation2 + $0x10] sm:$0xff]
  %v855 = vld [vmem:[#allocation2 + $0x18] sm:$0xff]
  %v856 = vld [vmem:[#allocation2 + $0x20] sm:$0xff]
  %v857 = vld [vmem:[#allocation2 + $0x28] sm:$0xff]
  %v858 = vld [vmem:[%s1 + $0x30] sm:$0xff]
  %v859 = vld [vmem:[%s1 + $0x48] sm:$0xff]
  %v860 = vld [vmem:[%s2 + $0x10] sm:$0xff]
  %v861 = vld [vmem:[%s2 + $0x18] sm:$0xff]
  %863 = vset.pattern.permute.xlu0 0
  %864 = vperm.xlu0 %863, %v860
  %v865 = vpop.permute.xlu0 %864
  %868 = vset.pattern.permute.xlu0 0
  %869 = vperm.xlu0 %868, %v861
  %v870 = vpop.permute.xlu0 %869
  %vm872 = vcmask 64512
  %v874 = vsel %vm872, %v858, 0
  %v877 = vsel %vm872, %v859, 0
  %879 = vmatpush.msra.mxu0 0.0
  %880 = vmatpush.msra.mxu0 0.0
  %881 = vmatpush.msra.mxu0 0.0
  %882 = vmatpush.msra.mxu0 0.0
  %883 = vmatpush.msra.mxu0 0.0
  %884 = vmatpush.msra.mxu0 0.0
  %885 = vmatpush.msra.mxu0 0.0
  %886 = vmatpush.msra.mxu0 0.0
  %887 = vmatpush.msra.mxu0 0.0
  %888 = vmatpush.msra.mxu0 0.0
  %889 = vmatpush.msra.mxu0 0.0
  %890 = vmatpush.msra.mxu0 0.0
  %891 = vmatpush.msra.mxu0 0.0
  %892 = vmatpush.msra.mxu0 0.0
  %893 = vmatpush.msra.mxu0 0.0
  %894 = vmatpush.msra.mxu0 %v852
  %895 = vmatmul.f32.gmra.mxu0 %v874
  %v896 = vpop.f32.mrf.mxu0
  %v897 = vadd.f32 %v865, %v896
  %898 = vmatmul.f32.gmra.mxu0 %v877
  %v899 = vpop.f32.mrf.mxu0
  %v900 = vadd.f32 %v870, %v899
  %901 = vdwg.mxu0
  %902 = vmatpush.msra.mxu0 0.0
  %903 = vmatpush.msra.mxu0 0.0
  %904 = vmatpush.msra.mxu0 0.0
  %905 = vmatpush.msra.mxu0 0.0
  %906 = vmatpush.msra.mxu0 0.0
  %907 = vmatpush.msra.mxu0 0.0
  %908 = vmatpush.msra.mxu0 0.0
  %909 = vmatpush.msra.mxu0 0.0
  %910 = vmatpush.msra.mxu0 0.0
  %911 = vmatpush.msra.mxu0 0.0
  %912 = vmatpush.msra.mxu0 0.0
  %913 = vmatpush.msra.mxu0 0.0
  %914 = vmatpush.msra.mxu0 0.0
  %915 = vmatpush.msra.mxu0 0.0
  %916 = vmatpush.msra.mxu0 0.0
  %917 = vmatpush.msra.mxu0 %v853
  %918 = vmatmul.f32.gmra.mxu0 %v874
  %v919 = vpop.f32.mrf.mxu0
  %v920 = vadd.f32 %v865, %v919
  %921 = vmatmul.f32.gmra.mxu0 %v877
  %v922 = vpop.f32.mrf.mxu0
  %v923 = vadd.f32 %v870, %v922
  %924 = vdwg.mxu0
  %925 = vmatpush.msra.mxu0 0.0
  %926 = vmatpush.msra.mxu0 0.0
  %927 = vmatpush.msra.mxu0 0.0
  %928 = vmatpush.msra.mxu0 0.0
  %929 = vmatpush.msra.mxu0 0.0
  %930 = vmatpush.msra.mxu0 0.0
  %931 = vmatpush.msra.mxu0 0.0
  %932 = vmatpush.msra.mxu0 0.0
  %933 = vmatpush.msra.mxu0 0.0
  %934 = vmatpush.msra.mxu0 0.0
  %935 = vmatpush.msra.mxu0 0.0
  %936 = vmatpush.msra.mxu0 0.0
  %937 = vmatpush.msra.mxu0 0.0
  %938 = vmatpush.msra.mxu0 0.0
  %939 = vmatpush.msra.mxu0 0.0
  %940 = vmatpush.msra.mxu0 %v854
  %941 = vmatmul.f32.gmra.mxu0 %v874
  %v942 = vpop.f32.mrf.mxu0
  %v943 = vadd.f32 %v865, %v942
  %944 = vmatmul.f32.gmra.mxu0 %v877
  %v945 = vpop.f32.mrf.mxu0
  %v946 = vadd.f32 %v870, %v945
  %947 = vdwg.mxu0
  %948 = vmatpush.msra.mxu0 0.0
  %949 = vmatpush.msra.mxu0 0.0
  %950 = vmatpush.msra.mxu0 0.0
  %951 = vmatpush.msra.mxu0 0.0
  %952 = vmatpush.msra.mxu0 0.0
  %953 = vmatpush.msra.mxu0 0.0
  %954 = vmatpush.msra.mxu0 0.0
  %955 = vmatpush.msra.mxu0 0.0
  %956 = vmatpush.msra.mxu0 0.0
  %957 = vmatpush.msra.mxu0 0.0
  %958 = vmatpush.msra.mxu0 0.0
  %959 = vmatpush.msra.mxu0 0.0
  %960 = vmatpush.msra.mxu0 0.0
  %961 = vmatpush.msra.mxu0 0.0
  %962 = vmatpush.msra.mxu0 0.0
  %963 = vmatpush.msra.mxu0 %v855
  %964 = vmatmul.f32.gmra.mxu0 %v874
  %v965 = vpop.f32.mrf.mxu0
  %v966 = vadd.f32 %v865, %v965
  %967 = vmatmul.f32.gmra.mxu0 %v877
  %v968 = vpop.f32.mrf.mxu0
  %v969 = vadd.f32 %v870, %v968
  %970 = vdwg.mxu0
  %971 = vmatpush.msra.mxu0 0.0
  %972 = vmatpush.msra.mxu0 0.0
  %973 = vmatpush.msra.mxu0 0.0
  %974 = vmatpush.msra.mxu0 0.0
  %975 = vmatpush.msra.mxu0 0.0
  %976 = vmatpush.msra.mxu0 0.0
  %977 = vmatpush.msra.mxu0 0.0
  %978 = vmatpush.msra.mxu0 0.0
  %979 = vmatpush.msra.mxu0 0.0
  %980 = vmatpush.msra.mxu0 0.0
  %981 = vmatpush.msra.mxu0 0.0
  %982 = vmatpush.msra.mxu0 0.0
  %983 = vmatpush.msra.mxu0 0.0
  %984 = vmatpush.msra.mxu0 0.0
  %985 = vmatpush.msra.mxu0 0.0
  %986 = vmatpush.msra.mxu0 %v856
  %987 = vmatmul.f32.gmra.mxu0 %v874
  %v988 = vpop.f32.mrf.mxu0
  %v989 = vadd.f32 %v865, %v988
  %990 = vmatmul.f32.gmra.mxu0 %v877
  %v991 = vpop.f32.mrf.mxu0
  %v992 = vadd.f32 %v870, %v991
  %993 = vdwg.mxu0
  %994 = vmatpush.msra.mxu0 0.0
  %995 = vmatpush.msra.mxu0 0.0
  %996 = vmatpush.msra.mxu0 0.0
  %997 = vmatpush.msra.mxu0 0.0
  %998 = vmatpush.msra.mxu0 0.0
  %999 = vmatpush.msra.mxu0 0.0
  %1000 = vmatpush.msra.mxu0 0.0
  %1001 = vmatpush.msra.mxu0 0.0
  %1002 = vmatpush.msra.mxu0 0.0
  %1003 = vmatpush.msra.mxu0 0.0
  %1004 = vmatpush.msra.mxu0 0.0
  %1005 = vmatpush.msra.mxu0 0.0
  %1006 = vmatpush.msra.mxu0 0.0
  %1007 = vmatpush.msra.mxu0 0.0
  %1008 = vmatpush.msra.mxu0 0.0
  %1009 = vmatpush.msra.mxu0 %v857
  %1010 = vmatmul.f32.gmra.mxu0 %v874
  %v1011 = vpop.f32.mrf.mxu0
  %v1012 = vadd.f32 %v865, %v1011
  %1013 = vmatmul.f32.gmra.mxu0 %v877
  %v1014 = vpop.f32.mrf.mxu0
  %v1015 = vadd.f32 %v870, %v1014
  %1016 = vdwg.mxu0
  %v1017 = vmax.f32 %v897, 0.0
  %v1018 = vmax.f32 %v920, 0.0
  %v1019 = vmax.f32 %v943, 0.0
  %v1020 = vmax.f32 %v966, 0.0
  %v1021 = vmax.f32 %v989, 0.0
  %v1022 = vmax.f32 %v1012, 0.0
  %v1023 = vmax.f32 %v900, 0.0
  %v1024 = vmax.f32 %v923, 0.0
  %v1025 = vmax.f32 %v946, 0.0
  %v1026 = vmax.f32 %v969, 0.0
  %v1027 = vmax.f32 %v992, 0.0
  %v1028 = vmax.f32 %v1015, 0.0
  %v1029 = vld [vmem:[%s6] sm:$0x3f]
  %v1031 = vperm.slane %v1029, 0
  %v1032 = vperm.slane %v1029, 1
  %v1033 = vperm.slane %v1029, 2
  %v1034 = vperm.slane %v1029, 3
  %v1035 = vperm.slane %v1029, 4
  %v1036 = vperm.slane %v1029, 5
  %v1043 = vmul.f32 %v1017, %v1031
  %v1044 = vmul.f32 %v1018, %v1032
  %v1045 = vmul.f32 %v1019, %v1033
  %v1046 = vmul.f32 %v1020, %v1034
  %v1047 = vmul.f32 %v1021, %v1035
  %v1048 = vmul.f32 %v1022, %v1036
  %v1049 = vmul.f32 %v1023, %v1031
  %v1050 = vmul.f32 %v1024, %v1032
  %v1051 = vmul.f32 %v1025, %v1033
  %v1052 = vmul.f32 %v1026, %v1034
  %v1053 = vmul.f32 %v1027, %v1035
  %v1054 = vmul.f32 %v1028, %v1036
  %1055 = vst [vmem:[#allocation2] sm:$0xff] %v1043
  %1056 = vst [vmem:[#allocation2 + $0x8] sm:$0xff] %v1044
  %1057 = vst [vmem:[#allocation2 + $0x10] sm:$0xff] %v1045
  %1058 = vst [vmem:[#allocation2 + $0x18] sm:$0xff] %v1046
  %1059 = vst [vmem:[#allocation2 + $0x20] sm:$0xff] %v1047
  %1060 = vst [vmem:[#allocation2 + $0x28] sm:$0xff] %v1048
  %1061 = vst [vmem:[#allocation2 + $0x30] sm:$0xff] %v1049
  %1062 = vst [vmem:[#allocation2 + $0x38] sm:$0xff] %v1050
  %1063 = vst [vmem:[#allocation2 + $0x40] sm:$0xff] %v1051
  %1064 = vst [vmem:[#allocation2 + $0x48] sm:$0xff] %v1052
  %1065 = vst [vmem:[#allocation2 + $0x50] sm:$0xff] %v1053
  %1066 = vst [vmem:[#allocation2 + $0x58] sm:$0xff] %v1054
  %v1067 = vld [vmem:[#allocation2] sm:$0xff]
  %v1068 = vld [vmem:[#allocation2 + $0x8] sm:$0xff]
  %v1069 = vld [vmem:[#allocation2 + $0x10] sm:$0xff]
  %v1070 = vld [vmem:[#allocation2 + $0x18] sm:$0xff]
  %v1071 = vld [vmem:[#allocation2 + $0x20] sm:$0xff]
  %v1072 = vld [vmem:[#allocation2 + $0x28] sm:$0xff]
  %v1073 = vld [vmem:[#allocation2 + $0x30] sm:$0xff]
  %v1074 = vld [vmem:[#allocation2 + $0x38] sm:$0xff]
  %v1075 = vld [vmem:[#allocation2 + $0x40] sm:$0xff]
  %v1076 = vld [vmem:[#allocation2 + $0x48] sm:$0xff]
  %v1077 = vld [vmem:[#allocation2 + $0x50] sm:$0xff]
  %v1078 = vld [vmem:[#allocation2 + $0x58] sm:$0xff]
  %1091 = vrot.lane.b32.xlu0 %v1067, 127
  %v1092 = vpop.permute.xlu0 %1091
  %1093 = vrot.lane.b32.xlu0 %v1068, 127
  %v1094 = vpop.permute.xlu0 %1093
  %1095 = vrot.lane.b32.xlu0 %v1069, 127
  %v1096 = vpop.permute.xlu0 %1095
  %1097 = vrot.lane.b32.xlu0 %v1070, 127
  %v1098 = vpop.permute.xlu0 %1097
  %1099 = vrot.lane.b32.xlu0 %v1071, 127
  %v1100 = vpop.permute.xlu0 %1099
  %1101 = vrot.lane.b32.xlu0 %v1072, 127
  %v1102 = vpop.permute.xlu0 %1101
  %1103 = vrot.lane.b32.xlu0 %v1073, 127
  %v1104 = vpop.permute.xlu0 %1103
  %1105 = vrot.lane.b32.xlu0 %v1074, 127
  %v1106 = vpop.permute.xlu0 %1105
  %1107 = vrot.lane.b32.xlu0 %v1075, 127
  %v1108 = vpop.permute.xlu0 %1107
  %1109 = vrot.lane.b32.xlu0 %v1076, 127
  %v1110 = vpop.permute.xlu0 %1109
  %1111 = vrot.lane.b32.xlu0 %v1077, 127
  %v1112 = vpop.permute.xlu0 %1111
  %1113 = vrot.lane.b32.xlu0 %v1078, 127
  %v1114 = vpop.permute.xlu0 %1113
  %v1115 = vsel %vm90, %v1092, %v1094
  %v1116 = vsel %vm90, %v1094, %v1096
  %v1117 = vsel %vm90, %v1096, %v1098
  %v1118 = vsel %vm90, %v1098, %v1100
  %v1119 = vsel %vm90, %v1100, %v1102
  %v1120 = vsel %vm90, %v1104, %v1106
  %v1121 = vsel %vm90, %v1106, %v1108
  %v1122 = vsel %vm90, %v1108, %v1110
  %v1123 = vsel %vm90, %v1110, %v1112
  %v1124 = vsel %vm90, %v1112, %v1114
  %v1137 = vmax.f32 %v1067, %v1115
  %v1138 = vmax.f32 %v1068, %v1116
  %v1139 = vmax.f32 %v1069, %v1117
  %v1140 = vmax.f32 %v1070, %v1118
  %v1141 = vmax.f32 %v1071, %v1119
  %v1142 = vmax.f32 %v1072, %v1102
  %v1143 = vmax.f32 %v1073, %v1120
  %v1144 = vmax.f32 %v1074, %v1121
  %v1145 = vmax.f32 %v1075, %v1122
  %v1146 = vmax.f32 %v1076, %v1123
  %v1147 = vmax.f32 %v1077, %v1124
  %v1148 = vmax.f32 %v1078, %v1114
  %1161 = vrot.lane.b32.xlu0 %v1137, 110
  %v1162 = vpop.permute.xlu0 %1161
  %1163 = vrot.lane.b32.xlu0 %v1138, 110
  %v1164 = vpop.permute.xlu0 %1163
  %1165 = vrot.lane.b32.xlu0 %v1139, 110
  %v1166 = vpop.permute.xlu0 %1165
  %1167 = vrot.lane.b32.xlu0 %v1140, 110
  %v1168 = vpop.permute.xlu0 %1167
  %1169 = vrot.lane.b32.xlu0 %v1141, 110
  %v1170 = vpop.permute.xlu0 %1169
  %1171 = vrot.lane.b32.xlu0 %v1142, 110
  %v1172 = vpop.permute.xlu0 %1171
  %1173 = vrot.lane.b32.xlu0 %v1143, 110
  %v1174 = vpop.permute.xlu0 %1173
  %1175 = vrot.lane.b32.xlu0 %v1144, 110
  %v1176 = vpop.permute.xlu0 %1175
  %1177 = vrot.lane.b32.xlu0 %v1145, 110
  %v1178 = vpop.permute.xlu0 %1177
  %1179 = vrot.lane.b32.xlu0 %v1146, 110
  %v1180 = vpop.permute.xlu0 %1179
  %1181 = vrot.lane.b32.xlu0 %v1147, 110
  %v1182 = vpop.permute.xlu0 %1181
  %1183 = vrot.lane.b32.xlu0 %v1148, 110
  %v1184 = vpop.permute.xlu0 %1183
  %v1185 = vsel %vm138, %v1162, %v1164
  %v1186 = vsel %vm138, %v1164, %v1166
  %v1187 = vsel %vm138, %v1166, %v1168
  %v1188 = vsel %vm138, %v1168, %v1170
  %v1189 = vsel %vm138, %v1170, %v1172
  %v1190 = vsel %vm138, %v1174, %v1176
  %v1191 = vsel %vm138, %v1176, %v1178
  %v1192 = vsel %vm138, %v1178, %v1180
  %v1193 = vsel %vm138, %v1180, %v1182
  %v1194 = vsel %vm138, %v1182, %v1184
  %v1207 = vmax.f32 %v1137, %v1185
  %v1208 = vmax.f32 %v1138, %v1186
  %v1209 = vmax.f32 %v1139, %v1187
  %v1210 = vmax.f32 %v1140, %v1188
  %v1211 = vmax.f32 %v1141, %v1189
  %v1212 = vmax.f32 %v1142, %v1172
  %v1213 = vmax.f32 %v1143, %v1190
  %v1214 = vmax.f32 %v1144, %v1191
  %v1215 = vmax.f32 %v1145, %v1192
  %v1216 = vmax.f32 %v1146, %v1193
  %v1217 = vmax.f32 %v1147, %v1194
  %v1218 = vmax.f32 %v1148, %v1184
  %v1219 = vld [vmem:[%s9] sm:$0xff]
  %v1220 = vld [vmem:[%s9 + $0x8] sm:$0xff]
  %v1221 = vld [vmem:[%s9 + $0x10] sm:$0xff]
  %v1222 = vld [vmem:[%s9 + $0x18] sm:$0xff]
  %v1223 = vld [vmem:[%s9 + $0x20] sm:$0xff]
  %v1224 = vld [vmem:[%s9 + $0x28] sm:$0xff]
  %v1225 = vld [vmem:[%s9 + $0x30] sm:$0xff]
  %v1226 = vld [vmem:[%s9 + $0x38] sm:$0xff]
  %v1227 = vld [vmem:[%s9 + $0x40] sm:$0xff]
  %v1228 = vld [vmem:[%s9 + $0x48] sm:$0xff]
  %v1229 = vld [vmem:[%s9 + $0x50] sm:$0xff]
  %v1230 = vld [vmem:[%s9 + $0x58] sm:$0xff]
  %v1231 = vld [vmem:[%s9 + $0x60] sm:$0xff]
  %v1232 = vld [vmem:[%s9 + $0x68] sm:$0xff]
  %v1233 = vld [vmem:[%s9 + $0x70] sm:$0xff]
  %v1234 = vld [vmem:[%s9 + $0x78] sm:$0xff]
  %v1235 = vld [vmem:[%s9 + $0x80] sm:$0xff]
  %v1236 = vld [vmem:[%s9 + $0x88] sm:$0xff]
  %v1237 = vld [vmem:[%s9 + $0x90] sm:$0xff]
  %v1238 = vld [vmem:[%s9 + $0x98] sm:$0xff]
  %v1239 = vld [vmem:[%s9 + $0xa0] sm:$0xff]
  %v1240 = vld [vmem:[%s9 + $0xa8] sm:$0xff]
  %v1241 = vld [vmem:[%s9 + $0xb0] sm:$0xff]
  %v1242 = vld [vmem:[%s9 + $0xb8] sm:$0xff]
  %v1243 = vld [vmem:[%s9 + $0xc0] sm:$0xff]
  %v1244 = vld [vmem:[%s9 + $0xc8] sm:$0xff]
  %v1245 = vld [vmem:[%s9 + $0xd0] sm:$0xff]
  %v1246 = vld [vmem:[%s9 + $0xd8] sm:$0xff]
  %v1247 = vld [vmem:[%s9 + $0xe0] sm:$0xff]
  %v1248 = vld [vmem:[%s9 + $0xe8] sm:$0xff]
  %v1249 = vld [vmem:[%s9 + $0xf0] sm:$0xff]
  %v1250 = vld [vmem:[%s9 + $0xf8] sm:$0xff]
  %v1251 = vld [vmem:[%s9 + $0x100] sm:$0xff]
  %v1252 = vld [vmem:[%s9 + $0x108] sm:$0xff]
  %v1253 = vld [vmem:[%s9 + $0x110] sm:$0xff]
  %v1254 = vld [vmem:[%s9 + $0x118] sm:$0xff]
  %v1255 = vld [vmem:[%s9 + $0x120] sm:$0xff]
  %v1256 = vld [vmem:[%s9 + $0x128] sm:$0xff]
  %v1257 = vld [vmem:[%s9 + $0x130] sm:$0xff]
  %v1258 = vld [vmem:[%s9 + $0x138] sm:$0xff]
  %v1259 = vld [vmem:[%s9 + $0x140] sm:$0xff]
  %v1260 = vld [vmem:[%s9 + $0x148] sm:$0xff]
  %v1261 = vld [vmem:[%s9 + $0x150] sm:$0xff]
  %v1262 = vld [vmem:[%s9 + $0x158] sm:$0xff]
  %v1263 = vld [vmem:[%s9 + $0x160] sm:$0xff]
  %v1264 = vld [vmem:[%s9 + $0x168] sm:$0xff]
  %v1265 = vld [vmem:[%s9 + $0x170] sm:$0xff]
  %v1266 = vld [vmem:[%s9 + $0x178] sm:$0xff]
  %v1267 = vld [vmem:[%s9 + $0x180] sm:$0xff]
  %v1268 = vld [vmem:[%s9 + $0x188] sm:$0xff]
  %v1269 = vld [vmem:[%s9 + $0x190] sm:$0xff]
  %v1270 = vld [vmem:[%s9 + $0x198] sm:$0xff]
  %v1271 = vld [vmem:[%s9 + $0x1a0] sm:$0xff]
  %v1272 = vld [vmem:[%s9 + $0x1a8] sm:$0xff]
  %v1273 = vld [vmem:[%s9 + $0x1b0] sm:$0xff]
  %v1274 = vld [vmem:[%s9 + $0x1b8] sm:$0xff]
  %v1275 = vld [vmem:[%s9 + $0x1c0] sm:$0xff]
  %v1276 = vld [vmem:[%s9 + $0x1c8] sm:$0xff]
  %v1277 = vld [vmem:[%s9 + $0x1d0] sm:$0xff]
  %v1278 = vld [vmem:[%s9 + $0x1d8] sm:$0xff]
  %v1279 = vld [vmem:[%s9 + $0x1e0] sm:$0xff]
  %v1280 = vld [vmem:[%s9 + $0x1e8] sm:$0xff]
  %v1281 = vld [vmem:[%s9 + $0x1f0] sm:$0xff]
  %v1282 = vld [vmem:[%s9 + $0x1f8] sm:$0xff]
  %v1283 = vld [vmem:[%s9 + $0x200] sm:$0xff]
  %v1284 = vld [vmem:[%s9 + $0x208] sm:$0xff]
  %v1285 = vld [vmem:[%s9 + $0x210] sm:$0xff]
  %v1286 = vld [vmem:[%s9 + $0x218] sm:$0xff]
  %v1287 = vld [vmem:[%s9 + $0x220] sm:$0xff]
  %v1288 = vld [vmem:[%s9 + $0x228] sm:$0xff]
  %v1289 = vld [vmem:[%s9 + $0x230] sm:$0xff]
  %v1290 = vld [vmem:[%s9 + $0x238] sm:$0xff]
  %v1291 = vld [vmem:[%s9 + $0x240] sm:$0xff]
  %v1292 = vld [vmem:[%s9 + $0x248] sm:$0xff]
  %v1293 = vld [vmem:[%s9 + $0x250] sm:$0xff]
  %v1294 = vld [vmem:[%s9 + $0x258] sm:$0xff]
  %v1295 = vld [vmem:[%s9 + $0x260] sm:$0xff]
  %v1296 = vld [vmem:[%s9 + $0x268] sm:$0xff]
  %v1297 = vld [vmem:[%s9 + $0x270] sm:$0xff]
  %v1298 = vld [vmem:[%s9 + $0x278] sm:$0xff]
  %v1299 = vld [vmem:[%s9 + $0x280] sm:$0xff]
  %v1300 = vld [vmem:[%s9 + $0x288] sm:$0xff]
  %v1301 = vld [vmem:[%s9 + $0x290] sm:$0xff]
  %v1302 = vld [vmem:[%s9 + $0x298] sm:$0xff]
  %v1303 = vld [vmem:[%s9 + $0x2a0] sm:$0xff]
  %v1304 = vld [vmem:[%s9 + $0x2a8] sm:$0xff]
  %v1305 = vld [vmem:[%s9 + $0x2b0] sm:$0xff]
  %v1306 = vld [vmem:[%s9 + $0x2b8] sm:$0xff]
  %v1307 = vld [vmem:[%s9 + $0x2c0] sm:$0xff]
  %v1308 = vld [vmem:[%s9 + $0x2c8] sm:$0xff]
  %v1309 = vld [vmem:[%s9 + $0x2d0] sm:$0xff]
  %v1310 = vld [vmem:[%s9 + $0x2d8] sm:$0xff]
  %v1311 = vld [vmem:[%s9 + $0x2e0] sm:$0xff]
  %v1312 = vld [vmem:[%s9 + $0x2e8] sm:$0xff]
  %v1313 = vld [vmem:[%s9 + $0x2f0] sm:$0xff]
  %v1314 = vld [vmem:[%s9 + $0x2f8] sm:$0xff]
  %v1315 = vld [vmem:[%s9 + $0x300] sm:$0xff]
  %v1316 = vld [vmem:[%s9 + $0x308] sm:$0xff]
  %v1317 = vld [vmem:[%s9 + $0x310] sm:$0xff]
  %v1318 = vld [vmem:[%s9 + $0x318] sm:$0xff]
  %v1319 = vld [vmem:[%s9 + $0x320] sm:$0xff]
  %v1320 = vld [vmem:[%s9 + $0x328] sm:$0xff]
  %v1321 = vld [vmem:[%s9 + $0x330] sm:$0xff]
  %v1322 = vld [vmem:[%s9 + $0x338] sm:$0xff]
  %v1323 = vld [vmem:[%s9 + $0x340] sm:$0xff]
  %v1324 = vld [vmem:[%s9 + $0x348] sm:$0xff]
  %v1325 = vld [vmem:[%s9 + $0x350] sm:$0xff]
  %v1326 = vld [vmem:[%s9 + $0x358] sm:$0xff]
  %v1327 = vld [vmem:[%s9 + $0x360] sm:$0xff]
  %v1328 = vld [vmem:[%s9 + $0x368] sm:$0xff]
  %v1329 = vld [vmem:[%s9 + $0x370] sm:$0xff]
  %v1330 = vld [vmem:[%s9 + $0x378] sm:$0xff]
  %v1331 = vld [vmem:[%s9 + $0x380] sm:$0xff]
  %v1332 = vld [vmem:[%s9 + $0x388] sm:$0xff]
  %v1333 = vld [vmem:[%s9 + $0x390] sm:$0xff]
  %v1334 = vld [vmem:[%s9 + $0x398] sm:$0xff]
  %v1335 = vld [vmem:[%s9 + $0x3a0] sm:$0xff]
  %v1336 = vld [vmem:[%s9 + $0x3a8] sm:$0xff]
  %v1337 = vld [vmem:[%s9 + $0x3b0] sm:$0xff]
  %v1338 = vld [vmem:[%s9 + $0x3b8] sm:$0xff]
  %v1339 = vld [vmem:[%s9 + $0x3c0] sm:$0xff]
  %v1340 = vld [vmem:[%s9 + $0x3c8] sm:$0xff]
  %v1341 = vld [vmem:[%s9 + $0x3d0] sm:$0xff]
  %v1342 = vld [vmem:[%s9 + $0x3d8] sm:$0xff]
  %v1343 = vld [vmem:[%s9 + $0x3e0] sm:$0xff]
  %v1344 = vld [vmem:[%s9 + $0x3e8] sm:$0xff]
  %v1345 = vld [vmem:[%s9 + $0x3f0] sm:$0xff]
  %v1346 = vld [vmem:[%s9 + $0x3f8] sm:$0xff]
  %v1347 = vld [vmem:[%s9 + $0x400] sm:$0xff]
  %v1348 = vld [vmem:[%s9 + $0x408] sm:$0xff]
  %v1349 = vld [vmem:[%s9 + $0x410] sm:$0xff]
  %v1350 = vld [vmem:[%s9 + $0x418] sm:$0xff]
  %v1351 = vld [vmem:[%s9 + $0x420] sm:$0xff]
  %v1352 = vld [vmem:[%s9 + $0x428] sm:$0xff]
  %v1353 = vld [vmem:[%s9 + $0x430] sm:$0xff]
  %v1354 = vld [vmem:[%s9 + $0x438] sm:$0xff]
  %v1355 = vld [vmem:[%s9 + $0x440] sm:$0xff]
  %v1356 = vld [vmem:[%s9 + $0x448] sm:$0xff]
  %v1357 = vld [vmem:[%s9 + $0x450] sm:$0xff]
  %v1358 = vld [vmem:[%s9 + $0x458] sm:$0xff]
  %v1359 = vld [vmem:[%s9 + $0x460] sm:$0xff]
  %v1360 = vld [vmem:[%s9 + $0x468] sm:$0xff]
  %v1361 = vld [vmem:[%s9 + $0x470] sm:$0xff]
  %v1362 = vld [vmem:[%s9 + $0x478] sm:$0xff]
  %v1363 = vld [vmem:[%s9 + $0x480] sm:$0xff]
  %v1364 = vld [vmem:[%s9 + $0x488] sm:$0xff]
  %v1365 = vld [vmem:[%s9 + $0x490] sm:$0xff]
  %v1366 = vld [vmem:[%s9 + $0x498] sm:$0xff]
  %v1367 = vld [vmem:[%s9 + $0x4a0] sm:$0xff]
  %v1368 = vld [vmem:[%s9 + $0x4a8] sm:$0xff]
  %v1369 = vld [vmem:[%s9 + $0x4b0] sm:$0xff]
  %v1370 = vld [vmem:[%s9 + $0x4b8] sm:$0xff]
  %v1371 = vld [vmem:[%s9 + $0x4c0] sm:$0xff]
  %v1372 = vld [vmem:[%s9 + $0x4c8] sm:$0xff]
  %v1373 = vld [vmem:[%s9 + $0x4d0] sm:$0xff]
  %v1374 = vld [vmem:[%s9 + $0x4d8] sm:$0xff]
  %v1375 = vld [vmem:[%s9 + $0x4e0] sm:$0xff]
  %v1376 = vld [vmem:[%s9 + $0x4e8] sm:$0xff]
  %v1377 = vld [vmem:[%s9 + $0x4f0] sm:$0xff]
  %v1378 = vld [vmem:[%s9 + $0x4f8] sm:$0xff]
  %v1379 = vld [vmem:[%s9 + $0x500] sm:$0xff]
  %v1380 = vld [vmem:[%s9 + $0x508] sm:$0xff]
  %v1381 = vld [vmem:[%s9 + $0x510] sm:$0xff]
  %v1382 = vld [vmem:[%s9 + $0x518] sm:$0xff]
  %v1383 = vld [vmem:[%s9 + $0x520] sm:$0xff]
  %v1384 = vld [vmem:[%s9 + $0x528] sm:$0xff]
  %v1385 = vld [vmem:[%s9 + $0x530] sm:$0xff]
  %v1386 = vld [vmem:[%s9 + $0x538] sm:$0xff]
  %v1387 = vld [vmem:[%s9 + $0x540] sm:$0xff]
  %v1388 = vld [vmem:[%s9 + $0x548] sm:$0xff]
  %v1389 = vld [vmem:[%s9 + $0x550] sm:$0xff]
  %v1390 = vld [vmem:[%s9 + $0x558] sm:$0xff]
  %v1391 = vld [vmem:[%s9 + $0x560] sm:$0xff]
  %v1392 = vld [vmem:[%s9 + $0x568] sm:$0xff]
  %v1393 = vld [vmem:[%s9 + $0x570] sm:$0xff]
  %v1394 = vld [vmem:[%s9 + $0x578] sm:$0xff]
  %v1395 = vld [vmem:[%s9 + $0x580] sm:$0xff]
  %v1396 = vld [vmem:[%s9 + $0x588] sm:$0xff]
  %v1397 = vld [vmem:[%s9 + $0x590] sm:$0xff]
  %v1398 = vld [vmem:[%s9 + $0x598] sm:$0xff]
  %v1399 = vld [vmem:[%s9 + $0x5a0] sm:$0xff]
  %v1400 = vld [vmem:[%s9 + $0x5a8] sm:$0xff]
  %v1401 = vld [vmem:[%s9 + $0x5b0] sm:$0xff]
  %v1402 = vld [vmem:[%s9 + $0x5b8] sm:$0xff]
  %v1403 = vld [vmem:[%s9 + $0x5c0] sm:$0xff]
  %v1404 = vld [vmem:[%s9 + $0x5c8] sm:$0xff]
  %v1405 = vld [vmem:[%s9 + $0x5d0] sm:$0x1f]
  %v1406 = vld [vmem:[%s9 + $0x5d8] sm:$0x1f]
  %v1408 = vsel %vm162, %v1212, 0
  %v1411 = vsel %vm162, %v1218, 0
  %vm1413 = vcmask 1044480
  %v1415 = vsel %vm1413, %v1405, 0
  %v1418 = vsel %vm1413, %v1406, 0
  %1420 = vmatpush.msra.mxu0 %v1249
  %1421 = vmatpush.msra.mxu0 %v1247
  %1422 = vmatpush.msra.mxu0 %v1245
  %1423 = vmatpush.msra.mxu0 %v1243
  %1424 = vmatpush.msra.mxu0 %v1241
  %1425 = vmatpush.msra.mxu0 %v1239
  %1426 = vmatpush.msra.mxu0 %v1237
  %1427 = vmatpush.msra.mxu0 %v1235
  %1428 = vmatpush.msra.mxu0 %v1233
  %1429 = vmatpush.msra.mxu0 %v1231
  %1430 = vmatpush.msra.mxu0 %v1229
  %1431 = vmatpush.msra.mxu0 %v1227
  %1432 = vmatpush.msra.mxu0 %v1225
  %1433 = vmatpush.msra.mxu0 %v1223
  %1434 = vmatpush.msra.mxu0 %v1221
  %1435 = vmatpush.msra.mxu0 %v1219
  %1436 = vmatmul.f32.gmra.mxu0 %v1207
  %v1437 = vpop.f32.mrf.mxu0
  %v1438 = vadd.f32 0.0, %v1437
  %1439 = vmatmul.f32.gmra.mxu0 %v1213
  %v1440 = vpop.f32.mrf.mxu0
  %v1441 = vadd.f32 0.0, %v1440
  %1442 = vdwg.mxu0
  %1443 = vmatpush.msra.mxu0 %v1281
  %1444 = vmatpush.msra.mxu0 %v1279
  %1445 = vmatpush.msra.mxu0 %v1277
  %1446 = vmatpush.msra.mxu0 %v1275
  %1447 = vmatpush.msra.mxu0 %v1273
  %1448 = vmatpush.msra.mxu0 %v1271
  %1449 = vmatpush.msra.mxu0 %v1269
  %1450 = vmatpush.msra.mxu0 %v1267
  %1451 = vmatpush.msra.mxu0 %v1265
  %1452 = vmatpush.msra.mxu0 %v1263
  %1453 = vmatpush.msra.mxu0 %v1261
  %1454 = vmatpush.msra.mxu0 %v1259
  %1455 = vmatpush.msra.mxu0 %v1257
  %1456 = vmatpush.msra.mxu0 %v1255
  %1457 = vmatpush.msra.mxu0 %v1253
  %1458 = vmatpush.msra.mxu0 %v1251
  %1459 = vmatmul.f32.gmra.mxu0 %v1208
  %v1460 = vpop.f32.mrf.mxu0
  %v1461 = vadd.f32 %v1438, %v1460
  %1462 = vmatmul.f32.gmra.mxu0 %v1214
  %v1463 = vpop.f32.mrf.mxu0
  %v1464 = vadd.f32 %v1441, %v1463
  %1465 = vdwg.mxu0
  %1466 = vmatpush.msra.mxu0 %v1313
  %1467 = vmatpush.msra.mxu0 %v1311
  %1468 = vmatpush.msra.mxu0 %v1309
  %1469 = vmatpush.msra.mxu0 %v1307
  %1470 = vmatpush.msra.mxu0 %v1305
  %1471 = vmatpush.msra.mxu0 %v1303
  %1472 = vmatpush.msra.mxu0 %v1301
  %1473 = vmatpush.msra.mxu0 %v1299
  %1474 = vmatpush.msra.mxu0 %v1297
  %1475 = vmatpush.msra.mxu0 %v1295
  %1476 = vmatpush.msra.mxu0 %v1293
  %1477 = vmatpush.msra.mxu0 %v1291
  %1478 = vmatpush.msra.mxu0 %v1289
  %1479 = vmatpush.msra.mxu0 %v1287
  %1480 = vmatpush.msra.mxu0 %v1285
  %1481 = vmatpush.msra.mxu0 %v1283
  %1482 = vmatmul.f32.gmra.mxu0 %v1209
  %v1483 = vpop.f32.mrf.mxu0
  %v1484 = vadd.f32 %v1461, %v1483
  %1485 = vmatmul.f32.gmra.mxu0 %v1215
  %v1486 = vpop.f32.mrf.mxu0
  %v1487 = vadd.f32 %v1464, %v1486
  %1488 = vdwg.mxu0
  %1489 = vmatpush.msra.mxu0 %v1345
  %1490 = vmatpush.msra.mxu0 %v1343
  %1491 = vmatpush.msra.mxu0 %v1341
  %1492 = vmatpush.msra.mxu0 %v1339
  %1493 = vmatpush.msra.mxu0 %v1337
  %1494 = vmatpush.msra.mxu0 %v1335
  %1495 = vmatpush.msra.mxu0 %v1333
  %1496 = vmatpush.msra.mxu0 %v1331
  %1497 = vmatpush.msra.mxu0 %v1329
  %1498 = vmatpush.msra.mxu0 %v1327
  %1499 = vmatpush.msra.mxu0 %v1325
  %1500 = vmatpush.msra.mxu0 %v1323
  %1501 = vmatpush.msra.mxu0 %v1321
  %1502 = vmatpush.msra.mxu0 %v1319
  %1503 = vmatpush.msra.mxu0 %v1317
  %1504 = vmatpush.msra.mxu0 %v1315
  %1505 = vmatmul.f32.gmra.mxu0 %v1210
  %v1506 = vpop.f32.mrf.mxu0
  %v1507 = vadd.f32 %v1484, %v1506
  %1508 = vmatmul.f32.gmra.mxu0 %v1216
  %v1509 = vpop.f32.mrf.mxu0
  %v1510 = vadd.f32 %v1487, %v1509
  %1511 = vdwg.mxu0
  %1512 = vmatpush.msra.mxu0 %v1377
  %1513 = vmatpush.msra.mxu0 %v1375
  %1514 = vmatpush.msra.mxu0 %v1373
  %1515 = vmatpush.msra.mxu0 %v1371
  %1516 = vmatpush.msra.mxu0 %v1369
  %1517 = vmatpush.msra.mxu0 %v1367
  %1518 = vmatpush.msra.mxu0 %v1365
  %1519 = vmatpush.msra.mxu0 %v1363
  %1520 = vmatpush.msra.mxu0 %v1361
  %1521 = vmatpush.msra.mxu0 %v1359
  %1522 = vmatpush.msra.mxu0 %v1357
  %1523 = vmatpush.msra.mxu0 %v1355
  %1524 = vmatpush.msra.mxu0 %v1353
  %1525 = vmatpush.msra.mxu0 %v1351
  %1526 = vmatpush.msra.mxu0 %v1349
  %1527 = vmatpush.msra.mxu0 %v1347
  %1528 = vmatmul.f32.gmra.mxu0 %v1211
  %v1529 = vpop.f32.mrf.mxu0
  %v1530 = vadd.f32 %v1507, %v1529
  %1531 = vmatmul.f32.gmra.mxu0 %v1217
  %v1532 = vpop.f32.mrf.mxu0
  %v1533 = vadd.f32 %v1510, %v1532
  %1534 = vdwg.mxu0
  %1535 = vmatpush.msra.mxu0 0.0
  %1536 = vmatpush.msra.mxu0 0.0
  %1537 = vmatpush.msra.mxu0 %v1415
  %1538 = vmatpush.msra.mxu0 %v1403
  %1539 = vmatpush.msra.mxu0 %v1401
  %1540 = vmatpush.msra.mxu0 %v1399
  %1541 = vmatpush.msra.mxu0 %v1397
  %1542 = vmatpush.msra.mxu0 %v1395
  %1543 = vmatpush.msra.mxu0 %v1393
  %1544 = vmatpush.msra.mxu0 %v1391
  %1545 = vmatpush.msra.mxu0 %v1389
  %1546 = vmatpush.msra.mxu0 %v1387
  %1547 = vmatpush.msra.mxu0 %v1385
  %1548 = vmatpush.msra.mxu0 %v1383
  %1549 = vmatpush.msra.mxu0 %v1381
  %1550 = vmatpush.msra.mxu0 %v1379
  %1551 = vmatmul.f32.gmra.mxu0 %v1408
  %v1552 = vpop.f32.mrf.mxu0
  %v1553 = vadd.f32 %v1530, %v1552
  %1554 = vmatmul.f32.gmra.mxu0 %v1411
  %v1555 = vpop.f32.mrf.mxu0
  %v1556 = vadd.f32 %v1533, %v1555
  %1557 = vdwg.mxu0
  %1558 = vmatpush.msra.mxu0 %v1250
  %1559 = vmatpush.msra.mxu0 %v1248
  %1560 = vmatpush.msra.mxu0 %v1246
  %1561 = vmatpush.msra.mxu0 %v1244
  %1562 = vmatpush.msra.mxu0 %v1242
  %1563 = vmatpush.msra.mxu0 %v1240
  %1564 = vmatpush.msra.mxu0 %v1238
  %1565 = vmatpush.msra.mxu0 %v1236
  %1566 = vmatpush.msra.mxu0 %v1234
  %1567 = vmatpush.msra.mxu0 %v1232
  %1568 = vmatpush.msra.mxu0 %v1230
  %1569 = vmatpush.msra.mxu0 %v1228
  %1570 = vmatpush.msra.mxu0 %v1226
  %1571 = vmatpush.msra.mxu0 %v1224
  %1572 = vmatpush.msra.mxu0 %v1222
  %1573 = vmatpush.msra.mxu0 %v1220
  %1574 = vmatmul.f32.gmra.mxu0 %v1207
  %v1575 = vpop.f32.mrf.mxu0
  %v1576 = vadd.f32 0.0, %v1575
  %1577 = vmatmul.f32.gmra.mxu0 %v1213
  %v1578 = vpop.f32.mrf.mxu0
  %v1579 = vadd.f32 0.0, %v1578
  %1580 = vdwg.mxu0
  %1581 = vmatpush.msra.mxu0 %v1282
  %1582 = vmatpush.msra.mxu0 %v1280
  %1583 = vmatpush.msra.mxu0 %v1278
  %1584 = vmatpush.msra.mxu0 %v1276
  %1585 = vmatpush.msra.mxu0 %v1274
  %1586 = vmatpush.msra.mxu0 %v1272
  %1587 = vmatpush.msra.mxu0 %v1270
  %1588 = vmatpush.msra.mxu0 %v1268
  %1589 = vmatpush.msra.mxu0 %v1266
  %1590 = vmatpush.msra.mxu0 %v1264
  %1591 = vmatpush.msra.mxu0 %v1262
  %1592 = vmatpush.msra.mxu0 %v1260
  %1593 = vmatpush.msra.mxu0 %v1258
  %1594 = vmatpush.msra.mxu0 %v1256
  %1595 = vmatpush.msra.mxu0 %v1254
  %1596 = vmatpush.msra.mxu0 %v1252
  %1597 = vmatmul.f32.gmra.mxu0 %v1208
  %v1598 = vpop.f32.mrf.mxu0
  %v1599 = vadd.f32 %v1576, %v1598
  %1600 = vmatmul.f32.gmra.mxu0 %v1214
  %v1601 = vpop.f32.mrf.mxu0
  %v1602 = vadd.f32 %v1579, %v1601
  %1603 = vdwg.mxu0
  %1604 = vmatpush.msra.mxu0 %v1314
  %1605 = vmatpush.msra.mxu0 %v1312
  %1606 = vmatpush.msra.mxu0 %v1310
  %1607 = vmatpush.msra.mxu0 %v1308
  %1608 = vmatpush.msra.mxu0 %v1306
  %1609 = vmatpush.msra.mxu0 %v1304
  %1610 = vmatpush.msra.mxu0 %v1302
  %1611 = vmatpush.msra.mxu0 %v1300
  %1612 = vmatpush.msra.mxu0 %v1298
  %1613 = vmatpush.msra.mxu0 %v1296
  %1614 = vmatpush.msra.mxu0 %v1294
  %1615 = vmatpush.msra.mxu0 %v1292
  %1616 = vmatpush.msra.mxu0 %v1290
  %1617 = vmatpush.msra.mxu0 %v1288
  %1618 = vmatpush.msra.mxu0 %v1286
  %1619 = vmatpush.msra.mxu0 %v1284
  %1620 = vmatmul.f32.gmra.mxu0 %v1209
  %v1621 = vpop.f32.mrf.mxu0
  %v1622 = vadd.f32 %v1599, %v1621
  %1623 = vmatmul.f32.gmra.mxu0 %v1215
  %v1624 = vpop.f32.mrf.mxu0
  %v1625 = vadd.f32 %v1602, %v1624
  %1626 = vdwg.mxu0
  %1627 = vmatpush.msra.mxu0 %v1346
  %1628 = vmatpush.msra.mxu0 %v1344
  %1629 = vmatpush.msra.mxu0 %v1342
  %1630 = vmatpush.msra.mxu0 %v1340
  %1631 = vmatpush.msra.mxu0 %v1338
  %1632 = vmatpush.msra.mxu0 %v1336
  %1633 = vmatpush.msra.mxu0 %v1334
  %1634 = vmatpush.msra.mxu0 %v1332
  %1635 = vmatpush.msra.mxu0 %v1330
  %1636 = vmatpush.msra.mxu0 %v1328
  %1637 = vmatpush.msra.mxu0 %v1326
  %1638 = vmatpush.msra.mxu0 %v1324
  %1639 = vmatpush.msra.mxu0 %v1322
  %1640 = vmatpush.msra.mxu0 %v1320
  %1641 = vmatpush.msra.mxu0 %v1318
  %1642 = vmatpush.msra.mxu0 %v1316
  %1643 = vmatmul.f32.gmra.mxu0 %v1210
  %v1644 = vpop.f32.mrf.mxu0
  %v1645 = vadd.f32 %v1622, %v1644
  %1646 = vmatmul.f32.gmra.mxu0 %v1216
  %v1647 = vpop.f32.mrf.mxu0
  %v1648 = vadd.f32 %v1625, %v1647
  %1649 = vdwg.mxu0
  %1650 = vmatpush.msra.mxu0 %v1378
  %1651 = vmatpush.msra.mxu0 %v1376
  %1652 = vmatpush.msra.mxu0 %v1374
  %1653 = vmatpush.msra.mxu0 %v1372
  %1654 = vmatpush.msra.mxu0 %v1370
  %1655 = vmatpush.msra.mxu0 %v1368
  %1656 = vmatpush.msra.mxu0 %v1366
  %1657 = vmatpush.msra.mxu0 %v1364
  %1658 = vmatpush.msra.mxu0 %v1362
  %1659 = vmatpush.msra.mxu0 %v1360
  %1660 = vmatpush.msra.mxu0 %v1358
  %1661 = vmatpush.msra.mxu0 %v1356
  %1662 = vmatpush.msra.mxu0 %v1354
  %1663 = vmatpush.msra.mxu0 %v1352
  %1664 = vmatpush.msra.mxu0 %v1350
  %1665 = vmatpush.msra.mxu0 %v1348
  %1666 = vmatmul.f32.gmra.mxu0 %v1211
  %v1667 = vpop.f32.mrf.mxu0
  %v1668 = vadd.f32 %v1645, %v1667
  %1669 = vmatmul.f32.gmra.mxu0 %v1217
  %v1670 = vpop.f32.mrf.mxu0
  %v1671 = vadd.f32 %v1648, %v1670
  %1672 = vdwg.mxu0
  %1673 = vmatpush.msra.mxu0 0.0
  %1674 = vmatpush.msra.mxu0 0.0
  %1675 = vmatpush.msra.mxu0 %v1418
  %1676 = vmatpush.msra.mxu0 %v1404
  %1677 = vmatpush.msra.mxu0 %v1402
  %1678 = vmatpush.msra.mxu0 %v1400
  %1679 = vmatpush.msra.mxu0 %v1398
  %1680 = vmatpush.msra.mxu0 %v1396
  %1681 = vmatpush.msra.mxu0 %v1394
  %1682 = vmatpush.msra.mxu0 %v1392
  %1683 = vmatpush.msra.mxu0 %v1390
  %1684 = vmatpush.msra.mxu0 %v1388
  %1685 = vmatpush.msra.mxu0 %v1386
  %1686 = vmatpush.msra.mxu0 %v1384
  %1687 = vmatpush.msra.mxu0 %v1382
  %1688 = vmatpush.msra.mxu0 %v1380
  %1689 = vmatmul.f32.gmra.mxu0 %v1408
  %v1690 = vpop.f32.mrf.mxu0
  %v1691 = vadd.f32 %v1668, %v1690
  %1692 = vmatmul.f32.gmra.mxu0 %v1411
  %v1693 = vpop.f32.mrf.mxu0
  %v1694 = vadd.f32 %v1671, %v1693
  %1695 = vdwg.mxu0
  %1696 = vst [vmem:[#allocation3] sm:$0xff] %v1553
  %1697 = vst [vmem:[#allocation3 + $0x8] sm:$0xff] %v1691
  %1698 = vst [vmem:[#allocation3 + $0x10] sm:$0xff] %v1556
  %1699 = vst [vmem:[#allocation3 + $0x18] sm:$0xff] %v1694
  %v1700 = vld [vmem:[#allocation3] sm:$0xff]
  %v1701 = vld [vmem:[#allocation3 + $0x8] sm:$0xff]
  %v1702 = vld [vmem:[#allocation3 + $0x10] sm:$0xff]
  %v1703 = vld [vmem:[#allocation3 + $0x18] sm:$0xff]
  %1708 = vrot.lane.b32.xlu0 %v1700, 127
  %v1709 = vpop.permute.xlu0 %1708
  %1710 = vrot.lane.b32.xlu0 %v1701, 127
  %v1711 = vpop.permute.xlu0 %1710
  %1712 = vrot.lane.b32.xlu0 %v1702, 127
  %v1713 = vpop.permute.xlu0 %1712
  %1714 = vrot.lane.b32.xlu0 %v1703, 127
  %v1715 = vpop.permute.xlu0 %1714
  %v1716 = vsel %vm90, %v1709, %v1711
  %v1717 = vsel %vm90, %v1713, %v1715
  %1722 = vrot.lane.b32.xlu0 %v1700, 126
  %v1723 = vpop.permute.xlu0 %1722
  %1724 = vrot.lane.b32.xlu0 %v1701, 126
  %v1725 = vpop.permute.xlu0 %1724
  %1726 = vrot.lane.b32.xlu0 %v1702, 126
  %v1727 = vpop.permute.xlu0 %1726
  %1728 = vrot.lane.b32.xlu0 %v1703, 126
  %v1729 = vpop.permute.xlu0 %1728
  %v1730 = vsel %vm114, %v1723, %v1725
  %v1731 = vsel %vm114, %v1727, %v1729
  %1736 = vrot.lane.b32.xlu0 %v1700, 118
  %v1737 = vpop.permute.xlu0 %1736
  %1738 = vrot.lane.b32.xlu0 %v1701, 118
  %v1739 = vpop.permute.xlu0 %1738
  %1740 = vrot.lane.b32.xlu0 %v1702, 118
  %v1741 = vpop.permute.xlu0 %1740
  %1742 = vrot.lane.b32.xlu0 %v1703, 118
  %v1743 = vpop.permute.xlu0 %1742
  %vm1744 = vcmask 965632
  %v1745 = vsel %vm1744, %v1737, %v1739
  %v1746 = vsel %vm1744, %v1741, %v1743
  %1751 = vrot.lane.b32.xlu0 %v1700, 117
  %v1752 = vpop.permute.xlu0 %1751
  %1753 = vrot.lane.b32.xlu0 %v1701, 117
  %v1754 = vpop.permute.xlu0 %1753
  %1755 = vrot.lane.b32.xlu0 %v1702, 117
  %v1756 = vpop.permute.xlu0 %1755
  %1757 = vrot.lane.b32.xlu0 %v1703, 117
  %v1758 = vpop.permute.xlu0 %1757
  %vm1759 = vcmask 957440
  %v1760 = vsel %vm1759, %v1752, %v1754
  %v1761 = vsel %vm1759, %v1756, %v1758
  %1766 = vrot.lane.b32.xlu0 %v1700, 116
  %v1767 = vpop.permute.xlu0 %1766
  %1768 = vrot.lane.b32.xlu0 %v1701, 116
  %v1769 = vpop.permute.xlu0 %1768
  %1770 = vrot.lane.b32.xlu0 %v1702, 116
  %v1771 = vpop.permute.xlu0 %1770
  %1772 = vrot.lane.b32.xlu0 %v1703, 116
  %v1773 = vpop.permute.xlu0 %1772
  %vm1774 = vcmask 949248
  %v1775 = vsel %vm1774, %v1767, %v1769
  %v1776 = vsel %vm1774, %v1771, %v1773
  %1781 = vrot.lane.b32.xlu0 %v1700, 108
  %v1782 = vpop.permute.xlu0 %1781
  %1783 = vrot.lane.b32.xlu0 %v1701, 108
  %v1784 = vpop.permute.xlu0 %1783
  %1785 = vrot.lane.b32.xlu0 %v1702, 108
  %v1786 = vpop.permute.xlu0 %1785
  %1787 = vrot.lane.b32.xlu0 %v1703, 108
  %v1788 = vpop.permute.xlu0 %1787
  %v1789 = vsel %vm186, %v1782, %v1784
  %v1790 = vsel %vm186, %v1786, %v1788
  %1795 = vrot.lane.b32.xlu0 %v1700, 107
  %v1796 = vpop.permute.xlu0 %1795
  %1797 = vrot.lane.b32.xlu0 %v1701, 107
  %v1798 = vpop.permute.xlu0 %1797
  %1799 = vrot.lane.b32.xlu0 %v1702, 107
  %v1800 = vpop.permute.xlu0 %1799
  %1801 = vrot.lane.b32.xlu0 %v1703, 107
  %v1802 = vpop.permute.xlu0 %1801
  %vm1803 = vcmask 875520
  %v1804 = vsel %vm1803, %v1796, %v1798
  %v1805 = vsel %vm1803, %v1800, %v1802
  %1810 = vrot.lane.b32.xlu0 %v1700, 106
  %v1811 = vpop.permute.xlu0 %1810
  %1812 = vrot.lane.b32.xlu0 %v1701, 106
  %v1813 = vpop.permute.xlu0 %1812
  %1814 = vrot.lane.b32.xlu0 %v1702, 106
  %v1815 = vpop.permute.xlu0 %1814
  %1816 = vrot.lane.b32.xlu0 %v1703, 106
  %v1817 = vpop.permute.xlu0 %1816
  %vm1818 = vcmask 867328
  %v1819 = vsel %vm1818, %v1811, %v1813
  %v1820 = vsel %vm1818, %v1815, %v1817
  %v1825 = vld [vmem:[%s1 + $0x60] sm:$0xff]
  %v1826 = vld [vmem:[%s1 + $0x68] sm:$0xff]
  %v1827 = vld [vmem:[%s1 + $0x78] sm:$0xff]
  %v1828 = vld [vmem:[%s1 + $0x80] sm:$0xff]
  %v1829 = vld [vmem:[%s2 + $0x20] sm:$0xff]
  %v1830 = vld [vmem:[%s2 + $0x28] sm:$0xff]
  %1832 = vset.pattern.permute.xlu0 0
  %1833 = vperm.xlu0 %1832, %v1829
  %v1834 = vpop.permute.xlu0 %1833
  %1837 = vset.pattern.permute.xlu0 0
  %1838 = vperm.xlu0 %1837, %v1830
  %v1839 = vpop.permute.xlu0 %1838
  %vm1841 = vcmask 130048
  %v1843 = vsel %vm1841, %v1826, 0
  %v1846 = vsel %vm1841, %v1828, 0
  %1848 = vmatpush.msra.mxu0 %v1805
  %1849 = vmatpush.msra.mxu0 %v1804
  %1850 = vmatpush.msra.mxu0 %v1790
  %1851 = vmatpush.msra.mxu0 %v1789
  %1852 = vmatpush.msra.mxu0 %v1776
  %1853 = vmatpush.msra.mxu0 %v1775
  %1854 = vmatpush.msra.mxu0 %v1761
  %1855 = vmatpush.msra.mxu0 %v1760
  %1856 = vmatpush.msra.mxu0 %v1746
  %1857 = vmatpush.msra.mxu0 %v1745
  %1858 = vmatpush.msra.mxu0 %v1731
  %1859 = vmatpush.msra.mxu0 %v1730
  %1860 = vmatpush.msra.mxu0 %v1717
  %1861 = vmatpush.msra.mxu0 %v1716
  %1862 = vmatpush.msra.mxu0 %v1702
  %1863 = vmatpush.msra.mxu0 %v1700
  %1864 = vmatmul.f32.gmra.mxu0 %v1825
  %v1865 = vpop.f32.mrf.mxu0
  %v1866 = vadd.f32 %v1834, %v1865
  %1867 = vmatmul.f32.gmra.mxu0 %v1827
  %v1868 = vpop.f32.mrf.mxu0
  %v1869 = vadd.f32 %v1839, %v1868
  %1870 = vdwg.mxu0
  %1871 = vmatpush.msra.mxu0 0.0
  %1872 = vmatpush.msra.mxu0 0.0
  %1873 = vmatpush.msra.mxu0 0.0
  %1874 = vmatpush.msra.mxu0 0.0
  %1875 = vmatpush.msra.mxu0 0.0
  %1876 = vmatpush.msra.mxu0 0.0
  %1877 = vmatpush.msra.mxu0 0.0
  %1878 = vmatpush.msra.mxu0 0.0
  %1879 = vmatpush.msra.mxu0 0.0
  %1880 = vmatpush.msra.mxu0 0.0
  %1881 = vmatpush.msra.mxu0 0.0
  %1882 = vmatpush.msra.mxu0 0.0
  %1883 = vmatpush.msra.mxu0 0.0
  %1884 = vmatpush.msra.mxu0 0.0
  %1885 = vmatpush.msra.mxu0 %v1820
  %1886 = vmatpush.msra.mxu0 %v1819
  %1887 = vmatmul.f32.gmra.mxu0 %v1843
  %v1888 = vpop.f32.mrf.mxu0
  %v1889 = vadd.f32 %v1866, %v1888
  %1890 = vmatmul.f32.gmra.mxu0 %v1846
  %v1891 = vpop.f32.mrf.mxu0
  %v1892 = vadd.f32 %v1869, %v1891
  %1893 = vdwg.mxu0
  %1894 = vmatpush.msra.mxu0 %v1802
  %1895 = vmatpush.msra.mxu0 %v1798
  %1896 = vmatpush.msra.mxu0 %v1788
  %1897 = vmatpush.msra.mxu0 %v1784
  %1898 = vmatpush.msra.mxu0 %v1773
  %1899 = vmatpush.msra.mxu0 %v1769
  %1900 = vmatpush.msra.mxu0 %v1758
  %1901 = vmatpush.msra.mxu0 %v1754
  %1902 = vmatpush.msra.mxu0 %v1743
  %1903 = vmatpush.msra.mxu0 %v1739
  %1904 = vmatpush.msra.mxu0 %v1729
  %1905 = vmatpush.msra.mxu0 %v1725
  %1906 = vmatpush.msra.mxu0 %v1715
  %1907 = vmatpush.msra.mxu0 %v1711
  %1908 = vmatpush.msra.mxu0 %v1703
  %1909 = vmatpush.msra.mxu0 %v1701
  %1910 = vmatmul.f32.gmra.mxu0 %v1825
  %v1911 = vpop.f32.mrf.mxu0
  %v1912 = vadd.f32 %v1834, %v1911
  %1913 = vmatmul.f32.gmra.mxu0 %v1827
  %v1914 = vpop.f32.mrf.mxu0
  %v1915 = vadd.f32 %v1839, %v1914
  %1916 = vdwg.mxu0
  %1917 = vmatpush.msra.mxu0 0.0
  %1918 = vmatpush.msra.mxu0 0.0
  %1919 = vmatpush.msra.mxu0 0.0
  %1920 = vmatpush.msra.mxu0 0.0
  %1921 = vmatpush.msra.mxu0 0.0
  %1922 = vmatpush.msra.mxu0 0.0
  %1923 = vmatpush.msra.mxu0 0.0
  %1924 = vmatpush.msra.mxu0 0.0
  %1925 = vmatpush.msra.mxu0 0.0
  %1926 = vmatpush.msra.mxu0 0.0
  %1927 = vmatpush.msra.mxu0 0.0
  %1928 = vmatpush.msra.mxu0 0.0
  %1929 = vmatpush.msra.mxu0 0.0
  %1930 = vmatpush.msra.mxu0 0.0
  %1931 = vmatpush.msra.mxu0 %v1817
  %1932 = vmatpush.msra.mxu0 %v1813
  %1933 = vmatmul.f32.gmra.mxu0 %v1843
  %v1934 = vpop.f32.mrf.mxu0
  %v1935 = vadd.f32 %v1912, %v1934
  %1936 = vmatmul.f32.gmra.mxu0 %v1846
  %v1937 = vpop.f32.mrf.mxu0
  %v1938 = vadd.f32 %v1915, %v1937
  %1939 = vdwg.mxu0
  %v1940 = vmax.f32 %v1889, 0.0
  %v1941 = vmax.f32 %v1935, 0.0
  %v1942 = vmax.f32 %v1892, 0.0
  %v1943 = vmax.f32 %v1938, 0.0
  %v1944 = vld [vmem:[%s4] sm:$0x3]
  %v1946 = vperm.slane %v1944, 0
  %v1947 = vperm.slane %v1944, 1
  %v1950 = vmul.f32 %v1940, %v1946
  %v1951 = vmul.f32 %v1941, %v1947
  %v1952 = vmul.f32 %v1942, %v1946
  %v1953 = vmul.f32 %v1943, %v1947
  %1958 = vrot.lane.b32.xlu0 %v1950, 11
  %v1959 = vpop.permute.xlu0 %1958
  %1960 = vrot.lane.b32.xlu0 %v1951, 11
  %v1961 = vpop.permute.xlu0 %1960
  %1962 = vrot.lane.b32.xlu0 %v1952, 11
  %v1963 = vpop.permute.xlu0 %1962
  %1964 = vrot.lane.b32.xlu0 %v1953, 11
  %v1965 = vpop.permute.xlu0 %1964
  %vm1966 = vcmask 89088
  %v1967 = vsel %vm1966, %v1959, %v1961
  %v1968 = vsel %vm1966, %v1963, %v1965
  %vm1973 = vcmask 1047640
  %1974 = vst.msk [vmem:[#allocation3] sm:$0xff] %vm1973, %v1959
  %vm1975 = vcmask 728064
  %1976 = vst.msk [vmem:[#allocation3 + $0x8] sm:$0xff] %vm1975, %v1967
  %1977 = vst.msk [vmem:[#allocation3 + $0x10] sm:$0xff] %vm1973, %v1963
  %1978 = vst.msk [vmem:[#allocation3 + $0x18] sm:$0xff] %vm1975, %v1968
  %v1979 = vld [vmem:[#allocation3] sm:$0xff]
  %v1980 = vld [vmem:[#allocation3 + $0x8] sm:$0xff]
  %v1981 = vld [vmem:[#allocation3 + $0x10] sm:$0xff]
  %v1982 = vld [vmem:[#allocation3 + $0x18] sm:$0xff]
  %v1983 = vld [vmem:[%s7] sm:$0x3]
  %v1984 = vld [vmem:[%s1 + $0x3f0] sm:$0xff]
  %v1985 = vld [vmem:[%s1 + $0x408] sm:$0xff]
  %v1986 = vld [vmem:[%s1 + $0x420] sm:$0xff]
  %v1987 = vld [vmem:[%s1 + $0x438] sm:$0xff]
  %v1988 = vld [vmem:[%s1 + $0x450] sm:$0xff]
  %v1989 = vld [vmem:[%s1 + $0x468] sm:$0xff]
  %v1990 = vld [vmem:[%s1 + $0x480] sm:$0xff]
  %v1991 = vld [vmem:[%s1 + $0x498] sm:$0xff]
  %v1992 = vld [vmem:[%s1 + $0x4b0] sm:$0xff]
  %v1993 = vld [vmem:[%s1 + $0x4c8] sm:$0xff]
  %v1994 = vld [vmem:[%s1 + $0x4e0] sm:$0xff]
  %v1995 = vld [vmem:[%s1 + $0x4f8] sm:$0xff]
  %v1996 = vld [vmem:[%s1 + $0x510] sm:$0xff]
  %v1997 = vld [vmem:[%s1 + $0x528] sm:$0xff]
  %v1998 = vld [vmem:[%s1 + $0x540] sm:$0xff]
  %v1999 = vld [vmem:[%s1 + $0x558] sm:$0xff]
  %v2000 = vld [vmem:[%s1 + $0x570] sm:$0xff]
  %v2001 = vld [vmem:[%s1 + $0x588] sm:$0xff]
  %v2002 = vld [vmem:[%s1 + $0x5a0] sm:$0xff]
  %v2003 = vld [vmem:[%s1 + $0x5b8] sm:$0xff]
  %v2004 = vld [vmem:[%s1 + $0x5d0] sm:$0xff]
  %v2005 = vld [vmem:[%s1 + $0x5e8] sm:$0xff]
  %v2006 = vld [vmem:[%s1 + $0x600] sm:$0xff]
  %v2007 = vld [vmem:[%s1 + $0x618] sm:$0xff]
  %v2008 = vld [vmem:[%s1 + $0x630] sm:$0xff]
  %v2009 = vld [vmem:[%s1 + $0x648] sm:$0xff]
  %v2010 = vld [vmem:[%s1 + $0x660] sm:$0xff]
  %v2011 = vld [vmem:[%s1 + $0x678] sm:$0xff]
  %v2012 = vld [vmem:[%s1 + $0x690] sm:$0xff]
  %v2013 = vld [vmem:[%s1 + $0x6a8] sm:$0xff]
  %v2014 = vld [vmem:[%s1 + $0x6c0] sm:$0xff]
  %v2015 = vld [vmem:[%s1 + $0x6d8] sm:$0xff]
  %v2016 = vld [vmem:[%s1 + $0x6f0] sm:$0x3]
  %v2017 = vld [vmem:[%s1 + $0x6f8] sm:$0x3]
  %v2018 = vld [vmem:[%s1 + $0x360] sm:$0xff]
  %v2019 = vld [vmem:[%s1 + $0x378] sm:$0xff]
  %2020 = vmatpush.msra.mxu0 %v1999
  %2021 = vmatpush.msra.mxu0 %v1998
  %2022 = vmatpush.msra.mxu0 %v1997
  %2023 = vmatpush.msra.mxu0 %v1996
  %2024 = vmatpush.msra.mxu0 %v1995
  %2025 = vmatpush.msra.mxu0 %v1994
  %2026 = vmatpush.msra.mxu0 %v1993
  %2027 = vmatpush.msra.mxu0 %v1992
  %2028 = vmatpush.msra.mxu0 %v1991
  %2029 = vmatpush.msra.mxu0 %v1990
  %2030 = vmatpush.msra.mxu0 %v1989
  %2031 = vmatpush.msra.mxu0 %v1988
  %2032 = vmatpush.msra.mxu0 %v1987
  %2033 = vmatpush.msra.mxu0 %v1986
  %2034 = vmatpush.msra.mxu0 %v1985
  %2035 = vmatpush.msra.mxu0 %v1984
  %2036 = vmatmul.f32.gmra.mxu0 %v1979
  %v2037 = vpop.f32.mrf.mxu0
  %v2038 = vadd.f32 0.0, %v2037
  %2039 = vmatmul.f32.gmra.mxu0 %v1981
  %v2040 = vpop.f32.mrf.mxu0
  %v2041 = vadd.f32 0.0, %v2040
  %2042 = vdwg.mxu0
  %2043 = vmatpush.msra.mxu0 %v2015
  %2044 = vmatpush.msra.mxu0 %v2014
  %2045 = vmatpush.msra.mxu0 %v2013
  %2046 = vmatpush.msra.mxu0 %v2012
  %2047 = vmatpush.msra.mxu0 %v2011
  %2048 = vmatpush.msra.mxu0 %v2010
  %2049 = vmatpush.msra.mxu0 %v2009
  %2050 = vmatpush.msra.mxu0 %v2008
  %2051 = vmatpush.msra.mxu0 %v2007
  %2052 = vmatpush.msra.mxu0 %v2006
  %2053 = vmatpush.msra.mxu0 %v2005
  %2054 = vmatpush.msra.mxu0 %v2004
  %2055 = vmatpush.msra.mxu0 %v2003
  %2056 = vmatpush.msra.mxu0 %v2002
  %2057 = vmatpush.msra.mxu0 %v2001
  %2058 = vmatpush.msra.mxu0 %v2000
  %2059 = vmatmul.f32.gmra.mxu0 %v1980
  %v2060 = vpop.f32.mrf.mxu0
  %v2061 = vadd.f32 %v2038, %v2060
  %2062 = vmatmul.f32.gmra.mxu0 %v1982
  %v2063 = vpop.f32.mrf.mxu0
  %v2064 = vadd.f32 %v2041, %v2063
  %2065 = vdwg.mxu0
  %v2067 = vsel %vm1841, %v2018, 0
  %v2070 = vsel %vm1841, %v2019, 0
  %2072 = vmatpush.msra.mxu0 0.0
  %2073 = vmatpush.msra.mxu0 0.0
  %2074 = vmatpush.msra.mxu0 0.0
  %2075 = vmatpush.msra.mxu0 0.0
  %2076 = vmatpush.msra.mxu0 0.0
  %2077 = vmatpush.msra.mxu0 0.0
  %2078 = vmatpush.msra.mxu0 0.0
  %2079 = vmatpush.msra.mxu0 0.0
  %2080 = vmatpush.msra.mxu0 0.0
  %2081 = vmatpush.msra.mxu0 0.0
  %2082 = vmatpush.msra.mxu0 0.0
  %2083 = vmatpush.msra.mxu0 0.0
  %2084 = vmatpush.msra.mxu0 0.0
  %2085 = vmatpush.msra.mxu0 0.0
  %2086 = vmatpush.msra.mxu0 %v2064
  %2087 = vmatpush.msra.mxu0 %v2061
  %2088 = vmatmul.f32.gmra.mxu0 %v2067
  %v2089 = vpop.f32.mrf.mxu0
  %v2090 = vadd.f32 0.0, %v2089
  %2091 = vmatmul.f32.gmra.mxu0 %v2070
  %v2092 = vpop.f32.mrf.mxu0
  %v2093 = vadd.f32 0.0, %v2092
  %2094 = vdwg.mxu0
  %v2095 = vmul.f32 %v2090, 0.00390625
  %v2096 = vmul.f32 %v2093, 0.00390625
  %vm2097 = vcmask 15360
  %v2099 = vsel %vm2097, %v2095, 0
  %v2102 = vsel %vm2097, %v2096, 0
  %vm2104 = vcmask 1041408
  %v2106 = vsel %vm2104, %v2016, 0
  %v2109 = vsel %vm2104, %v2017, 0
  %2111 = vmatpush.msra.mxu0 0.0
  %2112 = vmatpush.msra.mxu0 0.0
  %2113 = vmatpush.msra.mxu0 0.0
  %2114 = vmatpush.msra.mxu0 0.0
  %2115 = vmatpush.msra.mxu0 0.0
  %2116 = vmatpush.msra.mxu0 0.0
  %2117 = vmatpush.msra.mxu0 0.0
  %2118 = vmatpush.msra.mxu0 0.0
  %2119 = vmatpush.msra.mxu0 0.0
  %2120 = vmatpush.msra.mxu0 0.0
  %2121 = vmatpush.msra.mxu0 0.0
  %2122 = vmatpush.msra.mxu0 0.0
  %2123 = vmatpush.msra.mxu0 0.0
  %2124 = vmatpush.msra.mxu0 0.0
  %2125 = vmatpush.msra.mxu0 0.0
  %2126 = vmatpush.msra.mxu0 %v2106
  %2127 = vmatmul.f32.gmra.mxu0 %v2099
  %v2128 = vpop.f32.mrf.mxu0
  %v2129 = vadd.f32 0.0, %v2128
  %2130 = vmatmul.f32.gmra.mxu0 %v2102
  %v2131 = vpop.f32.mrf.mxu0
  %v2132 = vadd.f32 0.0, %v2131
  %2133 = vdwg.mxu0
  %2134 = vmatpush.msra.mxu0 0.0
  %2135 = vmatpush.msra.mxu0 0.0
  %2136 = vmatpush.msra.mxu0 0.0
  %2137 = vmatpush.msra.mxu0 0.0
  %2138 = vmatpush.msra.mxu0 0.0
  %2139 = vmatpush.msra.mxu0 0.0
  %2140 = vmatpush.msra.mxu0 0.0
  %2141 = vmatpush.msra.mxu0 0.0
  %2142 = vmatpush.msra.mxu0 0.0
  %2143 = vmatpush.msra.mxu0 0.0
  %2144 = vmatpush.msra.mxu0 0.0
  %2145 = vmatpush.msra.mxu0 0.0
  %2146 = vmatpush.msra.mxu0 0.0
  %2147 = vmatpush.msra.mxu0 0.0
  %2148 = vmatpush.msra.mxu0 0.0
  %2149 = vmatpush.msra.mxu0 %v2109
  %2150 = vmatmul.f32.gmra.mxu0 %v2099
  %v2151 = vpop.f32.mrf.mxu0
  %v2152 = vadd.f32 0.0, %v2151
  %2153 = vmatmul.f32.gmra.mxu0 %v2102
  %v2154 = vpop.f32.mrf.mxu0
  %v2155 = vadd.f32 0.0, %v2154
  %2156 = vdwg.mxu0
  %v2157 = vsub.f32 %v1979, %v2129
  %v2158 = vsub.f32 %v1980, %v2152
  %v2159 = vsub.f32 %v1981, %v2132
  %v2160 = vsub.f32 %v1982, %v2155
  %v2162 = vperm.slane %v1983, 0
  %v2163 = vperm.slane %v1983, 1
  %v2166 = vmul.f32 %v2157, %v2162
  %v2167 = vmul.f32 %v2158, %v2163
  %v2168 = vmul.f32 %v2159, %v2162
  %v2169 = vmul.f32 %v2160, %v2163
  %v2170 = vmul.f32 %v2166, %v2166
  %v2171 = vmul.f32 %v2167, %v2167
  %v2172 = vmul.f32 %v2168, %v2168
  %v2173 = vmul.f32 %v2169, %v2169
  %2174 = vmatpush.msra.mxu0 %v1999
  %2175 = vmatpush.msra.mxu0 %v1998
  %2176 = vmatpush.msra.mxu0 %v1997
  %2177 = vmatpush.msra.mxu0 %v1996
  %2178 = vmatpush.msra.mxu0 %v1995
  %2179 = vmatpush.msra.mxu0 %v1994
  %2180 = vmatpush.msra.mxu0 %v1993
  %2181 = vmatpush.msra.mxu0 %v1992
  %2182 = vmatpush.msra.mxu0 %v1991
  %2183 = vmatpush.msra.mxu0 %v1990
  %2184 = vmatpush.msra.mxu0 %v1989
  %2185 = vmatpush.msra.mxu0 %v1988
  %2186 = vmatpush.msra.mxu0 %v1987
  %2187 = vmatpush.msra.mxu0 %v1986
  %2188 = vmatpush.msra.mxu0 %v1985
  %2189 = vmatpush.msra.mxu0 %v1984
  %2190 = vmatmul.f32.gmra.mxu0 %v2170
  %v2191 = vpop.f32.mrf.mxu0
  %v2192 = vadd.f32 0.0, %v2191
  %2193 = vmatmul.f32.gmra.mxu0 %v2172
  %v2194 = vpop.f32.mrf.mxu0
  %v2195 = vadd.f32 0.0, %v2194
  %2196 = vdwg.mxu0
  %2197 = vmatpush.msra.mxu0 %v2015
  %2198 = vmatpush.msra.mxu0 %v2014
  %2199 = vmatpush.msra.mxu0 %v2013
  %2200 = vmatpush.msra.mxu0 %v2012
  %2201 = vmatpush.msra.mxu0 %v2011
  %2202 = vmatpush.msra.mxu0 %v2010
  %2203 = vmatpush.msra.mxu0 %v2009
  %2204 = vmatpush.msra.mxu0 %v2008
  %2205 = vmatpush.msra.mxu0 %v2007
  %2206 = vmatpush.msra.mxu0 %v2006
  %2207 = vmatpush.msra.mxu0 %v2005
  %2208 = vmatpush.msra.mxu0 %v2004
  %2209 = vmatpush.msra.mxu0 %v2003
  %2210 = vmatpush.msra.mxu0 %v2002
  %2211 = vmatpush.msra.mxu0 %v2001
  %2212 = vmatpush.msra.mxu0 %v2000
  %2213 = vmatmul.f32.gmra.mxu0 %v2171
  %v2214 = vpop.f32.mrf.mxu0
  %v2215 = vadd.f32 %v2192, %v2214
  %2216 = vmatmul.f32.gmra.mxu0 %v2173
  %v2217 = vpop.f32.mrf.mxu0
  %v2218 = vadd.f32 %v2195, %v2217
  %2219 = vdwg.mxu0
  %2220 = vmatpush.msra.mxu0 0.0
  %2221 = vmatpush.msra.mxu0 0.0
  %2222 = vmatpush.msra.mxu0 0.0
  %2223 = vmatpush.msra.mxu0 0.0
  %2224 = vmatpush.msra.mxu0 0.0
  %2225 = vmatpush.msra.mxu0 0.0
  %2226 = vmatpush.msra.mxu0 0.0
  %2227 = vmatpush.msra.mxu0 0.0
  %2228 = vmatpush.msra.mxu0 0.0
  %2229 = vmatpush.msra.mxu0 0.0
  %2230 = vmatpush.msra.mxu0 0.0
  %2231 = vmatpush.msra.mxu0 0.0
  %2232 = vmatpush.msra.mxu0 0.0
  %2233 = vmatpush.msra.mxu0 0.0
  %2234 = vmatpush.msra.mxu0 %v2218
  %2235 = vmatpush.msra.mxu0 %v2215
  %2236 = vmatmul.f32.gmra.mxu0 %v2067
  %v2237 = vpop.f32.mrf.mxu0
  %v2238 = vadd.f32 0.0, %v2237
  %2239 = vmatmul.f32.gmra.mxu0 %v2070
  %v2240 = vpop.f32.mrf.mxu0
  %v2241 = vadd.f32 0.0, %v2240
  %2242 = vdwg.mxu0
  %v2243 = vmul.f32 %v2238, 0.00390625
  %v2244 = vmul.f32 %v2241, 0.00390625
  %v2245 = vadd.f32 %v2243, 1e-05
  %v2246 = vadd.f32 %v2244, 1e-05
  %v2247 = vrsqrt.pop %v2245
  %v2248 = vmul.f32 %v2247, %v2245
  %v2249 = vmul.f32 %v2248, %v2247
  %v2250 = vmul.f32 0.5, %v2249
  %v2251 = vsub.f32 1.5, %v2250
  %v2252 = vmul.f32 %v2247, %v2251
  %vm2253 = vweird.f32 %v2245
  %vm2254 = vweird.f32 %v2247
  %vm2255 = vmor %vm2253, %vm2254
  %v2256 = vsel %vm2255, %v2247, %v2252
  %v2257 = vrsqrt.pop %v2246
  %v2258 = vmul.f32 %v2257, %v2246
  %v2259 = vmul.f32 %v2258, %v2257
  %v2260 = vmul.f32 0.5, %v2259
  %v2261 = vsub.f32 1.5, %v2260
  %v2262 = vmul.f32 %v2257, %v2261
  %vm2263 = vweird.f32 %v2246
  %vm2264 = vweird.f32 %v2257
  %vm2265 = vmor %vm2263, %vm2264
  %v2266 = vsel %vm2265, %v2257, %v2262
  %v2268 = vsel %vm2097, %v2256, 0
  %v2271 = vsel %vm2097, %v2266, 0
  %2273 = vmatpush.msra.mxu0 0.0
  %2274 = vmatpush.msra.mxu0 0.0
  %2275 = vmatpush.msra.mxu0 0.0
  %2276 = vmatpush.msra.mxu0 0.0
  %2277 = vmatpush.msra.mxu0 0.0
  %2278 = vmatpush.msra.mxu0 0.0
  %2279 = vmatpush.msra.mxu0 0.0
  %2280 = vmatpush.msra.mxu0 0.0
  %2281 = vmatpush.msra.mxu0 0.0
  %2282 = vmatpush.msra.mxu0 0.0
  %2283 = vmatpush.msra.mxu0 0.0
  %2284 = vmatpush.msra.mxu0 0.0
  %2285 = vmatpush.msra.mxu0 0.0
  %2286 = vmatpush.msra.mxu0 0.0
  %2287 = vmatpush.msra.mxu0 0.0
  %2288 = vmatpush.msra.mxu0 %v2106
  %2289 = vmatmul.f32.gmra.mxu0 %v2268
  %v2290 = vpop.f32.mrf.mxu0
  %v2291 = vadd.f32 0.0, %v2290
  %2292 = vmatmul.f32.gmra.mxu0 %v2271
  %v2293 = vpop.f32.mrf.mxu0
  %v2294 = vadd.f32 0.0, %v2293
  %2295 = vdwg.mxu0
  %2296 = vmatpush.msra.mxu0 0.0
  %2297 = vmatpush.msra.mxu0 0.0
  %2298 = vmatpush.msra.mxu0 0.0
  %2299 = vmatpush.msra.mxu0 0.0
  %2300 = vmatpush.msra.mxu0 0.0
  %2301 = vmatpush.msra.mxu0 0.0
  %2302 = vmatpush.msra.mxu0 0.0
  %2303 = vmatpush.msra.mxu0 0.0
  %2304 = vmatpush.msra.mxu0 0.0
  %2305 = vmatpush.msra.mxu0 0.0
  %2306 = vmatpush.msra.mxu0 0.0
  %2307 = vmatpush.msra.mxu0 0.0
  %2308 = vmatpush.msra.mxu0 0.0
  %2309 = vmatpush.msra.mxu0 0.0
  %2310 = vmatpush.msra.mxu0 0.0
  %2311 = vmatpush.msra.mxu0 %v2109
  %2312 = vmatmul.f32.gmra.mxu0 %v2268
  %v2313 = vpop.f32.mrf.mxu0
  %v2314 = vadd.f32 0.0, %v2313
  %2315 = vmatmul.f32.gmra.mxu0 %v2271
  %v2316 = vpop.f32.mrf.mxu0
  %v2317 = vadd.f32 0.0, %v2316
  %2318 = vdwg.mxu0
  %v2319 = vmul.f32 %v2166, %v2291
  %v2320 = vmul.f32 %v2167, %v2314
  %v2321 = vmul.f32 %v2168, %v2294
  %v2322 = vmul.f32 %v2169, %v2317
  %v2323 = vld [vmem:[%s2 + $0x120] sm:$0xff]
  %v2324 = vld [vmem:[%s2 + $0x128] sm:$0xff]
  %2326 = vset.pattern.permute.xlu0 0
  %2327 = vperm.xlu0 %2326, %v2323
  %v2328 = vpop.permute.xlu0 %2327
  %2331 = vset.pattern.permute.xlu0 0
  %2332 = vperm.xlu0 %2331, %v2324
  %v2333 = vpop.permute.xlu0 %2332
  %v2335 = vmul.f32 %v2319, %v2328
  %v2336 = vmul.f32 %v2320, %v2328
  %v2337 = vmul.f32 %v2321, %v2333
  %v2338 = vmul.f32 %v2322, %v2333
  %v2339 = vld [vmem:[%s2 + $0x130] sm:$0xff]
  %v2340 = vld [vmem:[%s2 + $0x138] sm:$0xff]
  %2342 = vset.pattern.permute.xlu0 0
  %2343 = vperm.xlu0 %2342, %v2339
  %v2344 = vpop.permute.xlu0 %2343
  %2347 = vset.pattern.permute.xlu0 0
  %2348 = vperm.xlu0 %2347, %v2340
  %v2349 = vpop.permute.xlu0 %2348
  %v2351 = vadd.f32 %v2335, %v2344
  %v2352 = vadd.f32 %v2336, %v2344
  %v2353 = vadd.f32 %v2337, %v2349
  %v2354 = vadd.f32 %v2338, %v2349
  %v2355 = vmax.f32 %v2351, 0.0
  %v2356 = vmax.f32 %v2352, 0.0
  %v2357 = vmax.f32 %v2353, 0.0
  %v2358 = vmax.f32 %v2354, 0.0
  %v2359 = vmul.f32 %v2355, %v2162
  %v2360 = vmul.f32 %v2356, %v2163
  %v2361 = vmul.f32 %v2357, %v2162
  %v2362 = vmul.f32 %v2358, %v2163
  %2363 = vst [vmem:[#allocation3] sm:$0xff] %v2359
  %2364 = vst [vmem:[#allocation3 + $0x8] sm:$0xff] %v2360
  %2365 = vst [vmem:[#allocation3 + $0x10] sm:$0xff] %v2361
  %2366 = vst [vmem:[#allocation3 + $0x18] sm:$0xff] %v2362
  %v2367 = vld [vmem:[#allocation3] sm:$0xff]
  %v2368 = vld [vmem:[#allocation3 + $0x8] sm:$0xff]
  %v2369 = vld [vmem:[#allocation3 + $0x10] sm:$0xff]
  %v2370 = vld [vmem:[#allocation3 + $0x18] sm:$0xff]
  %2375 = vrot.lane.b32.xlu0 %v2367, 127
  %v2376 = vpop.permute.xlu0 %2375
  %2377 = vrot.lane.b32.xlu0 %v2368, 127
  %v2378 = vpop.permute.xlu0 %2377
  %2379 = vrot.lane.b32.xlu0 %v2369, 127
  %v2380 = vpop.permute.xlu0 %2379
  %2381 = vrot.lane.b32.xlu0 %v2370, 127
  %v2382 = vpop.permute.xlu0 %2381
  %v2383 = vsel %vm90, %v2376, %v2378
  %v2384 = vsel %vm90, %v2380, %v2382
  %2389 = vrot.lane.b32.xlu0 %v2367, 126
  %v2390 = vpop.permute.xlu0 %2389
  %2391 = vrot.lane.b32.xlu0 %v2368, 126
  %v2392 = vpop.permute.xlu0 %2391
  %2393 = vrot.lane.b32.xlu0 %v2369, 126
  %v2394 = vpop.permute.xlu0 %2393
  %2395 = vrot.lane.b32.xlu0 %v2370, 126
  %v2396 = vpop.permute.xlu0 %2395
  %v2397 = vsel %vm114, %v2390, %v2392
  %v2398 = vsel %vm114, %v2394, %v2396
  %2403 = vrot.lane.b32.xlu0 %v2367, 118
  %v2404 = vpop.permute.xlu0 %2403
  %2405 = vrot.lane.b32.xlu0 %v2368, 118
  %v2406 = vpop.permute.xlu0 %2405
  %2407 = vrot.lane.b32.xlu0 %v2369, 118
  %v2408 = vpop.permute.xlu0 %2407
  %2409 = vrot.lane.b32.xlu0 %v2370, 118
  %v2410 = vpop.permute.xlu0 %2409
  %v2411 = vsel %vm1744, %v2404, %v2406
  %v2412 = vsel %vm1744, %v2408, %v2410
  %2417 = vrot.lane.b32.xlu0 %v2367, 117
  %v2418 = vpop.permute.xlu0 %2417
  %2419 = vrot.lane.b32.xlu0 %v2368, 117
  %v2420 = vpop.permute.xlu0 %2419
  %2421 = vrot.lane.b32.xlu0 %v2369, 117
  %v2422 = vpop.permute.xlu0 %2421
  %2423 = vrot.lane.b32.xlu0 %v2370, 117
  %v2424 = vpop.permute.xlu0 %2423
  %v2425 = vsel %vm1759, %v2418, %v2420
  %v2426 = vsel %vm1759, %v2422, %v2424
  %2431 = vrot.lane.b32.xlu0 %v2367, 116
  %v2432 = vpop.permute.xlu0 %2431
  %2433 = vrot.lane.b32.xlu0 %v2368, 116
  %v2434 = vpop.permute.xlu0 %2433
  %2435 = vrot.lane.b32.xlu0 %v2369, 116
  %v2436 = vpop.permute.xlu0 %2435
  %2437 = vrot.lane.b32.xlu0 %v2370, 116
  %v2438 = vpop.permute.xlu0 %2437
  %v2439 = vsel %vm1774, %v2432, %v2434
  %v2440 = vsel %vm1774, %v2436, %v2438
  %2445 = vrot.lane.b32.xlu0 %v2367, 108
  %v2446 = vpop.permute.xlu0 %2445
  %2447 = vrot.lane.b32.xlu0 %v2368, 108
  %v2448 = vpop.permute.xlu0 %2447
  %2449 = vrot.lane.b32.xlu0 %v2369, 108
  %v2450 = vpop.permute.xlu0 %2449
  %2451 = vrot.lane.b32.xlu0 %v2370, 108
  %v2452 = vpop.permute.xlu0 %2451
  %v2453 = vsel %vm186, %v2446, %v2448
  %v2454 = vsel %vm186, %v2450, %v2452
  %2459 = vrot.lane.b32.xlu0 %v2367, 107
  %v2460 = vpop.permute.xlu0 %2459
  %2461 = vrot.lane.b32.xlu0 %v2368, 107
  %v2462 = vpop.permute.xlu0 %2461
  %2463 = vrot.lane.b32.xlu0 %v2369, 107
  %v2464 = vpop.permute.xlu0 %2463
  %2465 = vrot.lane.b32.xlu0 %v2370, 107
  %v2466 = vpop.permute.xlu0 %2465
  %v2467 = vsel %vm1803, %v2460, %v2462
  %v2468 = vsel %vm1803, %v2464, %v2466
  %2473 = vrot.lane.b32.xlu0 %v2367, 106
  %v2474 = vpop.permute.xlu0 %2473
  %2475 = vrot.lane.b32.xlu0 %v2368, 106
  %v2476 = vpop.permute.xlu0 %2475
  %2477 = vrot.lane.b32.xlu0 %v2369, 106
  %v2478 = vpop.permute.xlu0 %2477
  %2479 = vrot.lane.b32.xlu0 %v2370, 106
  %v2480 = vpop.permute.xlu0 %2479
  %v2481 = vsel %vm1818, %v2474, %v2476
  %v2482 = vsel %vm1818, %v2478, %v2480
  %v2487 = vld [vmem:[%s1 + $0x90] sm:$0xff]
  %v2488 = vld [vmem:[%s1 + $0x98] sm:$0xff]
  %v2489 = vld [vmem:[%s1 + $0xa8] sm:$0xff]
  %v2490 = vld [vmem:[%s1 + $0xb0] sm:$0xff]
  %v2491 = vld [vmem:[%s2 + $0x30] sm:$0xff]
  %v2492 = vld [vmem:[%s2 + $0x38] sm:$0xff]
  %2494 = vset.pattern.permute.xlu0 0
  %2495 = vperm.xlu0 %2494, %v2491
  %v2496 = vpop.permute.xlu0 %2495
  %2499 = vset.pattern.permute.xlu0 0
  %2500 = vperm.xlu0 %2499, %v2492
  %v2501 = vpop.permute.xlu0 %2500
  %v2504 = vsel %vm1841, %v2488, 0
  %v2507 = vsel %vm1841, %v2490, 0
  %2509 = vmatpush.msra.mxu0 %v2468
  %2510 = vmatpush.msra.mxu0 %v2467
  %2511 = vmatpush.msra.mxu0 %v2454
  %2512 = vmatpush.msra.mxu0 %v2453
  %2513 = vmatpush.msra.mxu0 %v2440
  %2514 = vmatpush.msra.mxu0 %v2439
  %2515 = vmatpush.msra.mxu0 %v2426
  %2516 = vmatpush.msra.mxu0 %v2425
  %2517 = vmatpush.msra.mxu0 %v2412
  %2518 = vmatpush.msra.mxu0 %v2411
  %2519 = vmatpush.msra.mxu0 %v2398
  %2520 = vmatpush.msra.mxu0 %v2397
  %2521 = vmatpush.msra.mxu0 %v2384
  %2522 = vmatpush.msra.mxu0 %v2383
  %2523 = vmatpush.msra.mxu0 %v2369
  %2524 = vmatpush.msra.mxu0 %v2367
  %2525 = vmatmul.f32.gmra.mxu0 %v2487
  %v2526 = vpop.f32.mrf.mxu0
  %v2527 = vadd.f32 %v2496, %v2526
  %2528 = vmatmul.f32.gmra.mxu0 %v2489
  %v2529 = vpop.f32.mrf.mxu0
  %v2530 = vadd.f32 %v2501, %v2529
  %2531 = vdwg.mxu0
  %2532 = vmatpush.msra.mxu0 0.0
  %2533 = vmatpush.msra.mxu0 0.0
  %2534 = vmatpush.msra.mxu0 0.0
  %2535 = vmatpush.msra.mxu0 0.0
  %2536 = vmatpush.msra.mxu0 0.0
  %2537 = vmatpush.msra.mxu0 0.0
  %2538 = vmatpush.msra.mxu0 0.0
  %2539 = vmatpush.msra.mxu0 0.0
  %2540 = vmatpush.msra.mxu0 0.0
  %2541 = vmatpush.msra.mxu0 0.0
  %2542 = vmatpush.msra.mxu0 0.0
  %2543 = vmatpush.msra.mxu0 0.0
  %2544 = vmatpush.msra.mxu0 0.0
  %2545 = vmatpush.msra.mxu0 0.0
  %2546 = vmatpush.msra.mxu0 %v2482
  %2547 = vmatpush.msra.mxu0 %v2481
  %2548 = vmatmul.f32.gmra.mxu0 %v2504
  %v2549 = vpop.f32.mrf.mxu0
  %v2550 = vadd.f32 %v2527, %v2549
  %2551 = vmatmul.f32.gmra.mxu0 %v2507
  %v2552 = vpop.f32.mrf.mxu0
  %v2553 = vadd.f32 %v2530, %v2552
  %2554 = vdwg.mxu0
  %2555 = vmatpush.msra.mxu0 %v2466
  %2556 = vmatpush.msra.mxu0 %v2462
  %2557 = vmatpush.msra.mxu0 %v2452
  %2558 = vmatpush.msra.mxu0 %v2448
  %2559 = vmatpush.msra.mxu0 %v2438
  %2560 = vmatpush.msra.mxu0 %v2434
  %2561 = vmatpush.msra.mxu0 %v2424
  %2562 = vmatpush.msra.mxu0 %v2420
  %2563 = vmatpush.msra.mxu0 %v2410
  %2564 = vmatpush.msra.mxu0 %v2406
  %2565 = vmatpush.msra.mxu0 %v2396
  %2566 = vmatpush.msra.mxu0 %v2392
  %2567 = vmatpush.msra.mxu0 %v2382
  %2568 = vmatpush.msra.mxu0 %v2378
  %2569 = vmatpush.msra.mxu0 %v2370
  %2570 = vmatpush.msra.mxu0 %v2368
  %2571 = vmatmul.f32.gmra.mxu0 %v2487
  %v2572 = vpop.f32.mrf.mxu0
  %v2573 = vadd.f32 %v2496, %v2572
  %2574 = vmatmul.f32.gmra.mxu0 %v2489
  %v2575 = vpop.f32.mrf.mxu0
  %v2576 = vadd.f32 %v2501, %v2575
  %2577 = vdwg.mxu0
  %2578 = vmatpush.msra.mxu0 0.0
  %2579 = vmatpush.msra.mxu0 0.0
  %2580 = vmatpush.msra.mxu0 0.0
  %2581 = vmatpush.msra.mxu0 0.0
  %2582 = vmatpush.msra.mxu0 0.0
  %2583 = vmatpush.msra.mxu0 0.0
  %2584 = vmatpush.msra.mxu0 0.0
  %2585 = vmatpush.msra.mxu0 0.0
  %2586 = vmatpush.msra.mxu0 0.0
  %2587 = vmatpush.msra.mxu0 0.0
  %2588 = vmatpush.msra.mxu0 0.0
  %2589 = vmatpush.msra.mxu0 0.0
  %2590 = vmatpush.msra.mxu0 0.0
  %2591 = vmatpush.msra.mxu0 0.0
  %2592 = vmatpush.msra.mxu0 %v2480
  %2593 = vmatpush.msra.mxu0 %v2476
  %2594 = vmatmul.f32.gmra.mxu0 %v2504
  %v2595 = vpop.f32.mrf.mxu0
  %v2596 = vadd.f32 %v2573, %v2595
  %2597 = vmatmul.f32.gmra.mxu0 %v2507
  %v2598 = vpop.f32.mrf.mxu0
  %v2599 = vadd.f32 %v2576, %v2598
  %2600 = vdwg.mxu0
  %v2601 = vmax.f32 %v2550, 0.0
  %v2602 = vmax.f32 %v2596, 0.0
  %v2603 = vmax.f32 %v2553, 0.0
  %v2604 = vmax.f32 %v2599, 0.0
  %v2605 = vld [vmem:[%s4] sm:$0x3]
  %v2607 = vperm.slane %v2605, 0
  %v2608 = vperm.slane %v2605, 1
  %v2611 = vmul.f32 %v2601, %v2607
  %v2612 = vmul.f32 %v2602, %v2608
  %v2613 = vmul.f32 %v2603, %v2607
  %v2614 = vmul.f32 %v2604, %v2608
  %2619 = vrot.lane.b32.xlu0 %v2611, 11
  %v2620 = vpop.permute.xlu0 %2619
  %2621 = vrot.lane.b32.xlu0 %v2612, 11
  %v2622 = vpop.permute.xlu0 %2621
  %2623 = vrot.lane.b32.xlu0 %v2613, 11
  %v2624 = vpop.permute.xlu0 %2623
  %2625 = vrot.lane.b32.xlu0 %v2614, 11
  %v2626 = vpop.permute.xlu0 %2625
  %v2627 = vsel %vm1966, %v2620, %v2622
  %v2628 = vsel %vm1966, %v2624, %v2626
  %2633 = vst.msk [vmem:[#allocation3] sm:$0xff] %vm1973, %v2620
  %2634 = vst.msk [vmem:[#allocation3 + $0x8] sm:$0xff] %vm1975, %v2627
  %2635 = vst.msk [vmem:[#allocation3 + $0x10] sm:$0xff] %vm1973, %v2624
  %2636 = vst.msk [vmem:[#allocation3 + $0x18] sm:$0xff] %vm1975, %v2628
  %v2637 = vld [vmem:[#allocation3] sm:$0xff]
  %v2638 = vld [vmem:[#allocation3 + $0x8] sm:$0xff]
  %v2639 = vld [vmem:[#allocation3 + $0x10] sm:$0xff]
  %v2640 = vld [vmem:[#allocation3 + $0x18] sm:$0xff]
  %v2641 = vld [vmem:[%s1 + $0xc0] sm:$0xff]
  %v2642 = vld [vmem:[%s1 + $0xd8] sm:$0xff]
  %v2643 = vld [vmem:[%s2 + $0x40] sm:$0xff]
  %v2644 = vld [vmem:[%s2 + $0x48] sm:$0xff]
  %2646 = vset.pattern.permute.xlu0 0
  %2647 = vperm.xlu0 %2646, %v2643
  %v2648 = vpop.permute.xlu0 %2647
  %2651 = vset.pattern.permute.xlu0 0
  %2652 = vperm.xlu0 %2651, %v2644
  %v2653 = vpop.permute.xlu0 %2652
  %v2656 = vsel %vm1841, %v2641, 0
  %v2659 = vsel %vm1841, %v2642, 0
  %2661 = vmatpush.msra.mxu0 0.0
  %2662 = vmatpush.msra.mxu0 0.0
  %2663 = vmatpush.msra.mxu0 0.0
  %2664 = vmatpush.msra.mxu0 0.0
  %2665 = vmatpush.msra.mxu0 0.0
  %2666 = vmatpush.msra.mxu0 0.0
  %2667 = vmatpush.msra.mxu0 0.0
  %2668 = vmatpush.msra.mxu0 0.0
  %2669 = vmatpush.msra.mxu0 0.0
  %2670 = vmatpush.msra.mxu0 0.0
  %2671 = vmatpush.msra.mxu0 0.0
  %2672 = vmatpush.msra.mxu0 0.0
  %2673 = vmatpush.msra.mxu0 0.0
  %2674 = vmatpush.msra.mxu0 0.0
  %2675 = vmatpush.msra.mxu0 %v2639
  %2676 = vmatpush.msra.mxu0 %v2637
  %2677 = vmatmul.f32.gmra.mxu0 %v2656
  %v2678 = vpop.f32.mrf.mxu0
  %v2679 = vadd.f32 %v2648, %v2678
  %2680 = vmatmul.f32.gmra.mxu0 %v2659
  %v2681 = vpop.f32.mrf.mxu0
  %v2682 = vadd.f32 %v2653, %v2681
  %2683 = vdwg.mxu0
  %2684 = vmatpush.msra.mxu0 0.0
  %2685 = vmatpush.msra.mxu0 0.0
  %2686 = vmatpush.msra.mxu0 0.0
  %2687 = vmatpush.msra.mxu0 0.0
  %2688 = vmatpush.msra.mxu0 0.0
  %2689 = vmatpush.msra.mxu0 0.0
  %2690 = vmatpush.msra.mxu0 0.0
  %2691 = vmatpush.msra.mxu0 0.0
  %2692 = vmatpush.msra.mxu0 0.0
  %2693 = vmatpush.msra.mxu0 0.0
  %2694 = vmatpush.msra.mxu0 0.0
  %2695 = vmatpush.msra.mxu0 0.0
  %2696 = vmatpush.msra.mxu0 0.0
  %2697 = vmatpush.msra.mxu0 0.0
  %2698 = vmatpush.msra.mxu0 %v2640
  %2699 = vmatpush.msra.mxu0 %v2638
  %2700 = vmatmul.f32.gmra.mxu0 %v2656
  %v2701 = vpop.f32.mrf.mxu0
  %v2702 = vadd.f32 %v2648, %v2701
  %2703 = vmatmul.f32.gmra.mxu0 %v2659
  %v2704 = vpop.f32.mrf.mxu0
  %v2705 = vadd.f32 %v2653, %v2704
  %2706 = vdwg.mxu0
  %v2707 = vmax.f32 %v2679, 0.0
  %v2708 = vmax.f32 %v2702, 0.0
  %v2709 = vmax.f32 %v2682, 0.0
  %v2710 = vmax.f32 %v2705, 0.0
  %v2711 = vld [vmem:[%s7] sm:$0x3]
  %v2713 = vperm.slane %v2711, 0
  %v2714 = vperm.slane %v2711, 1
  %v2717 = vmul.f32 %v2707, %v2713
  %v2718 = vmul.f32 %v2708, %v2714
  %v2719 = vmul.f32 %v2709, %v2713
  %v2720 = vmul.f32 %v2710, %v2714
  %2721 = vst [vmem:[#allocation3] sm:$0xff] %v2717
  %2722 = vst [vmem:[#allocation3 + $0x8] sm:$0xff] %v2718
  %2723 = vst [vmem:[#allocation3 + $0x10] sm:$0xff] %v2719
  %2724 = vst [vmem:[#allocation3 + $0x18] sm:$0xff] %v2720
  %v2725 = vld [vmem:[#allocation3] sm:$0xff]
  %v2726 = vld [vmem:[#allocation3 + $0x8] sm:$0xff]
  %v2727 = vld [vmem:[#allocation3 + $0x10] sm:$0xff]
  %v2728 = vld [vmem:[#allocation3 + $0x18] sm:$0xff]
  %v2729 = vld [vmem:[%s1 + $0xf0] sm:$0xff]
  %v2730 = vld [vmem:[%s1 + $0x108] sm:$0xff]
  %v2731 = vld [vmem:[%s1 + $0x120] sm:$0xff]
  %v2732 = vld [vmem:[%s1 + $0x138] sm:$0xff]
  %v2733 = vld [vmem:[%s2 + $0x50] sm:$0xff]
  %v2734 = vld [vmem:[%s2 + $0x58] sm:$0xff]
  %v2735 = vld [vmem:[%s2 + $0x60] sm:$0xff]
  %v2736 = vld [vmem:[%s2 + $0x68] sm:$0xff]
  %2738 = vset.pattern.permute.xlu0 0
  %2739 = vperm.xlu0 %2738, %v2733
  %v2740 = vpop.permute.xlu0 %2739
  %2743 = vset.pattern.permute.xlu0 0
  %2744 = vperm.xlu0 %2743, %v2734
  %v2745 = vpop.permute.xlu0 %2744
  %2748 = vset.pattern.permute.xlu0 0
  %2749 = vperm.xlu0 %2748, %v2735
  %v2750 = vpop.permute.xlu0 %2749
  %2753 = vset.pattern.permute.xlu0 0
  %2754 = vperm.xlu0 %2753, %v2736
  %v2755 = vpop.permute.xlu0 %2754
  %v2758 = vsel %vm1841, %v2729, 0
  %v2761 = vsel %vm1841, %v2730, 0
  %v2764 = vsel %vm1841, %v2731, 0
  %v2767 = vsel %vm1841, %v2732, 0
  %2769 = vmatpush.msra.mxu0 0.0
  %2770 = vmatpush.msra.mxu0 0.0
  %2771 = vmatpush.msra.mxu0 0.0
  %2772 = vmatpush.msra.mxu0 0.0
  %2773 = vmatpush.msra.mxu0 0.0
  %2774 = vmatpush.msra.mxu0 0.0
  %2775 = vmatpush.msra.mxu0 0.0
  %2776 = vmatpush.msra.mxu0 0.0
  %2777 = vmatpush.msra.mxu0 0.0
  %2778 = vmatpush.msra.mxu0 0.0
  %2779 = vmatpush.msra.mxu0 0.0
  %2780 = vmatpush.msra.mxu0 0.0
  %2781 = vmatpush.msra.mxu0 0.0
  %2782 = vmatpush.msra.mxu0 0.0
  %2783 = vmatpush.msra.mxu0 %v2727
  %2784 = vmatpush.msra.mxu0 %v2725
  %2785 = vmatmul.f32.gmra.mxu0 %v2758
  %v2786 = vpop.f32.mrf.mxu0
  %v2787 = vadd.f32 %v2740, %v2786
  %2788 = vmatmul.f32.gmra.mxu0 %v2761
  %v2789 = vpop.f32.mrf.mxu0
  %v2790 = vadd.f32 %v2745, %v2789
  %2791 = vmatmul.f32.gmra.mxu0 %v2764
  %v2792 = vpop.f32.mrf.mxu0
  %v2793 = vadd.f32 %v2750, %v2792
  %2794 = vmatmul.f32.gmra.mxu0 %v2767
  %v2795 = vpop.f32.mrf.mxu0
  %v2796 = vadd.f32 %v2755, %v2795
  %2797 = vdwg.mxu0
  %2798 = vmatpush.msra.mxu0 0.0
  %2799 = vmatpush.msra.mxu0 0.0
  %2800 = vmatpush.msra.mxu0 0.0
  %2801 = vmatpush.msra.mxu0 0.0
  %2802 = vmatpush.msra.mxu0 0.0
  %2803 = vmatpush.msra.mxu0 0.0
  %2804 = vmatpush.msra.mxu0 0.0
  %2805 = vmatpush.msra.mxu0 0.0
  %2806 = vmatpush.msra.mxu0 0.0
  %2807 = vmatpush.msra.mxu0 0.0
  %2808 = vmatpush.msra.mxu0 0.0
  %2809 = vmatpush.msra.mxu0 0.0
  %2810 = vmatpush.msra.mxu0 0.0
  %2811 = vmatpush.msra.mxu0 0.0
  %2812 = vmatpush.msra.mxu0 %v2728
  %2813 = vmatpush.msra.mxu0 %v2726
  %2814 = vmatmul.f32.gmra.mxu0 %v2758
  %v2815 = vpop.f32.mrf.mxu0
  %v2816 = vadd.f32 %v2740, %v2815
  %2817 = vmatmul.f32.gmra.mxu0 %v2761
  %v2818 = vpop.f32.mrf.mxu0
  %v2819 = vadd.f32 %v2745, %v2818
  %2820 = vmatmul.f32.gmra.mxu0 %v2764
  %v2821 = vpop.f32.mrf.mxu0
  %v2822 = vadd.f32 %v2750, %v2821
  %2823 = vmatmul.f32.gmra.mxu0 %v2767
  %v2824 = vpop.f32.mrf.mxu0
  %v2825 = vadd.f32 %v2755, %v2824
  %2826 = vdwg.mxu0
  %v2827 = vmax.f32 %v2787, 0.0
  %v2828 = vmax.f32 %v2816, 0.0
  %v2829 = vmax.f32 %v2790, 0.0
  %v2830 = vmax.f32 %v2819, 0.0
  %v2831 = vmax.f32 %v2793, 0.0
  %v2832 = vmax.f32 %v2822, 0.0
  %v2833 = vmax.f32 %v2796, 0.0
  %v2834 = vmax.f32 %v2825, 0.0
  %v2835 = vld [vmem:[%s7] sm:$0x3]
  %v2837 = vperm.slane %v2835, 0
  %v2838 = vperm.slane %v2835, 1
  %v2841 = vmul.f32 %v2827, %v2837
  %v2842 = vmul.f32 %v2828, %v2838
  %v2843 = vmul.f32 %v2829, %v2837
  %v2844 = vmul.f32 %v2830, %v2838
  %v2845 = vmul.f32 %v2831, %v2837
  %v2846 = vmul.f32 %v2832, %v2838
  %v2847 = vmul.f32 %v2833, %v2837
  %v2848 = vmul.f32 %v2834, %v2838
  %2849 = vst [vmem:[#allocation3] sm:$0xff] %v2841
  %2850 = vst [vmem:[#allocation3 + $0x8] sm:$0xff] %v2842
  %2851 = vst [vmem:[#allocation3 + $0x10] sm:$0xff] %v2843
  %2852 = vst [vmem:[#allocation3 + $0x18] sm:$0xff] %v2844
  %2853 = vst [vmem:[#allocation3 + $0x20] sm:$0xff] %v2845
  %2854 = vst [vmem:[#allocation3 + $0x28] sm:$0xff] %v2846
  %2855 = vst [vmem:[#allocation3 + $0x30] sm:$0xff] %v2847
  %2856 = vst [vmem:[#allocation3 + $0x38] sm:$0xff] %v2848
  %v2857 = vld [vmem:[#allocation3] sm:$0xff]
  %v2858 = vld [vmem:[#allocation3 + $0x8] sm:$0xff]
  %v2859 = vld [vmem:[#allocation3 + $0x10] sm:$0xff]
  %v2860 = vld [vmem:[#allocation3 + $0x18] sm:$0xff]
  %v2861 = vld [vmem:[#allocation3 + $0x20] sm:$0xff]
  %v2862 = vld [vmem:[#allocation3 + $0x28] sm:$0xff]
  %v2863 = vld [vmem:[#allocation3 + $0x30] sm:$0xff]
  %v2864 = vld [vmem:[#allocation3 + $0x38] sm:$0xff]
  %2873 = vrot.lane.b32.xlu0 %v2857, 127
  %v2874 = vpop.permute.xlu0 %2873
  %2875 = vrot.lane.b32.xlu0 %v2858, 127
  %v2876 = vpop.permute.xlu0 %2875
  %2877 = vrot.lane.b32.xlu0 %v2859, 127
  %v2878 = vpop.permute.xlu0 %2877
  %2879 = vrot.lane.b32.xlu0 %v2860, 127
  %v2880 = vpop.permute.xlu0 %2879
  %2881 = vrot.lane.b32.xlu0 %v2861, 127
  %v2882 = vpop.permute.xlu0 %2881
  %2883 = vrot.lane.b32.xlu0 %v2862, 127
  %v2884 = vpop.permute.xlu0 %2883
  %2885 = vrot.lane.b32.xlu0 %v2863, 127
  %v2886 = vpop.permute.xlu0 %2885
  %2887 = vrot.lane.b32.xlu0 %v2864, 127
  %v2888 = vpop.permute.xlu0 %2887
  %v2889 = vsel %vm90, %v2874, %v2876
  %v2890 = vsel %vm90, %v2878, %v2880
  %v2891 = vsel %vm90, %v2882, %v2884
  %v2892 = vsel %vm90, %v2886, %v2888
  %v2901 = vmax.f32 %v2857, %v2889
  %v2902 = vmax.f32 %v2858, %v2876
  %v2903 = vmax.f32 %v2859, %v2890
  %v2904 = vmax.f32 %v2860, %v2880
  %v2905 = vmax.f32 %v2861, %v2891
  %v2906 = vmax.f32 %v2862, %v2884
  %v2907 = vmax.f32 %v2863, %v2892
  %v2908 = vmax.f32 %v2864, %v2888
  %2917 = vrot.lane.b32.xlu0 %v2901, 118
  %v2918 = vpop.permute.xlu0 %2917
  %2919 = vrot.lane.b32.xlu0 %v2902, 118
  %v2920 = vpop.permute.xlu0 %2919
  %2921 = vrot.lane.b32.xlu0 %v2903, 118
  %v2922 = vpop.permute.xlu0 %2921
  %2923 = vrot.lane.b32.xlu0 %v2904, 118
  %v2924 = vpop.permute.xlu0 %2923
  %2925 = vrot.lane.b32.xlu0 %v2905, 118
  %v2926 = vpop.permute.xlu0 %2925
  %2927 = vrot.lane.b32.xlu0 %v2906, 118
  %v2928 = vpop.permute.xlu0 %2927
  %2929 = vrot.lane.b32.xlu0 %v2907, 118
  %v2930 = vpop.permute.xlu0 %2929
  %2931 = vrot.lane.b32.xlu0 %v2908, 118
  %v2932 = vpop.permute.xlu0 %2931
  %v2933 = vsel %vm1744, %v2918, %v2920
  %v2934 = vsel %vm1744, %v2922, %v2924
  %v2935 = vsel %vm1744, %v2926, %v2928
  %v2936 = vsel %vm1744, %v2930, %v2932
  %v2945 = vmax.f32 %v2901, %v2933
  %v2946 = vmax.f32 %v2902, %v2920
  %v2947 = vmax.f32 %v2903, %v2934
  %v2948 = vmax.f32 %v2904, %v2924
  %v2949 = vmax.f32 %v2905, %v2935
  %v2950 = vmax.f32 %v2906, %v2928
  %v2951 = vmax.f32 %v2907, %v2936
  %v2952 = vmax.f32 %v2908, %v2932
  %v2953 = vld [vmem:[%s10] sm:$0xff]
  %v2954 = vld [vmem:[%s10 + $0x8] sm:$0xff]
  %v2955 = vld [vmem:[%s10 + $0x10] sm:$0xff]
  %v2956 = vld [vmem:[%s10 + $0x18] sm:$0xff]
  %v2957 = vld [vmem:[%s10 + $0x20] sm:$0xff]
  %v2958 = vld [vmem:[%s10 + $0x28] sm:$0xff]
  %v2959 = vld [vmem:[%s10 + $0x30] sm:$0xff]
  %v2960 = vld [vmem:[%s10 + $0x38] sm:$0xff]
  %v2961 = vld [vmem:[%s10 + $0x40] sm:$0xff]
  %v2962 = vld [vmem:[%s10 + $0x48] sm:$0xff]
  %v2963 = vld [vmem:[%s10 + $0x50] sm:$0xff]
  %v2964 = vld [vmem:[%s10 + $0x58] sm:$0xff]
  %v2965 = vld [vmem:[%s10 + $0x60] sm:$0xff]
  %v2966 = vld [vmem:[%s10 + $0x68] sm:$0xff]
  %v2967 = vld [vmem:[%s10 + $0x70] sm:$0xff]
  %v2968 = vld [vmem:[%s10 + $0x78] sm:$0xff]
  %v2969 = vld [vmem:[%s10 + $0x80] sm:$0xff]
  %v2970 = vld [vmem:[%s10 + $0x88] sm:$0xff]
  %v2971 = vld [vmem:[%s10 + $0x90] sm:$0xff]
  %v2972 = vld [vmem:[%s10 + $0x98] sm:$0xff]
  %v2973 = vld [vmem:[%s10 + $0xa0] sm:$0xff]
  %v2974 = vld [vmem:[%s10 + $0xa8] sm:$0xff]
  %v2975 = vld [vmem:[%s10 + $0xb0] sm:$0xff]
  %v2976 = vld [vmem:[%s10 + $0xb8] sm:$0xff]
  %v2977 = vld [vmem:[%s10 + $0xc0] sm:$0xff]
  %v2978 = vld [vmem:[%s10 + $0xc8] sm:$0xff]
  %v2979 = vld [vmem:[%s10 + $0xd0] sm:$0xff]
  %v2980 = vld [vmem:[%s10 + $0xd8] sm:$0xff]
  %v2981 = vld [vmem:[%s10 + $0xe0] sm:$0xff]
  %v2982 = vld [vmem:[%s10 + $0xe8] sm:$0xff]
  %v2983 = vld [vmem:[%s10 + $0xf0] sm:$0xff]
  %v2984 = vld [vmem:[%s10 + $0xf8] sm:$0xff]
  %v2985 = vld [vmem:[%s10 + $0x100] sm:$0xff]
  %v2986 = vld [vmem:[%s10 + $0x108] sm:$0xff]
  %v2987 = vld [vmem:[%s10 + $0x110] sm:$0xff]
  %v2988 = vld [vmem:[%s10 + $0x118] sm:$0xff]
  %v2989 = vld [vmem:[%s10 + $0x120] sm:$0xff]
  %v2990 = vld [vmem:[%s10 + $0x128] sm:$0xff]
  %v2991 = vld [vmem:[%s10 + $0x130] sm:$0xff]
  %v2992 = vld [vmem:[%s10 + $0x138] sm:$0xff]
  %v2993 = vld [vmem:[%s10 + $0x140] sm:$0xff]
  %v2994 = vld [vmem:[%s10 + $0x148] sm:$0xff]
  %v2995 = vld [vmem:[%s10 + $0x150] sm:$0xff]
  %v2996 = vld [vmem:[%s10 + $0x158] sm:$0xff]
  %v2997 = vld [vmem:[%s10 + $0x160] sm:$0xff]
  %v2998 = vld [vmem:[%s10 + $0x168] sm:$0xff]
  %v2999 = vld [vmem:[%s10 + $0x170] sm:$0xff]
  %v3000 = vld [vmem:[%s10 + $0x178] sm:$0xff]
  %v3001 = vld [vmem:[%s10 + $0x180] sm:$0xff]
  %v3002 = vld [vmem:[%s10 + $0x188] sm:$0xff]
  %v3003 = vld [vmem:[%s10 + $0x190] sm:$0xff]
  %v3004 = vld [vmem:[%s10 + $0x198] sm:$0xff]
  %v3005 = vld [vmem:[%s10 + $0x1a0] sm:$0xff]
  %v3006 = vld [vmem:[%s10 + $0x1a8] sm:$0xff]
  %v3007 = vld [vmem:[%s10 + $0x1b0] sm:$0xff]
  %v3008 = vld [vmem:[%s10 + $0x1b8] sm:$0xff]
  %v3009 = vld [vmem:[%s10 + $0x1c0] sm:$0xff]
  %v3010 = vld [vmem:[%s10 + $0x1c8] sm:$0xff]
  %v3011 = vld [vmem:[%s10 + $0x1d0] sm:$0xff]
  %v3012 = vld [vmem:[%s10 + $0x1d8] sm:$0xff]
  %v3013 = vld [vmem:[%s10 + $0x1e0] sm:$0x1f]
  %v3014 = vld [vmem:[%s10 + $0x1e8] sm:$0x1f]
  %v3016 = vsel %vm1759, %v2946, 0
  %v3019 = vsel %vm1759, %v2948, 0
  %v3022 = vsel %vm1759, %v2950, 0
  %v3025 = vsel %vm1759, %v2952, 0
  %v3028 = vsel %vm1413, %v3013, 0
  %v3031 = vsel %vm1413, %v3014, 0
  %3033 = vmatpush.msra.mxu0 %v2983
  %3034 = vmatpush.msra.mxu0 %v2981
  %3035 = vmatpush.msra.mxu0 %v2979
  %3036 = vmatpush.msra.mxu0 %v2977
  %3037 = vmatpush.msra.mxu0 %v2975
  %3038 = vmatpush.msra.mxu0 %v2973
  %3039 = vmatpush.msra.mxu0 %v2971
  %3040 = vmatpush.msra.mxu0 %v2969
  %3041 = vmatpush.msra.mxu0 %v2967
  %3042 = vmatpush.msra.mxu0 %v2965
  %3043 = vmatpush.msra.mxu0 %v2963
  %3044 = vmatpush.msra.mxu0 %v2961
  %3045 = vmatpush.msra.mxu0 %v2959
  %3046 = vmatpush.msra.mxu0 %v2957
  %3047 = vmatpush.msra.mxu0 %v2955
  %3048 = vmatpush.msra.mxu0 %v2953
  %3049 = vmatmul.f32.gmra.mxu0 %v2945
  %v3050 = vpop.f32.mrf.mxu0
  %v3051 = vadd.f32 0.0, %v3050
  %3052 = vmatmul.f32.gmra.mxu0 %v2947
  %v3053 = vpop.f32.mrf.mxu0
  %v3054 = vadd.f32 0.0, %v3053
  %3055 = vmatmul.f32.gmra.mxu0 %v2949
  %v3056 = vpop.f32.mrf.mxu0
  %v3057 = vadd.f32 0.0, %v3056
  %3058 = vmatmul.f32.gmra.mxu0 %v2951
  %v3059 = vpop.f32.mrf.mxu0
  %v3060 = vadd.f32 0.0, %v3059
  %3061 = vdwg.mxu0
  %3062 = vmatpush.msra.mxu0 0.0
  %3063 = vmatpush.msra.mxu0 %v3028
  %3064 = vmatpush.msra.mxu0 %v3011
  %3065 = vmatpush.msra.mxu0 %v3009
  %3066 = vmatpush.msra.mxu0 %v3007
  %3067 = vmatpush.msra.mxu0 %v3005
  %3068 = vmatpush.msra.mxu0 %v3003
  %3069 = vmatpush.msra.mxu0 %v3001
  %3070 = vmatpush.msra.mxu0 %v2999
  %3071 = vmatpush.msra.mxu0 %v2997
  %3072 = vmatpush.msra.mxu0 %v2995
  %3073 = vmatpush.msra.mxu0 %v2993
  %3074 = vmatpush.msra.mxu0 %v2991
  %3075 = vmatpush.msra.mxu0 %v2989
  %3076 = vmatpush.msra.mxu0 %v2987
  %3077 = vmatpush.msra.mxu0 %v2985
  %3078 = vmatmul.f32.gmra.mxu0 %v3016
  %v3079 = vpop.f32.mrf.mxu0
  %v3080 = vadd.f32 %v3051, %v3079
  %3081 = vmatmul.f32.gmra.mxu0 %v3019
  %v3082 = vpop.f32.mrf.mxu0
  %v3083 = vadd.f32 %v3054, %v3082
  %3084 = vmatmul.f32.gmra.mxu0 %v3022
  %v3085 = vpop.f32.mrf.mxu0
  %v3086 = vadd.f32 %v3057, %v3085
  %3087 = vmatmul.f32.gmra.mxu0 %v3025
  %v3088 = vpop.f32.mrf.mxu0
  %v3089 = vadd.f32 %v3060, %v3088
  %3090 = vdwg.mxu0
  %3091 = vmatpush.msra.mxu0 %v2984
  %3092 = vmatpush.msra.mxu0 %v2982
  %3093 = vmatpush.msra.mxu0 %v2980
  %3094 = vmatpush.msra.mxu0 %v2978
  %3095 = vmatpush.msra.mxu0 %v2976
  %3096 = vmatpush.msra.mxu0 %v2974
  %3097 = vmatpush.msra.mxu0 %v2972
  %3098 = vmatpush.msra.mxu0 %v2970
  %3099 = vmatpush.msra.mxu0 %v2968
  %3100 = vmatpush.msra.mxu0 %v2966
  %3101 = vmatpush.msra.mxu0 %v2964
  %3102 = vmatpush.msra.mxu0 %v2962
  %3103 = vmatpush.msra.mxu0 %v2960
  %3104 = vmatpush.msra.mxu0 %v2958
  %3105 = vmatpush.msra.mxu0 %v2956
  %3106 = vmatpush.msra.mxu0 %v2954
  %3107 = vmatmul.f32.gmra.mxu0 %v2945
  %v3108 = vpop.f32.mrf.mxu0
  %v3109 = vadd.f32 0.0, %v3108
  %3110 = vmatmul.f32.gmra.mxu0 %v2947
  %v3111 = vpop.f32.mrf.mxu0
  %v3112 = vadd.f32 0.0, %v3111
  %3113 = vmatmul.f32.gmra.mxu0 %v2949
  %v3114 = vpop.f32.mrf.mxu0
  %v3115 = vadd.f32 0.0, %v3114
  %3116 = vmatmul.f32.gmra.mxu0 %v2951
  %v3117 = vpop.f32.mrf.mxu0
  %v3118 = vadd.f32 0.0, %v3117
  %3119 = vdwg.mxu0
  %3120 = vmatpush.msra.mxu0 0.0
  %3121 = vmatpush.msra.mxu0 %v3031
  %3122 = vmatpush.msra.mxu0 %v3012
  %3123 = vmatpush.msra.mxu0 %v3010
  %3124 = vmatpush.msra.mxu0 %v3008
  %3125 = vmatpush.msra.mxu0 %v3006
  %3126 = vmatpush.msra.mxu0 %v3004
  %3127 = vmatpush.msra.mxu0 %v3002
  %3128 = vmatpush.msra.mxu0 %v3000
  %3129 = vmatpush.msra.mxu0 %v2998
  %3130 = vmatpush.msra.mxu0 %v2996
  %3131 = vmatpush.msra.mxu0 %v2994
  %3132 = vmatpush.msra.mxu0 %v2992
  %3133 = vmatpush.msra.mxu0 %v2990
  %3134 = vmatpush.msra.mxu0 %v2988
  %3135 = vmatpush.msra.mxu0 %v2986
  %3136 = vmatmul.f32.gmra.mxu0 %v3016
  %v3137 = vpop.f32.mrf.mxu0
  %v3138 = vadd.f32 %v3109, %v3137
  %3139 = vmatmul.f32.gmra.mxu0 %v3019
  %v3140 = vpop.f32.mrf.mxu0
  %v3141 = vadd.f32 %v3112, %v3140
  %3142 = vmatmul.f32.gmra.mxu0 %v3022
  %v3143 = vpop.f32.mrf.mxu0
  %v3144 = vadd.f32 %v3115, %v3143
  %3145 = vmatmul.f32.gmra.mxu0 %v3025
  %v3146 = vpop.f32.mrf.mxu0
  %v3147 = vadd.f32 %v3118, %v3146
  %3148 = vdwg.mxu0
  %3149 = vst [vmem:[#allocation4] sm:$0xff] %v3080
  %3150 = vst [vmem:[#allocation4 + $0x8] sm:$0xff] %v3138
  %3151 = vst [vmem:[#allocation4 + $0x10] sm:$0xff] %v3083
  %3152 = vst [vmem:[#allocation4 + $0x18] sm:$0xff] %v3141
  %3153 = vst [vmem:[#allocation4 + $0x20] sm:$0xff] %v3086
  %3154 = vst [vmem:[#allocation4 + $0x28] sm:$0xff] %v3144
  %3155 = vst [vmem:[#allocation4 + $0x30] sm:$0xff] %v3089
  %3156 = vst [vmem:[#allocation4 + $0x38] sm:$0xff] %v3147
  %v3157 = vld [vmem:[#allocation4] sm:$0xff]
  %v3158 = vld [vmem:[#allocation4 + $0x8] sm:$0xff]
  %v3159 = vld [vmem:[#allocation4 + $0x10] sm:$0xff]
  %v3160 = vld [vmem:[#allocation4 + $0x18] sm:$0xff]
  %v3161 = vld [vmem:[#allocation4 + $0x20] sm:$0xff]
  %v3162 = vld [vmem:[#allocation4 + $0x28] sm:$0xff]
  %v3163 = vld [vmem:[#allocation4 + $0x30] sm:$0xff]
  %v3164 = vld [vmem:[#allocation4 + $0x38] sm:$0xff]
  %3173 = vrot.lane.b32.xlu0 %v3157, 127
  %v3174 = vpop.permute.xlu0 %3173
  %3175 = vrot.lane.b32.xlu0 %v3158, 127
  %v3176 = vpop.permute.xlu0 %3175
  %3177 = vrot.lane.b32.xlu0 %v3159, 127
  %v3178 = vpop.permute.xlu0 %3177
  %3179 = vrot.lane.b32.xlu0 %v3160, 127
  %v3180 = vpop.permute.xlu0 %3179
  %3181 = vrot.lane.b32.xlu0 %v3161, 127
  %v3182 = vpop.permute.xlu0 %3181
  %3183 = vrot.lane.b32.xlu0 %v3162, 127
  %v3184 = vpop.permute.xlu0 %3183
  %3185 = vrot.lane.b32.xlu0 %v3163, 127
  %v3186 = vpop.permute.xlu0 %3185
  %3187 = vrot.lane.b32.xlu0 %v3164, 127
  %v3188 = vpop.permute.xlu0 %3187
  %v3189 = vsel %vm90, %v3174, %v3176
  %v3190 = vsel %vm90, %v3178, %v3180
  %v3191 = vsel %vm90, %v3182, %v3184
  %v3192 = vsel %vm90, %v3186, %v3188
  %3201 = vrot.lane.b32.xlu0 %v3157, 126
  %v3202 = vpop.permute.xlu0 %3201
  %3203 = vrot.lane.b32.xlu0 %v3158, 126
  %v3204 = vpop.permute.xlu0 %3203
  %3205 = vrot.lane.b32.xlu0 %v3159, 126
  %v3206 = vpop.permute.xlu0 %3205
  %3207 = vrot.lane.b32.xlu0 %v3160, 126
  %v3208 = vpop.permute.xlu0 %3207
  %3209 = vrot.lane.b32.xlu0 %v3161, 126
  %v3210 = vpop.permute.xlu0 %3209
  %3211 = vrot.lane.b32.xlu0 %v3162, 126
  %v3212 = vpop.permute.xlu0 %3211
  %3213 = vrot.lane.b32.xlu0 %v3163, 126
  %v3214 = vpop.permute.xlu0 %3213
  %3215 = vrot.lane.b32.xlu0 %v3164, 126
  %v3216 = vpop.permute.xlu0 %3215
  %v3217 = vsel %vm114, %v3202, %v3204
  %v3218 = vsel %vm114, %v3206, %v3208
  %v3219 = vsel %vm114, %v3210, %v3212
  %v3220 = vsel %vm114, %v3214, %v3216
  %3229 = vrot.lane.b32.xlu0 %v3157, 122
  %v3230 = vpop.permute.xlu0 %3229
  %3231 = vrot.lane.b32.xlu0 %v3158, 122
  %v3232 = vpop.permute.xlu0 %3231
  %3233 = vrot.lane.b32.xlu0 %v3159, 122
  %v3234 = vpop.permute.xlu0 %3233
  %3235 = vrot.lane.b32.xlu0 %v3160, 122
  %v3236 = vpop.permute.xlu0 %3235
  %3237 = vrot.lane.b32.xlu0 %v3161, 122
  %v3238 = vpop.permute.xlu0 %3237
  %3239 = vrot.lane.b32.xlu0 %v3162, 122
  %v3240 = vpop.permute.xlu0 %3239
  %3241 = vrot.lane.b32.xlu0 %v3163, 122
  %v3242 = vpop.permute.xlu0 %3241
  %3243 = vrot.lane.b32.xlu0 %v3164, 122
  %v3244 = vpop.permute.xlu0 %3243
  %vm3245 = vcmask 998400
  %v3246 = vsel %vm3245, %v3230, %v3232
  %v3247 = vsel %vm3245, %v3234, %v3236
  %v3248 = vsel %vm3245, %v3238, %v3240
  %v3249 = vsel %vm3245, %v3242, %v3244
  %3258 = vrot.lane.b32.xlu0 %v3157, 121
  %v3259 = vpop.permute.xlu0 %3258
  %3260 = vrot.lane.b32.xlu0 %v3158, 121
  %v3261 = vpop.permute.xlu0 %3260
  %3262 = vrot.lane.b32.xlu0 %v3159, 121
  %v3263 = vpop.permute.xlu0 %3262
  %3264 = vrot.lane.b32.xlu0 %v3160, 121
  %v3265 = vpop.permute.xlu0 %3264
  %3266 = vrot.lane.b32.xlu0 %v3161, 121
  %v3267 = vpop.permute.xlu0 %3266
  %3268 = vrot.lane.b32.xlu0 %v3162, 121
  %v3269 = vpop.permute.xlu0 %3268
  %3270 = vrot.lane.b32.xlu0 %v3163, 121
  %v3271 = vpop.permute.xlu0 %3270
  %3272 = vrot.lane.b32.xlu0 %v3164, 121
  %v3273 = vpop.permute.xlu0 %3272
  %vm3274 = vcmask 990208
  %v3275 = vsel %vm3274, %v3259, %v3261
  %v3276 = vsel %vm3274, %v3263, %v3265
  %v3277 = vsel %vm3274, %v3267, %v3269
  %v3278 = vsel %vm3274, %v3271, %v3273
  %3287 = vrot.lane.b32.xlu0 %v3157, 120
  %v3288 = vpop.permute.xlu0 %3287
  %3289 = vrot.lane.b32.xlu0 %v3158, 120
  %v3290 = vpop.permute.xlu0 %3289
  %3291 = vrot.lane.b32.xlu0 %v3159, 120
  %v3292 = vpop.permute.xlu0 %3291
  %3293 = vrot.lane.b32.xlu0 %v3160, 120
  %v3294 = vpop.permute.xlu0 %3293
  %3295 = vrot.lane.b32.xlu0 %v3161, 120
  %v3296 = vpop.permute.xlu0 %3295
  %3297 = vrot.lane.b32.xlu0 %v3162, 120
  %v3298 = vpop.permute.xlu0 %3297
  %3299 = vrot.lane.b32.xlu0 %v3163, 120
  %v3300 = vpop.permute.xlu0 %3299
  %3301 = vrot.lane.b32.xlu0 %v3164, 120
  %v3302 = vpop.permute.xlu0 %3301
  %vm3303 = vcmask 982016
  %v3304 = vsel %vm3303, %v3288, %v3290
  %v3305 = vsel %vm3303, %v3292, %v3294
  %v3306 = vsel %vm3303, %v3296, %v3298
  %v3307 = vsel %vm3303, %v3300, %v3302
  %3316 = vrot.lane.b32.xlu0 %v3157, 116
  %v3317 = vpop.permute.xlu0 %3316
  %3318 = vrot.lane.b32.xlu0 %v3158, 116
  %v3319 = vpop.permute.xlu0 %3318
  %3320 = vrot.lane.b32.xlu0 %v3159, 116
  %v3321 = vpop.permute.xlu0 %3320
  %3322 = vrot.lane.b32.xlu0 %v3160, 116
  %v3323 = vpop.permute.xlu0 %3322
  %3324 = vrot.lane.b32.xlu0 %v3161, 116
  %v3325 = vpop.permute.xlu0 %3324
  %3326 = vrot.lane.b32.xlu0 %v3162, 116
  %v3327 = vpop.permute.xlu0 %3326
  %3328 = vrot.lane.b32.xlu0 %v3163, 116
  %v3329 = vpop.permute.xlu0 %3328
  %3330 = vrot.lane.b32.xlu0 %v3164, 116
  %v3331 = vpop.permute.xlu0 %3330
  %v3332 = vsel %vm1774, %v3317, %v3319
  %v3333 = vsel %vm1774, %v3321, %v3323
  %v3334 = vsel %vm1774, %v3325, %v3327
  %v3335 = vsel %vm1774, %v3329, %v3331
  %3344 = vrot.lane.b32.xlu0 %v3157, 115
  %v3345 = vpop.permute.xlu0 %3344
  %3346 = vrot.lane.b32.xlu0 %v3158, 115
  %v3347 = vpop.permute.xlu0 %3346
  %3348 = vrot.lane.b32.xlu0 %v3159, 115
  %v3349 = vpop.permute.xlu0 %3348
  %3350 = vrot.lane.b32.xlu0 %v3160, 115
  %v3351 = vpop.permute.xlu0 %3350
  %3352 = vrot.lane.b32.xlu0 %v3161, 115
  %v3353 = vpop.permute.xlu0 %3352
  %3354 = vrot.lane.b32.xlu0 %v3162, 115
  %v3355 = vpop.permute.xlu0 %3354
  %3356 = vrot.lane.b32.xlu0 %v3163, 115
  %v3357 = vpop.permute.xlu0 %3356
  %3358 = vrot.lane.b32.xlu0 %v3164, 115
  %v3359 = vpop.permute.xlu0 %3358
  %vm3360 = vcmask 941056
  %v3361 = vsel %vm3360, %v3345, %v3347
  %v3362 = vsel %vm3360, %v3349, %v3351
  %v3363 = vsel %vm3360, %v3353, %v3355
  %v3364 = vsel %vm3360, %v3357, %v3359
  %3373 = vrot.lane.b32.xlu0 %v3157, 114
  %v3374 = vpop.permute.xlu0 %3373
  %3375 = vrot.lane.b32.xlu0 %v3158, 114
  %v3376 = vpop.permute.xlu0 %3375
  %3377 = vrot.lane.b32.xlu0 %v3159, 114
  %v3378 = vpop.permute.xlu0 %3377
  %3379 = vrot.lane.b32.xlu0 %v3160, 114
  %v3380 = vpop.permute.xlu0 %3379
  %3381 = vrot.lane.b32.xlu0 %v3161, 114
  %v3382 = vpop.permute.xlu0 %3381
  %3383 = vrot.lane.b32.xlu0 %v3162, 114
  %v3384 = vpop.permute.xlu0 %3383
  %3385 = vrot.lane.b32.xlu0 %v3163, 114
  %v3386 = vpop.permute.xlu0 %3385
  %3387 = vrot.lane.b32.xlu0 %v3164, 114
  %v3388 = vpop.permute.xlu0 %3387
  %vm3389 = vcmask 932864
  %v3390 = vsel %vm3389, %v3374, %v3376
  %v3391 = vsel %vm3389, %v3378, %v3380
  %v3392 = vsel %vm3389, %v3382, %v3384
  %v3393 = vsel %vm3389, %v3386, %v3388
  %v3402 = vld [vmem:[%s1 + $0x150] sm:$0xff]
  %v3403 = vld [vmem:[%s1 + $0x158] sm:$0xff]
  %v3404 = vld [vmem:[%s1 + $0x160] sm:$0xff]
  %v3405 = vld [vmem:[%s1 + $0x168] sm:$0xff]
  %v3406 = vld [vmem:[%s1 + $0x170] sm:$0xff]
  %v3407 = vld [vmem:[%s1 + $0x178] sm:$0xff]
  %v3408 = vld [vmem:[%s1 + $0x180] sm:$0xff]
  %v3409 = vld [vmem:[%s1 + $0x188] sm:$0xff]
  %v3410 = vld [vmem:[%s1 + $0x190] sm:$0xff]
  %v3411 = vld [vmem:[%s1 + $0x198] sm:$0xff]
  %v3412 = vld [vmem:[%s1 + $0x1a0] sm:$0xff]
  %v3413 = vld [vmem:[%s1 + $0x1a8] sm:$0xff]
  %v3414 = vld [vmem:[%s2 + $0x70] sm:$0xff]
  %v3415 = vld [vmem:[%s2 + $0x78] sm:$0xff]
  %v3416 = vld [vmem:[%s2 + $0x80] sm:$0xff]
  %v3417 = vld [vmem:[%s2 + $0x88] sm:$0xff]
  %3419 = vset.pattern.permute.xlu0 0
  %3420 = vperm.xlu0 %3419, %v3414
  %v3421 = vpop.permute.xlu0 %3420
  %3424 = vset.pattern.permute.xlu0 0
  %3425 = vperm.xlu0 %3424, %v3415
  %v3426 = vpop.permute.xlu0 %3425
  %3429 = vset.pattern.permute.xlu0 0
  %3430 = vperm.xlu0 %3429, %v3416
  %v3431 = vpop.permute.xlu0 %3430
  %3434 = vset.pattern.permute.xlu0 0
  %3435 = vperm.xlu0 %3434, %v3417
  %v3436 = vpop.permute.xlu0 %3435
  %vm3438 = vcmask 261120
  %v3440 = vsel %vm3438, %v3404, 0
  %v3443 = vsel %vm3438, %v3407, 0
  %v3446 = vsel %vm3438, %v3410, 0
  %v3449 = vsel %vm3438, %v3413, 0
  %3451 = vmatpush.msra.mxu0 %v3249
  %3452 = vmatpush.msra.mxu0 %v3248
  %3453 = vmatpush.msra.mxu0 %v3247
  %3454 = vmatpush.msra.mxu0 %v3246
  %3455 = vmatpush.msra.mxu0 %v3220
  %3456 = vmatpush.msra.mxu0 %v3219
  %3457 = vmatpush.msra.mxu0 %v3218
  %3458 = vmatpush.msra.mxu0 %v3217
  %3459 = vmatpush.msra.mxu0 %v3192
  %3460 = vmatpush.msra.mxu0 %v3191
  %3461 = vmatpush.msra.mxu0 %v3190
  %3462 = vmatpush.msra.mxu0 %v3189
  %3463 = vmatpush.msra.mxu0 %v3163
  %3464 = vmatpush.msra.mxu0 %v3161
  %3465 = vmatpush.msra.mxu0 %v3159
  %3466 = vmatpush.msra.mxu0 %v3157
  %3467 = vmatmul.f32.gmra.mxu0 %v3402
  %v3468 = vpop.f32.mrf.mxu0
  %v3469 = vadd.f32 %v3421, %v3468
  %3470 = vmatmul.f32.gmra.mxu0 %v3405
  %v3471 = vpop.f32.mrf.mxu0
  %v3472 = vadd.f32 %v3426, %v3471
  %3473 = vmatmul.f32.gmra.mxu0 %v3408
  %v3474 = vpop.f32.mrf.mxu0
  %v3475 = vadd.f32 %v3431, %v3474
  %3476 = vmatmul.f32.gmra.mxu0 %v3411
  %v3477 = vpop.f32.mrf.mxu0
  %v3478 = vadd.f32 %v3436, %v3477
  %3479 = vdwg.mxu0
  %3480 = vmatpush.msra.mxu0 %v3364
  %3481 = vmatpush.msra.mxu0 %v3363
  %3482 = vmatpush.msra.mxu0 %v3362
  %3483 = vmatpush.msra.mxu0 %v3361
  %3484 = vmatpush.msra.mxu0 %v3335
  %3485 = vmatpush.msra.mxu0 %v3334
  %3486 = vmatpush.msra.mxu0 %v3333
  %3487 = vmatpush.msra.mxu0 %v3332
  %3488 = vmatpush.msra.mxu0 %v3307
  %3489 = vmatpush.msra.mxu0 %v3306
  %3490 = vmatpush.msra.mxu0 %v3305
  %3491 = vmatpush.msra.mxu0 %v3304
  %3492 = vmatpush.msra.mxu0 %v3278
  %3493 = vmatpush.msra.mxu0 %v3277
  %3494 = vmatpush.msra.mxu0 %v3276
  %3495 = vmatpush.msra.mxu0 %v3275
  %3496 = vmatmul.f32.gmra.mxu0 %v3403
  %v3497 = vpop.f32.mrf.mxu0
  %v3498 = vadd.f32 %v3469, %v3497
  %3499 = vmatmul.f32.gmra.mxu0 %v3406
  %v3500 = vpop.f32.mrf.mxu0
  %v3501 = vadd.f32 %v3472, %v3500
  %3502 = vmatmul.f32.gmra.mxu0 %v3409
  %v3503 = vpop.f32.mrf.mxu0
  %v3504 = vadd.f32 %v3475, %v3503
  %3505 = vmatmul.f32.gmra.mxu0 %v3412
  %v3506 = vpop.f32.mrf.mxu0
  %v3507 = vadd.f32 %v3478, %v3506
  %3508 = vdwg.mxu0
  %3509 = vmatpush.msra.mxu0 0.0
  %3510 = vmatpush.msra.mxu0 0.0
  %3511 = vmatpush.msra.mxu0 0.0
  %3512 = vmatpush.msra.mxu0 0.0
  %3513 = vmatpush.msra.mxu0 0.0
  %3514 = vmatpush.msra.mxu0 0.0
  %3515 = vmatpush.msra.mxu0 0.0
  %3516 = vmatpush.msra.mxu0 0.0
  %3517 = vmatpush.msra.mxu0 0.0
  %3518 = vmatpush.msra.mxu0 0.0
  %3519 = vmatpush.msra.mxu0 0.0
  %3520 = vmatpush.msra.mxu0 0.0
  %3521 = vmatpush.msra.mxu0 %v3393
  %3522 = vmatpush.msra.mxu0 %v3392
  %3523 = vmatpush.msra.mxu0 %v3391
  %3524 = vmatpush.msra.mxu0 %v3390
  %3525 = vmatmul.f32.gmra.mxu0 %v3440
  %v3526 = vpop.f32.mrf.mxu0
  %v3527 = vadd.f32 %v3498, %v3526
  %3528 = vmatmul.f32.gmra.mxu0 %v3443
  %v3529 = vpop.f32.mrf.mxu0
  %v3530 = vadd.f32 %v3501, %v3529
  %3531 = vmatmul.f32.gmra.mxu0 %v3446
  %v3532 = vpop.f32.mrf.mxu0
  %v3533 = vadd.f32 %v3504, %v3532
  %3534 = vmatmul.f32.gmra.mxu0 %v3449
  %v3535 = vpop.f32.mrf.mxu0
  %v3536 = vadd.f32 %v3507, %v3535
  %3537 = vdwg.mxu0
  %3538 = vmatpush.msra.mxu0 %v3244
  %3539 = vmatpush.msra.mxu0 %v3240
  %3540 = vmatpush.msra.mxu0 %v3236
  %3541 = vmatpush.msra.mxu0 %v3232
  %3542 = vmatpush.msra.mxu0 %v3216
  %3543 = vmatpush.msra.mxu0 %v3212
  %3544 = vmatpush.msra.mxu0 %v3208
  %3545 = vmatpush.msra.mxu0 %v3204
  %3546 = vmatpush.msra.mxu0 %v3188
  %3547 = vmatpush.msra.mxu0 %v3184
  %3548 = vmatpush.msra.mxu0 %v3180
  %3549 = vmatpush.msra.mxu0 %v3176
  %3550 = vmatpush.msra.mxu0 %v3164
  %3551 = vmatpush.msra.mxu0 %v3162
  %3552 = vmatpush.msra.mxu0 %v3160
  %3553 = vmatpush.msra.mxu0 %v3158
  %3554 = vmatmul.f32.gmra.mxu0 %v3402
  %v3555 = vpop.f32.mrf.mxu0
  %v3556 = vadd.f32 %v3421, %v3555
  %3557 = vmatmul.f32.gmra.mxu0 %v3405
  %v3558 = vpop.f32.mrf.mxu0
  %v3559 = vadd.f32 %v3426, %v3558
  %3560 = vmatmul.f32.gmra.mxu0 %v3408
  %v3561 = vpop.f32.mrf.mxu0
  %v3562 = vadd.f32 %v3431, %v3561
  %3563 = vmatmul.f32.gmra.mxu0 %v3411
  %v3564 = vpop.f32.mrf.mxu0
  %v3565 = vadd.f32 %v3436, %v3564
  %3566 = vdwg.mxu0
  %3567 = vmatpush.msra.mxu0 %v3359
  %3568 = vmatpush.msra.mxu0 %v3355
  %3569 = vmatpush.msra.mxu0 %v3351
  %3570 = vmatpush.msra.mxu0 %v3347
  %3571 = vmatpush.msra.mxu0 %v3331
  %3572 = vmatpush.msra.mxu0 %v3327
  %3573 = vmatpush.msra.mxu0 %v3323
  %3574 = vmatpush.msra.mxu0 %v3319
  %3575 = vmatpush.msra.mxu0 %v3302
  %3576 = vmatpush.msra.mxu0 %v3298
  %3577 = vmatpush.msra.mxu0 %v3294
  %3578 = vmatpush.msra.mxu0 %v3290
  %3579 = vmatpush.msra.mxu0 %v3273
  %3580 = vmatpush.msra.mxu0 %v3269
  %3581 = vmatpush.msra.mxu0 %v3265
  %3582 = vmatpush.msra.mxu0 %v3261
  %3583 = vmatmul.f32.gmra.mxu0 %v3403
  %v3584 = vpop.f32.mrf.mxu0
  %v3585 = vadd.f32 %v3556, %v3584
  %3586 = vmatmul.f32.gmra.mxu0 %v3406
  %v3587 = vpop.f32.mrf.mxu0
  %v3588 = vadd.f32 %v3559, %v3587
  %3589 = vmatmul.f32.gmra.mxu0 %v3409
  %v3590 = vpop.f32.mrf.mxu0
  %v3591 = vadd.f32 %v3562, %v3590
  %3592 = vmatmul.f32.gmra.mxu0 %v3412
  %v3593 = vpop.f32.mrf.mxu0
  %v3594 = vadd.f32 %v3565, %v3593
  %3595 = vdwg.mxu0
  %3596 = vmatpush.msra.mxu0 0.0
  %3597 = vmatpush.msra.mxu0 0.0
  %3598 = vmatpush.msra.mxu0 0.0
  %3599 = vmatpush.msra.mxu0 0.0
  %3600 = vmatpush.msra.mxu0 0.0
  %3601 = vmatpush.msra.mxu0 0.0
  %3602 = vmatpush.msra.mxu0 0.0
  %3603 = vmatpush.msra.mxu0 0.0
  %3604 = vmatpush.msra.mxu0 0.0
  %3605 = vmatpush.msra.mxu0 0.0
  %3606 = vmatpush.msra.mxu0 0.0
  %3607 = vmatpush.msra.mxu0 0.0
  %3608 = vmatpush.msra.mxu0 %v3388
  %3609 = vmatpush.msra.mxu0 %v3384
  %3610 = vmatpush.msra.mxu0 %v3380
  %3611 = vmatpush.msra.mxu0 %v3376
  %3612 = vmatmul.f32.gmra.mxu0 %v3440
  %v3613 = vpop.f32.mrf.mxu0
  %v3614 = vadd.f32 %v3585, %v3613
  %3615 = vmatmul.f32.gmra.mxu0 %v3443
  %v3616 = vpop.f32.mrf.mxu0
  %v3617 = vadd.f32 %v3588, %v3616
  %3618 = vmatmul.f32.gmra.mxu0 %v3446
  %v3619 = vpop.f32.mrf.mxu0
  %v3620 = vadd.f32 %v3591, %v3619
  %3621 = vmatmul.f32.gmra.mxu0 %v3449
  %v3622 = vpop.f32.mrf.mxu0
  %v3623 = vadd.f32 %v3594, %v3622
  %3624 = vdwg.mxu0
  %v3625 = vmax.f32 %v3527, 0.0
  %v3626 = vmax.f32 %v3614, 0.0
  %v3627 = vmax.f32 %v3530, 0.0
  %v3628 = vmax.f32 %v3617, 0.0
  %v3629 = vmax.f32 %v3533, 0.0
  %v3630 = vmax.f32 %v3620, 0.0
  %v3631 = vmax.f32 %v3536, 0.0
  %v3632 = vmax.f32 %v3623, 0.0
  %v3633 = vld [vmem:[%s5] sm:$0x3]
  %v3635 = vperm.slane %v3633, 0
  %v3636 = vperm.slane %v3633, 1
  %v3639 = vmul.f32 %v3625, %v3635
  %v3640 = vmul.f32 %v3626, %v3636
  %v3641 = vmul.f32 %v3627, %v3635
  %v3642 = vmul.f32 %v3628, %v3636
  %v3643 = vmul.f32 %v3629, %v3635
  %v3644 = vmul.f32 %v3630, %v3636
  %v3645 = vmul.f32 %v3631, %v3635
  %v3646 = vmul.f32 %v3632, %v3636
  %3655 = vrot.lane.b32.xlu0 %v3639, 7
  %v3656 = vpop.permute.xlu0 %3655
  %3657 = vrot.lane.b32.xlu0 %v3640, 7
  %v3658 = vpop.permute.xlu0 %3657
  %3659 = vrot.lane.b32.xlu0 %v3641, 7
  %v3660 = vpop.permute.xlu0 %3659
  %3661 = vrot.lane.b32.xlu0 %v3642, 7
  %v3662 = vpop.permute.xlu0 %3661
  %3663 = vrot.lane.b32.xlu0 %v3643, 7
  %v3664 = vpop.permute.xlu0 %3663
  %3665 = vrot.lane.b32.xlu0 %v3644, 7
  %v3666 = vpop.permute.xlu0 %3665
  %3667 = vrot.lane.b32.xlu0 %v3645, 7
  %v3668 = vpop.permute.xlu0 %3667
  %3669 = vrot.lane.b32.xlu0 %v3646, 7
  %v3670 = vpop.permute.xlu0 %3669
  %vm3671 = vcmask 56320
  %v3672 = vsel %vm3671, %v3656, %v3658
  %v3673 = vsel %vm3671, %v3660, %v3662
  %v3674 = vsel %vm3671, %v3664, %v3666
  %v3675 = vsel %vm3671, %v3668, %v3670
  %vm3684 = vcmask 1047608
  %3685 = vst.msk [vmem:[#allocation4] sm:$0xff] %vm3684, %v3656
  %vm3686 = vcmask 236544
  %3687 = vst.msk [vmem:[#allocation4 + $0x8] sm:$0xff] %vm3686, %v3672
  %3688 = vst.msk [vmem:[#allocation4 + $0x10] sm:$0xff] %vm3684, %v3660
  %3689 = vst.msk [vmem:[#allocation4 + $0x18] sm:$0xff] %vm3686, %v3673
  %3690 = vst.msk [vmem:[#allocation4 + $0x20] sm:$0xff] %vm3684, %v3664
  %3691 = vst.msk [vmem:[#allocation4 + $0x28] sm:$0xff] %vm3686, %v3674
  %3692 = vst.msk [vmem:[#allocation4 + $0x30] sm:$0xff] %vm3684, %v3668
  %3693 = vst.msk [vmem:[#allocation4 + $0x38] sm:$0xff] %vm3686, %v3675
  %v3694 = vld [vmem:[#allocation4] sm:$0xff]
  %v3695 = vld [vmem:[#allocation4 + $0x8] sm:$0xff]
  %v3696 = vld [vmem:[#allocation4 + $0x10] sm:$0xff]
  %v3697 = vld [vmem:[#allocation4 + $0x18] sm:$0xff]
  %v3698 = vld [vmem:[#allocation4 + $0x20] sm:$0xff]
  %v3699 = vld [vmem:[#allocation4 + $0x28] sm:$0xff]
  %v3700 = vld [vmem:[#allocation4 + $0x30] sm:$0xff]
  %v3701 = vld [vmem:[#allocation4 + $0x38] sm:$0xff]
  %v3702 = vld [vmem:[%s8] sm:$0x3]
  %v3703 = vld [vmem:[%s1 + $0x708] sm:$0xff]
  %v3704 = vld [vmem:[%s1 + $0x720] sm:$0xff]
  %v3705 = vld [vmem:[%s1 + $0x738] sm:$0xff]
  %v3706 = vld [vmem:[%s1 + $0x750] sm:$0xff]
  %v3707 = vld [vmem:[%s1 + $0x768] sm:$0xff]
  %v3708 = vld [vmem:[%s1 + $0x780] sm:$0xff]
  %v3709 = vld [vmem:[%s1 + $0x798] sm:$0xff]
  %v3710 = vld [vmem:[%s1 + $0x7b0] sm:$0xff]
  %v3711 = vld [vmem:[%s1 + $0x7c8] sm:$0xff]
  %v3712 = vld [vmem:[%s1 + $0x7e0] sm:$0xff]
  %v3713 = vld [vmem:[%s1 + $0x7f8] sm:$0xff]
  %v3714 = vld [vmem:[%s1 + $0x810] sm:$0xff]
  %v3715 = vld [vmem:[%s1 + $0x828] sm:$0xff]
  %v3716 = vld [vmem:[%s1 + $0x840] sm:$0xff]
  %v3717 = vld [vmem:[%s1 + $0x858] sm:$0xff]
  %v3718 = vld [vmem:[%s1 + $0x870] sm:$0xff]
  %v3719 = vld [vmem:[%s1 + $0x888] sm:$0xff]
  %v3720 = vld [vmem:[%s1 + $0x8a0] sm:$0xff]
  %v3721 = vld [vmem:[%s1 + $0x8b8] sm:$0xff]
  %v3722 = vld [vmem:[%s1 + $0x8d0] sm:$0xff]
  %v3723 = vld [vmem:[%s1 + $0x8e8] sm:$0xff]
  %v3724 = vld [vmem:[%s1 + $0x900] sm:$0xff]
  %v3725 = vld [vmem:[%s1 + $0x918] sm:$0xff]
  %v3726 = vld [vmem:[%s1 + $0x930] sm:$0xff]
  %v3727 = vld [vmem:[%s1 + $0x948] sm:$0xff]
  %v3728 = vld [vmem:[%s1 + $0x960] sm:$0xff]
  %v3729 = vld [vmem:[%s1 + $0x978] sm:$0xff]
  %v3730 = vld [vmem:[%s1 + $0x990] sm:$0xff]
  %v3731 = vld [vmem:[%s1 + $0x9a8] sm:$0xff]
  %v3732 = vld [vmem:[%s1 + $0x9c0] sm:$0xff]
  %v3733 = vld [vmem:[%s1 + $0x9d8] sm:$0xff]
  %v3734 = vld [vmem:[%s1 + $0x9f0] sm:$0xff]
  %v3735 = vld [vmem:[%s1 + $0xa08] sm:$0x3]
  %v3736 = vld [vmem:[%s1 + $0xa10] sm:$0x3]
  %v3737 = vld [vmem:[%s1 + $0x390] sm:$0xff]
  %v3738 = vld [vmem:[%s1 + $0x3a8] sm:$0xff]
  %v3739 = vld [vmem:[%s1 + $0x3c0] sm:$0xff]
  %v3740 = vld [vmem:[%s1 + $0x3d8] sm:$0xff]
  %3741 = vmatpush.msra.mxu0 %v3718
  %3742 = vmatpush.msra.mxu0 %v3717
  %3743 = vmatpush.msra.mxu0 %v3716
  %3744 = vmatpush.msra.mxu0 %v3715
  %3745 = vmatpush.msra.mxu0 %v3714
  %3746 = vmatpush.msra.mxu0 %v3713
  %3747 = vmatpush.msra.mxu0 %v3712
  %3748 = vmatpush.msra.mxu0 %v3711
  %3749 = vmatpush.msra.mxu0 %v3710
  %3750 = vmatpush.msra.mxu0 %v3709
  %3751 = vmatpush.msra.mxu0 %v3708
  %3752 = vmatpush.msra.mxu0 %v3707
  %3753 = vmatpush.msra.mxu0 %v3706
  %3754 = vmatpush.msra.mxu0 %v3705
  %3755 = vmatpush.msra.mxu0 %v3704
  %3756 = vmatpush.msra.mxu0 %v3703
  %3757 = vmatmul.f32.gmra.mxu0 %v3694
  %v3758 = vpop.f32.mrf.mxu0
  %v3759 = vadd.f32 0.0, %v3758
  %3760 = vmatmul.f32.gmra.mxu0 %v3696
  %v3761 = vpop.f32.mrf.mxu0
  %v3762 = vadd.f32 0.0, %v3761
  %3763 = vmatmul.f32.gmra.mxu0 %v3698
  %v3764 = vpop.f32.mrf.mxu0
  %v3765 = vadd.f32 0.0, %v3764
  %3766 = vmatmul.f32.gmra.mxu0 %v3700
  %v3767 = vpop.f32.mrf.mxu0
  %v3768 = vadd.f32 0.0, %v3767
  %3769 = vdwg.mxu0
  %3770 = vmatpush.msra.mxu0 %v3734
  %3771 = vmatpush.msra.mxu0 %v3733
  %3772 = vmatpush.msra.mxu0 %v3732
  %3773 = vmatpush.msra.mxu0 %v3731
  %3774 = vmatpush.msra.mxu0 %v3730
  %3775 = vmatpush.msra.mxu0 %v3729
  %3776 = vmatpush.msra.mxu0 %v3728
  %3777 = vmatpush.msra.mxu0 %v3727
  %3778 = vmatpush.msra.mxu0 %v3726
  %3779 = vmatpush.msra.mxu0 %v3725
  %3780 = vmatpush.msra.mxu0 %v3724
  %3781 = vmatpush.msra.mxu0 %v3723
  %3782 = vmatpush.msra.mxu0 %v3722
  %3783 = vmatpush.msra.mxu0 %v3721
  %3784 = vmatpush.msra.mxu0 %v3720
  %3785 = vmatpush.msra.mxu0 %v3719
  %3786 = vmatmul.f32.gmra.mxu0 %v3695
  %v3787 = vpop.f32.mrf.mxu0
  %v3788 = vadd.f32 %v3759, %v3787
  %3789 = vmatmul.f32.gmra.mxu0 %v3697
  %v3790 = vpop.f32.mrf.mxu0
  %v3791 = vadd.f32 %v3762, %v3790
  %3792 = vmatmul.f32.gmra.mxu0 %v3699
  %v3793 = vpop.f32.mrf.mxu0
  %v3794 = vadd.f32 %v3765, %v3793
  %3795 = vmatmul.f32.gmra.mxu0 %v3701
  %v3796 = vpop.f32.mrf.mxu0
  %v3797 = vadd.f32 %v3768, %v3796
  %3798 = vdwg.mxu0
  %v3800 = vsel %vm3438, %v3737, 0
  %v3803 = vsel %vm3438, %v3738, 0
  %v3806 = vsel %vm3438, %v3739, 0
  %v3809 = vsel %vm3438, %v3740, 0
  %3811 = vmatpush.msra.mxu0 0.0
  %3812 = vmatpush.msra.mxu0 0.0
  %3813 = vmatpush.msra.mxu0 0.0
  %3814 = vmatpush.msra.mxu0 0.0
  %3815 = vmatpush.msra.mxu0 0.0
  %3816 = vmatpush.msra.mxu0 0.0
  %3817 = vmatpush.msra.mxu0 0.0
  %3818 = vmatpush.msra.mxu0 0.0
  %3819 = vmatpush.msra.mxu0 0.0
  %3820 = vmatpush.msra.mxu0 0.0
  %3821 = vmatpush.msra.mxu0 0.0
  %3822 = vmatpush.msra.mxu0 0.0
  %3823 = vmatpush.msra.mxu0 %v3797
  %3824 = vmatpush.msra.mxu0 %v3794
  %3825 = vmatpush.msra.mxu0 %v3791
  %3826 = vmatpush.msra.mxu0 %v3788
  %3827 = vmatmul.f32.gmra.mxu0 %v3800
  %v3828 = vpop.f32.mrf.mxu0
  %v3829 = vadd.f32 0.0, %v3828
  %3830 = vmatmul.f32.gmra.mxu0 %v3803
  %v3831 = vpop.f32.mrf.mxu0
  %v3832 = vadd.f32 0.0, %v3831
  %3833 = vmatmul.f32.gmra.mxu0 %v3806
  %v3834 = vpop.f32.mrf.mxu0
  %v3835 = vadd.f32 0.0, %v3834
  %3836 = vmatmul.f32.gmra.mxu0 %v3809
  %v3837 = vpop.f32.mrf.mxu0
  %v3838 = vadd.f32 0.0, %v3837
  %3839 = vdwg.mxu0
  %v3840 = vmul.f32 %v3829, 0.015625
  %v3841 = vmul.f32 %v3832, 0.015625
  %v3842 = vmul.f32 %v3835, 0.015625
  %v3843 = vmul.f32 %v3838, 0.015625
  %v3845 = vsel %vm2097, %v3840, 0
  %v3848 = vsel %vm2097, %v3841, 0
  %v3851 = vsel %vm2097, %v3842, 0
  %v3854 = vsel %vm2097, %v3843, 0
  %v3857 = vsel %vm2104, %v3735, 0
  %v3860 = vsel %vm2104, %v3736, 0
  %3862 = vmatpush.msra.mxu0 0.0
  %3863 = vmatpush.msra.mxu0 0.0
  %3864 = vmatpush.msra.mxu0 0.0
  %3865 = vmatpush.msra.mxu0 0.0
  %3866 = vmatpush.msra.mxu0 0.0
  %3867 = vmatpush.msra.mxu0 0.0
  %3868 = vmatpush.msra.mxu0 0.0
  %3869 = vmatpush.msra.mxu0 0.0
  %3870 = vmatpush.msra.mxu0 0.0
  %3871 = vmatpush.msra.mxu0 0.0
  %3872 = vmatpush.msra.mxu0 0.0
  %3873 = vmatpush.msra.mxu0 0.0
  %3874 = vmatpush.msra.mxu0 0.0
  %3875 = vmatpush.msra.mxu0 0.0
  %3876 = vmatpush.msra.mxu0 0.0
  %3877 = vmatpush.msra.mxu0 %v3857
  %3878 = vmatmul.f32.gmra.mxu0 %v3845
  %v3879 = vpop.f32.mrf.mxu0
  %v3880 = vadd.f32 0.0, %v3879
  %3881 = vmatmul.f32.gmra.mxu0 %v3848
  %v3882 = vpop.f32.mrf.mxu0
  %v3883 = vadd.f32 0.0, %v3882
  %3884 = vmatmul.f32.gmra.mxu0 %v3851
  %v3885 = vpop.f32.mrf.mxu0
  %v3886 = vadd.f32 0.0, %v3885
  %3887 = vmatmul.f32.gmra.mxu0 %v3854
  %v3888 = vpop.f32.mrf.mxu0
  %v3889 = vadd.f32 0.0, %v3888
  %3890 = vdwg.mxu0
  %3891 = vmatpush.msra.mxu0 0.0
  %3892 = vmatpush.msra.mxu0 0.0
  %3893 = vmatpush.msra.mxu0 0.0
  %3894 = vmatpush.msra.mxu0 0.0
  %3895 = vmatpush.msra.mxu0 0.0
  %3896 = vmatpush.msra.mxu0 0.0
  %3897 = vmatpush.msra.mxu0 0.0
  %3898 = vmatpush.msra.mxu0 0.0
  %3899 = vmatpush.msra.mxu0 0.0
  %3900 = vmatpush.msra.mxu0 0.0
  %3901 = vmatpush.msra.mxu0 0.0
  %3902 = vmatpush.msra.mxu0 0.0
  %3903 = vmatpush.msra.mxu0 0.0
  %3904 = vmatpush.msra.mxu0 0.0
  %3905 = vmatpush.msra.mxu0 0.0
  %3906 = vmatpush.msra.mxu0 %v3860
  %3907 = vmatmul.f32.gmra.mxu0 %v3845
  %v3908 = vpop.f32.mrf.mxu0
  %v3909 = vadd.f32 0.0, %v3908
  %3910 = vmatmul.f32.gmra.mxu0 %v3848
  %v3911 = vpop.f32.mrf.mxu0
  %v3912 = vadd.f32 0.0, %v3911
  %3913 = vmatmul.f32.gmra.mxu0 %v3851
  %v3914 = vpop.f32.mrf.mxu0
  %v3915 = vadd.f32 0.0, %v3914
  %3916 = vmatmul.f32.gmra.mxu0 %v3854
  %v3917 = vpop.f32.mrf.mxu0
  %v3918 = vadd.f32 0.0, %v3917
  %3919 = vdwg.mxu0
  %v3920 = vsub.f32 %v3694, %v3880
  %v3921 = vsub.f32 %v3695, %v3909
  %v3922 = vsub.f32 %v3696, %v3883
  %v3923 = vsub.f32 %v3697, %v3912
  %v3924 = vsub.f32 %v3698, %v3886
  %v3925 = vsub.f32 %v3699, %v3915
  %v3926 = vsub.f32 %v3700, %v3889
  %v3927 = vsub.f32 %v3701, %v3918
  %v3929 = vperm.slane %v3702, 0
  %v3930 = vperm.slane %v3702, 1
  %v3933 = vmul.f32 %v3920, %v3929
  %v3934 = vmul.f32 %v3921, %v3930
  %v3935 = vmul.f32 %v3922, %v3929
  %v3936 = vmul.f32 %v3923, %v3930
  %v3937 = vmul.f32 %v3924, %v3929
  %v3938 = vmul.f32 %v3925, %v3930
  %v3939 = vmul.f32 %v3926, %v3929
  %v3940 = vmul.f32 %v3927, %v3930
  %v3941 = vmul.f32 %v3933, %v3933
  %v3942 = vmul.f32 %v3934, %v3934
  %v3943 = vmul.f32 %v3935, %v3935
  %v3944 = vmul.f32 %v3936, %v3936
  %v3945 = vmul.f32 %v3937, %v3937
  %v3946 = vmul.f32 %v3938, %v3938
  %v3947 = vmul.f32 %v3939, %v3939
  %v3948 = vmul.f32 %v3940, %v3940
  %3949 = vmatpush.msra.mxu0 %v3718
  %3950 = vmatpush.msra.mxu0 %v3717
  %3951 = vmatpush.msra.mxu0 %v3716
  %3952 = vmatpush.msra.mxu0 %v3715
  %3953 = vmatpush.msra.mxu0 %v3714
  %3954 = vmatpush.msra.mxu0 %v3713
  %3955 = vmatpush.msra.mxu0 %v3712
  %3956 = vmatpush.msra.mxu0 %v3711
  %3957 = vmatpush.msra.mxu0 %v3710
  %3958 = vmatpush.msra.mxu0 %v3709
  %3959 = vmatpush.msra.mxu0 %v3708
  %3960 = vmatpush.msra.mxu0 %v3707
  %3961 = vmatpush.msra.mxu0 %v3706
  %3962 = vmatpush.msra.mxu0 %v3705
  %3963 = vmatpush.msra.mxu0 %v3704
  %3964 = vmatpush.msra.mxu0 %v3703
  %3965 = vmatmul.f32.gmra.mxu0 %v3941
  %v3966 = vpop.f32.mrf.mxu0
  %v3967 = vadd.f32 0.0, %v3966
  %3968 = vmatmul.f32.gmra.mxu0 %v3943
  %v3969 = vpop.f32.mrf.mxu0
  %v3970 = vadd.f32 0.0, %v3969
  %3971 = vmatmul.f32.gmra.mxu0 %v3945
  %v3972 = vpop.f32.mrf.mxu0
  %v3973 = vadd.f32 0.0, %v3972
  %3974 = vmatmul.f32.gmra.mxu0 %v3947
  %v3975 = vpop.f32.mrf.mxu0
  %v3976 = vadd.f32 0.0, %v3975
  %3977 = vdwg.mxu0
  %3978 = vmatpush.msra.mxu0 %v3734
  %3979 = vmatpush.msra.mxu0 %v3733
  %3980 = vmatpush.msra.mxu0 %v3732
  %3981 = vmatpush.msra.mxu0 %v3731
  %3982 = vmatpush.msra.mxu0 %v3730
  %3983 = vmatpush.msra.mxu0 %v3729
  %3984 = vmatpush.msra.mxu0 %v3728
  %3985 = vmatpush.msra.mxu0 %v3727
  %3986 = vmatpush.msra.mxu0 %v3726
  %3987 = vmatpush.msra.mxu0 %v3725
  %3988 = vmatpush.msra.mxu0 %v3724
  %3989 = vmatpush.msra.mxu0 %v3723
  %3990 = vmatpush.msra.mxu0 %v3722
  %3991 = vmatpush.msra.mxu0 %v3721
  %3992 = vmatpush.msra.mxu0 %v3720
  %3993 = vmatpush.msra.mxu0 %v3719
  %3994 = vmatmul.f32.gmra.mxu0 %v3942
  %v3995 = vpop.f32.mrf.mxu0
  %v3996 = vadd.f32 %v3967, %v3995
  %3997 = vmatmul.f32.gmra.mxu0 %v3944
  %v3998 = vpop.f32.mrf.mxu0
  %v3999 = vadd.f32 %v3970, %v3998
  %4000 = vmatmul.f32.gmra.mxu0 %v3946
  %v4001 = vpop.f32.mrf.mxu0
  %v4002 = vadd.f32 %v3973, %v4001
  %4003 = vmatmul.f32.gmra.mxu0 %v3948
  %v4004 = vpop.f32.mrf.mxu0
  %v4005 = vadd.f32 %v3976, %v4004
  %4006 = vdwg.mxu0
  %4007 = vmatpush.msra.mxu0 0.0
  %4008 = vmatpush.msra.mxu0 0.0
  %4009 = vmatpush.msra.mxu0 0.0
  %4010 = vmatpush.msra.mxu0 0.0
  %4011 = vmatpush.msra.mxu0 0.0
  %4012 = vmatpush.msra.mxu0 0.0
  %4013 = vmatpush.msra.mxu0 0.0
  %4014 = vmatpush.msra.mxu0 0.0
  %4015 = vmatpush.msra.mxu0 0.0
  %4016 = vmatpush.msra.mxu0 0.0
  %4017 = vmatpush.msra.mxu0 0.0
  %4018 = vmatpush.msra.mxu0 0.0
  %4019 = vmatpush.msra.mxu0 %v4005
  %4020 = vmatpush.msra.mxu0 %v4002
  %4021 = vmatpush.msra.mxu0 %v3999
  %4022 = vmatpush.msra.mxu0 %v3996
  %4023 = vmatmul.f32.gmra.mxu0 %v3800
  %v4024 = vpop.f32.mrf.mxu0
  %v4025 = vadd.f32 0.0, %v4024
  %4026 = vmatmul.f32.gmra.mxu0 %v3803
  %v4027 = vpop.f32.mrf.mxu0
  %v4028 = vadd.f32 0.0, %v4027
  %4029 = vmatmul.f32.gmra.mxu0 %v3806
  %v4030 = vpop.f32.mrf.mxu0
  %v4031 = vadd.f32 0.0, %v4030
  %4032 = vmatmul.f32.gmra.mxu0 %v3809
  %v4033 = vpop.f32.mrf.mxu0
  %v4034 = vadd.f32 0.0, %v4033
  %4035 = vdwg.mxu0
  %v4036 = vmul.f32 %v4025, 0.015625
  %v4037 = vmul.f32 %v4028, 0.015625
  %v4038 = vmul.f32 %v4031, 0.015625
  %v4039 = vmul.f32 %v4034, 0.015625
  %v4040 = vadd.f32 %v4036, 1e-05
  %v4041 = vadd.f32 %v4037, 1e-05
  %v4042 = vadd.f32 %v4038, 1e-05
  %v4043 = vadd.f32 %v4039, 1e-05
  %v4044 = vrsqrt.pop %v4040
  %v4045 = vmul.f32 %v4044, %v4040
  %v4046 = vmul.f32 %v4045, %v4044
  %v4047 = vmul.f32 0.5, %v4046
  %v4048 = vsub.f32 1.5, %v4047
  %v4049 = vmul.f32 %v4044, %v4048
  %vm4050 = vweird.f32 %v4040
  %vm4051 = vweird.f32 %v4044
  %vm4052 = vmor %vm4050, %vm4051
  %v4053 = vsel %vm4052, %v4044, %v4049
  %v4054 = vrsqrt.pop %v4041
  %v4055 = vmul.f32 %v4054, %v4041
  %v4056 = vmul.f32 %v4055, %v4054
  %v4057 = vmul.f32 0.5, %v4056
  %v4058 = vsub.f32 1.5, %v4057
  %v4059 = vmul.f32 %v4054, %v4058
  %vm4060 = vweird.f32 %v4041
  %vm4061 = vweird.f32 %v4054
  %vm4062 = vmor %vm4060, %vm4061
  %v4063 = vsel %vm4062, %v4054, %v4059
  %v4064 = vrsqrt.pop %v4042
  %v4065 = vmul.f32 %v4064, %v4042
  %v4066 = vmul.f32 %v4065, %v4064
  %v4067 = vmul.f32 0.5, %v4066
  %v4068 = vsub.f32 1.5, %v4067
  %v4069 = vmul.f32 %v4064, %v4068
  %vm4070 = vweird.f32 %v4042
  %vm4071 = vweird.f32 %v4064
  %vm4072 = vmor %vm4070, %vm4071
  %v4073 = vsel %vm4072, %v4064, %v4069
  %v4074 = vrsqrt.pop %v4043
  %v4075 = vmul.f32 %v4074, %v4043
  %v4076 = vmul.f32 %v4075, %v4074
  %v4077 = vmul.f32 0.5, %v4076
  %v4078 = vsub.f32 1.5, %v4077
  %v4079 = vmul.f32 %v4074, %v4078
  %vm4080 = vweird.f32 %v4043
  %vm4081 = vweird.f32 %v4074
  %vm4082 = vmor %vm4080, %vm4081
  %v4083 = vsel %vm4082, %v4074, %v4079
  %v4085 = vsel %vm2097, %v4053, 0
  %v4088 = vsel %vm2097, %v4063, 0
  %v4091 = vsel %vm2097, %v4073, 0
  %v4094 = vsel %vm2097, %v4083, 0
  %4096 = vmatpush.msra.mxu0 0.0
  %4097 = vmatpush.msra.mxu0 0.0
  %4098 = vmatpush.msra.mxu0 0.0
  %4099 = vmatpush.msra.mxu0 0.0
  %4100 = vmatpush.msra.mxu0 0.0
  %4101 = vmatpush.msra.mxu0 0.0
  %4102 = vmatpush.msra.mxu0 0.0
  %4103 = vmatpush.msra.mxu0 0.0
  %4104 = vmatpush.msra.mxu0 0.0
  %4105 = vmatpush.msra.mxu0 0.0
  %4106 = vmatpush.msra.mxu0 0.0
  %4107 = vmatpush.msra.mxu0 0.0
  %4108 = vmatpush.msra.mxu0 0.0
  %4109 = vmatpush.msra.mxu0 0.0
  %4110 = vmatpush.msra.mxu0 0.0
  %4111 = vmatpush.msra.mxu0 %v3857
  %4112 = vmatmul.f32.gmra.mxu0 %v4085
  %v4113 = vpop.f32.mrf.mxu0
  %v4114 = vadd.f32 0.0, %v4113
  %4115 = vmatmul.f32.gmra.mxu0 %v4088
  %v4116 = vpop.f32.mrf.mxu0
  %v4117 = vadd.f32 0.0, %v4116
  %4118 = vmatmul.f32.gmra.mxu0 %v4091
  %v4119 = vpop.f32.mrf.mxu0
  %v4120 = vadd.f32 0.0, %v4119
  %4121 = vmatmul.f32.gmra.mxu0 %v4094
  %v4122 = vpop.f32.mrf.mxu0
  %v4123 = vadd.f32 0.0, %v4122
  %4124 = vdwg.mxu0
  %4125 = vmatpush.msra.mxu0 0.0
  %4126 = vmatpush.msra.mxu0 0.0
  %4127 = vmatpush.msra.mxu0 0.0
  %4128 = vmatpush.msra.mxu0 0.0
  %4129 = vmatpush.msra.mxu0 0.0
  %4130 = vmatpush.msra.mxu0 0.0
  %4131 = vmatpush.msra.mxu0 0.0
  %4132 = vmatpush.msra.mxu0 0.0
  %4133 = vmatpush.msra.mxu0 0.0
  %4134 = vmatpush.msra.mxu0 0.0
  %4135 = vmatpush.msra.mxu0 0.0
  %4136 = vmatpush.msra.mxu0 0.0
  %4137 = vmatpush.msra.mxu0 0.0
  %4138 = vmatpush.msra.mxu0 0.0
  %4139 = vmatpush.msra.mxu0 0.0
  %4140 = vmatpush.msra.mxu0 %v3860
  %4141 = vmatmul.f32.gmra.mxu0 %v4085
  %v4142 = vpop.f32.mrf.mxu0
  %v4143 = vadd.f32 0.0, %v4142
  %4144 = vmatmul.f32.gmra.mxu0 %v4088
  %v4145 = vpop.f32.mrf.mxu0
  %v4146 = vadd.f32 0.0, %v4145
  %4147 = vmatmul.f32.gmra.mxu0 %v4091
  %v4148 = vpop.f32.mrf.mxu0
  %v4149 = vadd.f32 0.0, %v4148
  %4150 = vmatmul.f32.gmra.mxu0 %v4094
  %v4151 = vpop.f32.mrf.mxu0
  %v4152 = vadd.f32 0.0, %v4151
  %4153 = vdwg.mxu0
  %v4154 = vmul.f32 %v3933, %v4114
  %v4155 = vmul.f32 %v3934, %v4143
  %v4156 = vmul.f32 %v3935, %v4117
  %v4157 = vmul.f32 %v3936, %v4146
  %v4158 = vmul.f32 %v3937, %v4120
  %v4159 = vmul.f32 %v3938, %v4149
  %v4160 = vmul.f32 %v3939, %v4123
  %v4161 = vmul.f32 %v3940, %v4152
  %v4162 = vld [vmem:[%s2 + $0x140] sm:$0xff]
  %v4163 = vld [vmem:[%s2 + $0x148] sm:$0xff]
  %v4164 = vld [vmem:[%s2 + $0x150] sm:$0xff]
  %v4165 = vld [vmem:[%s2 + $0x158] sm:$0xff]
  %4167 = vset.pattern.permute.xlu0 0
  %4168 = vperm.xlu0 %4167, %v4162
  %v4169 = vpop.permute.xlu0 %4168
  %4172 = vset.pattern.permute.xlu0 0
  %4173 = vperm.xlu0 %4172, %v4163
  %v4174 = vpop.permute.xlu0 %4173
  %4177 = vset.pattern.permute.xlu0 0
  %4178 = vperm.xlu0 %4177, %v4164
  %v4179 = vpop.permute.xlu0 %4178
  %4182 = vset.pattern.permute.xlu0 0
  %4183 = vperm.xlu0 %4182, %v4165
  %v4184 = vpop.permute.xlu0 %4183
  %v4186 = vmul.f32 %v4154, %v4169
  %v4187 = vmul.f32 %v4155, %v4169
  %v4188 = vmul.f32 %v4156, %v4174
  %v4189 = vmul.f32 %v4157, %v4174
  %v4190 = vmul.f32 %v4158, %v4179
  %v4191 = vmul.f32 %v4159, %v4179
  %v4192 = vmul.f32 %v4160, %v4184
  %v4193 = vmul.f32 %v4161, %v4184
  %v4194 = vld [vmem:[%s2 + $0x160] sm:$0xff]
  %v4195 = vld [vmem:[%s2 + $0x168] sm:$0xff]
  %v4196 = vld [vmem:[%s2 + $0x170] sm:$0xff]
  %v4197 = vld [vmem:[%s2 + $0x178] sm:$0xff]
  %4199 = vset.pattern.permute.xlu0 0
  %4200 = vperm.xlu0 %4199, %v4194
  %v4201 = vpop.permute.xlu0 %4200
  %4204 = vset.pattern.permute.xlu0 0
  %4205 = vperm.xlu0 %4204, %v4195
  %v4206 = vpop.permute.xlu0 %4205
  %4209 = vset.pattern.permute.xlu0 0
  %4210 = vperm.xlu0 %4209, %v4196
  %v4211 = vpop.permute.xlu0 %4210
  %4214 = vset.pattern.permute.xlu0 0
  %4215 = vperm.xlu0 %4214, %v4197
  %v4216 = vpop.permute.xlu0 %4215
  %v4218 = vadd.f32 %v4186, %v4201
  %v4219 = vadd.f32 %v4187, %v4201
  %v4220 = vadd.f32 %v4188, %v4206
  %v4221 = vadd.f32 %v4189, %v4206
  %v4222 = vadd.f32 %v4190, %v4211
  %v4223 = vadd.f32 %v4191, %v4211
  %v4224 = vadd.f32 %v4192, %v4216
  %v4225 = vadd.f32 %v4193, %v4216
  %v4226 = vmax.f32 %v4218, 0.0
  %v4227 = vmax.f32 %v4219, 0.0
  %v4228 = vmax.f32 %v4220, 0.0
  %v4229 = vmax.f32 %v4221, 0.0
  %v4230 = vmax.f32 %v4222, 0.0
  %v4231 = vmax.f32 %v4223, 0.0
  %v4232 = vmax.f32 %v4224, 0.0
  %v4233 = vmax.f32 %v4225, 0.0
  %v4234 = vmul.f32 %v4226, %v3929
  %v4235 = vmul.f32 %v4227, %v3930
  %v4236 = vmul.f32 %v4228, %v3929
  %v4237 = vmul.f32 %v4229, %v3930
  %v4238 = vmul.f32 %v4230, %v3929
  %v4239 = vmul.f32 %v4231, %v3930
  %v4240 = vmul.f32 %v4232, %v3929
  %v4241 = vmul.f32 %v4233, %v3930
  %4242 = vst [vmem:[#allocation4] sm:$0xff] %v4234
  %4243 = vst [vmem:[#allocation4 + $0x8] sm:$0xff] %v4235
  %4244 = vst [vmem:[#allocation4 + $0x10] sm:$0xff] %v4236
  %4245 = vst [vmem:[#allocation4 + $0x18] sm:$0xff] %v4237
  %4246 = vst [vmem:[#allocation4 + $0x20] sm:$0xff] %v4238
  %4247 = vst [vmem:[#allocation4 + $0x28] sm:$0xff] %v4239
  %4248 = vst [vmem:[#allocation4 + $0x30] sm:$0xff] %v4240
  %4249 = vst [vmem:[#allocation4 + $0x38] sm:$0xff] %v4241
  %v4250 = vld [vmem:[#allocation4] sm:$0xff]
  %v4251 = vld [vmem:[#allocation4 + $0x8] sm:$0xff]
  %v4252 = vld [vmem:[#allocation4 + $0x10] sm:$0xff]
  %v4253 = vld [vmem:[#allocation4 + $0x18] sm:$0xff]
  %v4254 = vld [vmem:[#allocation4 + $0x20] sm:$0xff]
  %v4255 = vld [vmem:[#allocation4 + $0x28] sm:$0xff]
  %v4256 = vld [vmem:[#allocation4 + $0x30] sm:$0xff]
  %v4257 = vld [vmem:[#allocation4 + $0x38] sm:$0xff]
  %4266 = vrot.lane.b32.xlu0 %v4250, 127
  %v4267 = vpop.permute.xlu0 %4266
  %4268 = vrot.lane.b32.xlu0 %v4251, 127
  %v4269 = vpop.permute.xlu0 %4268
  %4270 = vrot.lane.b32.xlu0 %v4252, 127
  %v4271 = vpop.permute.xlu0 %4270
  %4272 = vrot.lane.b32.xlu0 %v4253, 127
  %v4273 = vpop.permute.xlu0 %4272
  %4274 = vrot.lane.b32.xlu0 %v4254, 127
  %v4275 = vpop.permute.xlu0 %4274
  %4276 = vrot.lane.b32.xlu0 %v4255, 127
  %v4277 = vpop.permute.xlu0 %4276
  %4278 = vrot.lane.b32.xlu0 %v4256, 127
  %v4279 = vpop.permute.xlu0 %4278
  %4280 = vrot.lane.b32.xlu0 %v4257, 127
  %v4281 = vpop.permute.xlu0 %4280
  %v4282 = vsel %vm90, %v4267, %v4269
  %v4283 = vsel %vm90, %v4271, %v4273
  %v4284 = vsel %vm90, %v4275, %v4277
  %v4285 = vsel %vm90, %v4279, %v4281
  %4294 = vrot.lane.b32.xlu0 %v4250, 126
  %v4295 = vpop.permute.xlu0 %4294
  %4296 = vrot.lane.b32.xlu0 %v4251, 126
  %v4297 = vpop.permute.xlu0 %4296
  %4298 = vrot.lane.b32.xlu0 %v4252, 126
  %v4299 = vpop.permute.xlu0 %4298
  %4300 = vrot.lane.b32.xlu0 %v4253, 126
  %v4301 = vpop.permute.xlu0 %4300
  %4302 = vrot.lane.b32.xlu0 %v4254, 126
  %v4303 = vpop.permute.xlu0 %4302
  %4304 = vrot.lane.b32.xlu0 %v4255, 126
  %v4305 = vpop.permute.xlu0 %4304
  %4306 = vrot.lane.b32.xlu0 %v4256, 126
  %v4307 = vpop.permute.xlu0 %4306
  %4308 = vrot.lane.b32.xlu0 %v4257, 126
  %v4309 = vpop.permute.xlu0 %4308
  %v4310 = vsel %vm114, %v4295, %v4297
  %v4311 = vsel %vm114, %v4299, %v4301
  %v4312 = vsel %vm114, %v4303, %v4305
  %v4313 = vsel %vm114, %v4307, %v4309
  %4322 = vrot.lane.b32.xlu0 %v4250, 122
  %v4323 = vpop.permute.xlu0 %4322
  %4324 = vrot.lane.b32.xlu0 %v4251, 122
  %v4325 = vpop.permute.xlu0 %4324
  %4326 = vrot.lane.b32.xlu0 %v4252, 122
  %v4327 = vpop.permute.xlu0 %4326
  %4328 = vrot.lane.b32.xlu0 %v4253, 122
  %v4329 = vpop.permute.xlu0 %4328
  %4330 = vrot.lane.b32.xlu0 %v4254, 122
  %v4331 = vpop.permute.xlu0 %4330
  %4332 = vrot.lane.b32.xlu0 %v4255, 122
  %v4333 = vpop.permute.xlu0 %4332
  %4334 = vrot.lane.b32.xlu0 %v4256, 122
  %v4335 = vpop.permute.xlu0 %4334
  %4336 = vrot.lane.b32.xlu0 %v4257, 122
  %v4337 = vpop.permute.xlu0 %4336
  %v4338 = vsel %vm3245, %v4323, %v4325
  %v4339 = vsel %vm3245, %v4327, %v4329
  %v4340 = vsel %vm3245, %v4331, %v4333
  %v4341 = vsel %vm3245, %v4335, %v4337
  %4350 = vrot.lane.b32.xlu0 %v4250, 121
  %v4351 = vpop.permute.xlu0 %4350
  %4352 = vrot.lane.b32.xlu0 %v4251, 121
  %v4353 = vpop.permute.xlu0 %4352
  %4354 = vrot.lane.b32.xlu0 %v4252, 121
  %v4355 = vpop.permute.xlu0 %4354
  %4356 = vrot.lane.b32.xlu0 %v4253, 121
  %v4357 = vpop.permute.xlu0 %4356
  %4358 = vrot.lane.b32.xlu0 %v4254, 121
  %v4359 = vpop.permute.xlu0 %4358
  %4360 = vrot.lane.b32.xlu0 %v4255, 121
  %v4361 = vpop.permute.xlu0 %4360
  %4362 = vrot.lane.b32.xlu0 %v4256, 121
  %v4363 = vpop.permute.xlu0 %4362
  %4364 = vrot.lane.b32.xlu0 %v4257, 121
  %v4365 = vpop.permute.xlu0 %4364
  %v4366 = vsel %vm3274, %v4351, %v4353
  %v4367 = vsel %vm3274, %v4355, %v4357
  %v4368 = vsel %vm3274, %v4359, %v4361
  %v4369 = vsel %vm3274, %v4363, %v4365
  %4378 = vrot.lane.b32.xlu0 %v4250, 120
  %v4379 = vpop.permute.xlu0 %4378
  %4380 = vrot.lane.b32.xlu0 %v4251, 120
  %v4381 = vpop.permute.xlu0 %4380
  %4382 = vrot.lane.b32.xlu0 %v4252, 120
  %v4383 = vpop.permute.xlu0 %4382
  %4384 = vrot.lane.b32.xlu0 %v4253, 120
  %v4385 = vpop.permute.xlu0 %4384
  %4386 = vrot.lane.b32.xlu0 %v4254, 120
  %v4387 = vpop.permute.xlu0 %4386
  %4388 = vrot.lane.b32.xlu0 %v4255, 120
  %v4389 = vpop.permute.xlu0 %4388
  %4390 = vrot.lane.b32.xlu0 %v4256, 120
  %v4391 = vpop.permute.xlu0 %4390
  %4392 = vrot.lane.b32.xlu0 %v4257, 120
  %v4393 = vpop.permute.xlu0 %4392
  %v4394 = vsel %vm3303, %v4379, %v4381
  %v4395 = vsel %vm3303, %v4383, %v4385
  %v4396 = vsel %vm3303, %v4387, %v4389
  %v4397 = vsel %vm3303, %v4391, %v4393
  %4406 = vrot.lane.b32.xlu0 %v4250, 116
  %v4407 = vpop.permute.xlu0 %4406
  %4408 = vrot.lane.b32.xlu0 %v4251, 116
  %v4409 = vpop.permute.xlu0 %4408
  %4410 = vrot.lane.b32.xlu0 %v4252, 116
  %v4411 = vpop.permute.xlu0 %4410
  %4412 = vrot.lane.b32.xlu0 %v4253, 116
  %v4413 = vpop.permute.xlu0 %4412
  %4414 = vrot.lane.b32.xlu0 %v4254, 116
  %v4415 = vpop.permute.xlu0 %4414
  %4416 = vrot.lane.b32.xlu0 %v4255, 116
  %v4417 = vpop.permute.xlu0 %4416
  %4418 = vrot.lane.b32.xlu0 %v4256, 116
  %v4419 = vpop.permute.xlu0 %4418
  %4420 = vrot.lane.b32.xlu0 %v4257, 116
  %v4421 = vpop.permute.xlu0 %4420
  %v4422 = vsel %vm1774, %v4407, %v4409
  %v4423 = vsel %vm1774, %v4411, %v4413
  %v4424 = vsel %vm1774, %v4415, %v4417
  %v4425 = vsel %vm1774, %v4419, %v4421
  %4434 = vrot.lane.b32.xlu0 %v4250, 115
  %v4435 = vpop.permute.xlu0 %4434
  %4436 = vrot.lane.b32.xlu0 %v4251, 115
  %v4437 = vpop.permute.xlu0 %4436
  %4438 = vrot.lane.b32.xlu0 %v4252, 115
  %v4439 = vpop.permute.xlu0 %4438
  %4440 = vrot.lane.b32.xlu0 %v4253, 115
  %v4441 = vpop.permute.xlu0 %4440
  %4442 = vrot.lane.b32.xlu0 %v4254, 115
  %v4443 = vpop.permute.xlu0 %4442
  %4444 = vrot.lane.b32.xlu0 %v4255, 115
  %v4445 = vpop.permute.xlu0 %4444
  %4446 = vrot.lane.b32.xlu0 %v4256, 115
  %v4447 = vpop.permute.xlu0 %4446
  %4448 = vrot.lane.b32.xlu0 %v4257, 115
  %v4449 = vpop.permute.xlu0 %4448
  %v4450 = vsel %vm3360, %v4435, %v4437
  %v4451 = vsel %vm3360, %v4439, %v4441
  %v4452 = vsel %vm3360, %v4443, %v4445
  %v4453 = vsel %vm3360, %v4447, %v4449
  %4462 = vrot.lane.b32.xlu0 %v4250, 114
  %v4463 = vpop.permute.xlu0 %4462
  %4464 = vrot.lane.b32.xlu0 %v4251, 114
  %v4465 = vpop.permute.xlu0 %4464
  %4466 = vrot.lane.b32.xlu0 %v4252, 114
  %v4467 = vpop.permute.xlu0 %4466
  %4468 = vrot.lane.b32.xlu0 %v4253, 114
  %v4469 = vpop.permute.xlu0 %4468
  %4470 = vrot.lane.b32.xlu0 %v4254, 114
  %v4471 = vpop.permute.xlu0 %4470
  %4472 = vrot.lane.b32.xlu0 %v4255, 114
  %v4473 = vpop.permute.xlu0 %4472
  %4474 = vrot.lane.b32.xlu0 %v4256, 114
  %v4475 = vpop.permute.xlu0 %4474
  %4476 = vrot.lane.b32.xlu0 %v4257, 114
  %v4477 = vpop.permute.xlu0 %4476
  %v4478 = vsel %vm3389, %v4463, %v4465
  %v4479 = vsel %vm3389, %v4467, %v4469
  %v4480 = vsel %vm3389, %v4471, %v4473
  %v4481 = vsel %vm3389, %v4475, %v4477
  %v4490 = vld [vmem:[%s1 + $0x1b0] sm:$0xff]
  %v4491 = vld [vmem:[%s1 + $0x1b8] sm:$0xff]
  %v4492 = vld [vmem:[%s1 + $0x1c0] sm:$0xff]
  %v4493 = vld [vmem:[%s1 + $0x1c8] sm:$0xff]
  %v4494 = vld [vmem:[%s1 + $0x1d0] sm:$0xff]
  %v4495 = vld [vmem:[%s1 + $0x1d8] sm:$0xff]
  %v4496 = vld [vmem:[%s1 + $0x1e0] sm:$0xff]
  %v4497 = vld [vmem:[%s1 + $0x1e8] sm:$0xff]
  %v4498 = vld [vmem:[%s1 + $0x1f0] sm:$0xff]
  %v4499 = vld [vmem:[%s1 + $0x1f8] sm:$0xff]
  %v4500 = vld [vmem:[%s1 + $0x200] sm:$0xff]
  %v4501 = vld [vmem:[%s1 + $0x208] sm:$0xff]
  %v4502 = vld [vmem:[%s1 + $0x210] sm:$0xff]
  %v4503 = vld [vmem:[%s1 + $0x218] sm:$0xff]
  %v4504 = vld [vmem:[%s1 + $0x220] sm:$0xff]
  %v4505 = vld [vmem:[%s1 + $0x228] sm:$0xff]
  %v4506 = vld [vmem:[%s1 + $0x230] sm:$0xff]
  %v4507 = vld [vmem:[%s1 + $0x238] sm:$0xff]
  %v4508 = vld [vmem:[%s1 + $0x240] sm:$0xff]
  %v4509 = vld [vmem:[%s1 + $0x248] sm:$0xff]
  %v4510 = vld [vmem:[%s1 + $0x250] sm:$0xff]
  %v4511 = vld [vmem:[%s1 + $0x258] sm:$0xff]
  %v4512 = vld [vmem:[%s1 + $0x260] sm:$0xff]
  %v4513 = vld [vmem:[%s1 + $0x268] sm:$0xff]
  %v4514 = vld [vmem:[%s2 + $0x90] sm:$0xff]
  %v4515 = vld [vmem:[%s2 + $0x98] sm:$0xff]
  %v4516 = vld [vmem:[%s2 + $0xa0] sm:$0xff]
  %v4517 = vld [vmem:[%s2 + $0xa8] sm:$0xff]
  %v4518 = vld [vmem:[%s2 + $0xb0] sm:$0xff]
  %v4519 = vld [vmem:[%s2 + $0xb8] sm:$0xff]
  %v4520 = vld [vmem:[%s2 + $0xc0] sm:$0xff]
  %v4521 = vld [vmem:[%s2 + $0xc8] sm:$0xff]
  %4523 = vset.pattern.permute.xlu0 0
  %4524 = vperm.xlu0 %4523, %v4514
  %v4525 = vpop.permute.xlu0 %4524
  %4528 = vset.pattern.permute.xlu0 0
  %4529 = vperm.xlu0 %4528, %v4515
  %v4530 = vpop.permute.xlu0 %4529
  %4533 = vset.pattern.permute.xlu0 0
  %4534 = vperm.xlu0 %4533, %v4516
  %v4535 = vpop.permute.xlu0 %4534
  %4538 = vset.pattern.permute.xlu0 0
  %4539 = vperm.xlu0 %4538, %v4517
  %v4540 = vpop.permute.xlu0 %4539
  %4543 = vset.pattern.permute.xlu0 0
  %4544 = vperm.xlu0 %4543, %v4518
  %v4545 = vpop.permute.xlu0 %4544
  %4548 = vset.pattern.permute.xlu0 0
  %4549 = vperm.xlu0 %4548, %v4519
  %v4550 = vpop.permute.xlu0 %4549
  %4553 = vset.pattern.permute.xlu0 0
  %4554 = vperm.xlu0 %4553, %v4520
  %v4555 = vpop.permute.xlu0 %4554
  %4558 = vset.pattern.permute.xlu0 0
  %4559 = vperm.xlu0 %4558, %v4521
  %v4560 = vpop.permute.xlu0 %4559
  %v4563 = vsel %vm3438, %v4492, 0
  %v4566 = vsel %vm3438, %v4495, 0
  %v4569 = vsel %vm3438, %v4498, 0
  %v4572 = vsel %vm3438, %v4501, 0
  %v4575 = vsel %vm3438, %v4504, 0
  %v4578 = vsel %vm3438, %v4507, 0
  %v4581 = vsel %vm3438, %v4510, 0
  %v4584 = vsel %vm3438, %v4513, 0
  %4586 = vmatpush.msra.mxu0 %v4341
  %4587 = vmatpush.msra.mxu0 %v4340
  %4588 = vmatpush.msra.mxu0 %v4339
  %4589 = vmatpush.msra.mxu0 %v4338
  %4590 = vmatpush.msra.mxu0 %v4313
  %4591 = vmatpush.msra.mxu0 %v4312
  %4592 = vmatpush.msra.mxu0 %v4311
  %4593 = vmatpush.msra.mxu0 %v4310
  %4594 = vmatpush.msra.mxu0 %v4285
  %4595 = vmatpush.msra.mxu0 %v4284
  %4596 = vmatpush.msra.mxu0 %v4283
  %4597 = vmatpush.msra.mxu0 %v4282
  %4598 = vmatpush.msra.mxu0 %v4256
  %4599 = vmatpush.msra.mxu0 %v4254
  %4600 = vmatpush.msra.mxu0 %v4252
  %4601 = vmatpush.msra.mxu0 %v4250
  %4602 = vmatmul.f32.gmra.mxu0 %v4490
  %v4603 = vpop.f32.mrf.mxu0
  %v4604 = vadd.f32 %v4525, %v4603
  %4605 = vmatmul.f32.gmra.mxu0 %v4493
  %v4606 = vpop.f32.mrf.mxu0
  %v4607 = vadd.f32 %v4530, %v4606
  %4608 = vmatmul.f32.gmra.mxu0 %v4496
  %v4609 = vpop.f32.mrf.mxu0
  %v4610 = vadd.f32 %v4535, %v4609
  %4611 = vmatmul.f32.gmra.mxu0 %v4499
  %v4612 = vpop.f32.mrf.mxu0
  %v4613 = vadd.f32 %v4540, %v4612
  %4614 = vmatmul.f32.gmra.mxu0 %v4502
  %v4615 = vpop.f32.mrf.mxu0
  %v4616 = vadd.f32 %v4545, %v4615
  %4617 = vmatmul.f32.gmra.mxu0 %v4505
  %v4618 = vpop.f32.mrf.mxu0
  %v4619 = vadd.f32 %v4550, %v4618
  %4620 = vmatmul.f32.gmra.mxu0 %v4508
  %v4621 = vpop.f32.mrf.mxu0
  %v4622 = vadd.f32 %v4555, %v4621
  %4623 = vmatmul.f32.gmra.mxu0 %v4511
  %v4624 = vpop.f32.mrf.mxu0
  %v4625 = vadd.f32 %v4560, %v4624
  %4626 = vdwg.mxu0
  %4627 = vmatpush.msra.mxu0 %v4453
  %4628 = vmatpush.msra.mxu0 %v4452
  %4629 = vmatpush.msra.mxu0 %v4451
  %4630 = vmatpush.msra.mxu0 %v4450
  %4631 = vmatpush.msra.mxu0 %v4425
  %4632 = vmatpush.msra.mxu0 %v4424
  %4633 = vmatpush.msra.mxu0 %v4423
  %4634 = vmatpush.msra.mxu0 %v4422
  %4635 = vmatpush.msra.mxu0 %v4397
  %4636 = vmatpush.msra.mxu0 %v4396
  %4637 = vmatpush.msra.mxu0 %v4395
  %4638 = vmatpush.msra.mxu0 %v4394
  %4639 = vmatpush.msra.mxu0 %v4369
  %4640 = vmatpush.msra.mxu0 %v4368
  %4641 = vmatpush.msra.mxu0 %v4367
  %4642 = vmatpush.msra.mxu0 %v4366
  %4643 = vmatmul.f32.gmra.mxu0 %v4491
  %v4644 = vpop.f32.mrf.mxu0
  %v4645 = vadd.f32 %v4604, %v4644
  %4646 = vmatmul.f32.gmra.mxu0 %v4494
  %v4647 = vpop.f32.mrf.mxu0
  %v4648 = vadd.f32 %v4607, %v4647
  %4649 = vmatmul.f32.gmra.mxu0 %v4497
  %v4650 = vpop.f32.mrf.mxu0
  %v4651 = vadd.f32 %v4610, %v4650
  %4652 = vmatmul.f32.gmra.mxu0 %v4500
  %v4653 = vpop.f32.mrf.mxu0
  %v4654 = vadd.f32 %v4613, %v4653
  %4655 = vmatmul.f32.gmra.mxu0 %v4503
  %v4656 = vpop.f32.mrf.mxu0
  %v4657 = vadd.f32 %v4616, %v4656
  %4658 = vmatmul.f32.gmra.mxu0 %v4506
  %v4659 = vpop.f32.mrf.mxu0
  %v4660 = vadd.f32 %v4619, %v4659
  %4661 = vmatmul.f32.gmra.mxu0 %v4509
  %v4662 = vpop.f32.mrf.mxu0
  %v4663 = vadd.f32 %v4622, %v4662
  %4664 = vmatmul.f32.gmra.mxu0 %v4512
  %v4665 = vpop.f32.mrf.mxu0
  %v4666 = vadd.f32 %v4625, %v4665
  %4667 = vdwg.mxu0
  %4668 = vmatpush.msra.mxu0 0.0
  %4669 = vmatpush.msra.mxu0 0.0
  %4670 = vmatpush.msra.mxu0 0.0
  %4671 = vmatpush.msra.mxu0 0.0
  %4672 = vmatpush.msra.mxu0 0.0
  %4673 = vmatpush.msra.mxu0 0.0
  %4674 = vmatpush.msra.mxu0 0.0
  %4675 = vmatpush.msra.mxu0 0.0
  %4676 = vmatpush.msra.mxu0 0.0
  %4677 = vmatpush.msra.mxu0 0.0
  %4678 = vmatpush.msra.mxu0 0.0
  %4679 = vmatpush.msra.mxu0 0.0
  %4680 = vmatpush.msra.mxu0 %v4481
  %4681 = vmatpush.msra.mxu0 %v4480
  %4682 = vmatpush.msra.mxu0 %v4479
  %4683 = vmatpush.msra.mxu0 %v4478
  %4684 = vmatmul.f32.gmra.mxu0 %v4563
  %v4685 = vpop.f32.mrf.mxu0
  %v4686 = vadd.f32 %v4645, %v4685
  %4687 = vmatmul.f32.gmra.mxu0 %v4566
  %v4688 = vpop.f32.mrf.mxu0
  %v4689 = vadd.f32 %v4648, %v4688
  %4690 = vmatmul.f32.gmra.mxu0 %v4569
  %v4691 = vpop.f32.mrf.mxu0
  %v4692 = vadd.f32 %v4651, %v4691
  %4693 = vmatmul.f32.gmra.mxu0 %v4572
  %v4694 = vpop.f32.mrf.mxu0
  %v4695 = vadd.f32 %v4654, %v4694
  %4696 = vmatmul.f32.gmra.mxu0 %v4575
  %v4697 = vpop.f32.mrf.mxu0
  %v4698 = vadd.f32 %v4657, %v4697
  %4699 = vmatmul.f32.gmra.mxu0 %v4578
  %v4700 = vpop.f32.mrf.mxu0
  %v4701 = vadd.f32 %v4660, %v4700
  %4702 = vmatmul.f32.gmra.mxu0 %v4581
  %v4703 = vpop.f32.mrf.mxu0
  %v4704 = vadd.f32 %v4663, %v4703
  %4705 = vmatmul.f32.gmra.mxu0 %v4584
  %v4706 = vpop.f32.mrf.mxu0
  %v4707 = vadd.f32 %v4666, %v4706
  %4708 = vdwg.mxu0
  %4709 = vmatpush.msra.mxu0 %v4337
  %4710 = vmatpush.msra.mxu0 %v4333
  %4711 = vmatpush.msra.mxu0 %v4329
  %4712 = vmatpush.msra.mxu0 %v4325
  %4713 = vmatpush.msra.mxu0 %v4309
  %4714 = vmatpush.msra.mxu0 %v4305
  %4715 = vmatpush.msra.mxu0 %v4301
  %4716 = vmatpush.msra.mxu0 %v4297
  %4717 = vmatpush.msra.mxu0 %v4281
  %4718 = vmatpush.msra.mxu0 %v4277
  %4719 = vmatpush.msra.mxu0 %v4273
  %4720 = vmatpush.msra.mxu0 %v4269
  %4721 = vmatpush.msra.mxu0 %v4257
  %4722 = vmatpush.msra.mxu0 %v4255
  %4723 = vmatpush.msra.mxu0 %v4253
  %4724 = vmatpush.msra.mxu0 %v4251
  %4725 = vmatmul.f32.gmra.mxu0 %v4490
  %v4726 = vpop.f32.mrf.mxu0
  %v4727 = vadd.f32 %v4525, %v4726
  %4728 = vmatmul.f32.gmra.mxu0 %v4493
  %v4729 = vpop.f32.mrf.mxu0
  %v4730 = vadd.f32 %v4530, %v4729
  %4731 = vmatmul.f32.gmra.mxu0 %v4496
  %v4732 = vpop.f32.mrf.mxu0
  %v4733 = vadd.f32 %v4535, %v4732
  %4734 = vmatmul.f32.gmra.mxu0 %v4499
  %v4735 = vpop.f32.mrf.mxu0
  %v4736 = vadd.f32 %v4540, %v4735
  %4737 = vmatmul.f32.gmra.mxu0 %v4502
  %v4738 = vpop.f32.mrf.mxu0
  %v4739 = vadd.f32 %v4545, %v4738
  %4740 = vmatmul.f32.gmra.mxu0 %v4505
  %v4741 = vpop.f32.mrf.mxu0
  %v4742 = vadd.f32 %v4550, %v4741
  %4743 = vmatmul.f32.gmra.mxu0 %v4508
  %v4744 = vpop.f32.mrf.mxu0
  %v4745 = vadd.f32 %v4555, %v4744
  %4746 = vmatmul.f32.gmra.mxu0 %v4511
  %v4747 = vpop.f32.mrf.mxu0
  %v4748 = vadd.f32 %v4560, %v4747
  %4749 = vdwg.mxu0
  %4750 = vmatpush.msra.mxu0 %v4449
  %4751 = vmatpush.msra.mxu0 %v4445
  %4752 = vmatpush.msra.mxu0 %v4441
  %4753 = vmatpush.msra.mxu0 %v4437
  %4754 = vmatpush.msra.mxu0 %v4421
  %4755 = vmatpush.msra.mxu0 %v4417
  %4756 = vmatpush.msra.mxu0 %v4413
  %4757 = vmatpush.msra.mxu0 %v4409
  %4758 = vmatpush.msra.mxu0 %v4393
  %4759 = vmatpush.msra.mxu0 %v4389
  %4760 = vmatpush.msra.mxu0 %v4385
  %4761 = vmatpush.msra.mxu0 %v4381
  %4762 = vmatpush.msra.mxu0 %v4365
  %4763 = vmatpush.msra.mxu0 %v4361
  %4764 = vmatpush.msra.mxu0 %v4357
  %4765 = vmatpush.msra.mxu0 %v4353
  %4766 = vmatmul.f32.gmra.mxu0 %v4491
  %v4767 = vpop.f32.mrf.mxu0
  %v4768 = vadd.f32 %v4727, %v4767
  %4769 = vmatmul.f32.gmra.mxu0 %v4494
  %v4770 = vpop.f32.mrf.mxu0
  %v4771 = vadd.f32 %v4730, %v4770
  %4772 = vmatmul.f32.gmra.mxu0 %v4497
  %v4773 = vpop.f32.mrf.mxu0
  %v4774 = vadd.f32 %v4733, %v4773
  %4775 = vmatmul.f32.gmra.mxu0 %v4500
  %v4776 = vpop.f32.mrf.mxu0
  %v4777 = vadd.f32 %v4736, %v4776
  %4778 = vmatmul.f32.gmra.mxu0 %v4503
  %v4779 = vpop.f32.mrf.mxu0
  %v4780 = vadd.f32 %v4739, %v4779
  %4781 = vmatmul.f32.gmra.mxu0 %v4506
  %v4782 = vpop.f32.mrf.mxu0
  %v4783 = vadd.f32 %v4742, %v4782
  %4784 = vmatmul.f32.gmra.mxu0 %v4509
  %v4785 = vpop.f32.mrf.mxu0
  %v4786 = vadd.f32 %v4745, %v4785
  %4787 = vmatmul.f32.gmra.mxu0 %v4512
  %v4788 = vpop.f32.mrf.mxu0
  %v4789 = vadd.f32 %v4748, %v4788
  %4790 = vdwg.mxu0
  %4791 = vmatpush.msra.mxu0 0.0
  %4792 = vmatpush.msra.mxu0 0.0
  %4793 = vmatpush.msra.mxu0 0.0
  %4794 = vmatpush.msra.mxu0 0.0
  %4795 = vmatpush.msra.mxu0 0.0
  %4796 = vmatpush.msra.mxu0 0.0
  %4797 = vmatpush.msra.mxu0 0.0
  %4798 = vmatpush.msra.mxu0 0.0
  %4799 = vmatpush.msra.mxu0 0.0
  %4800 = vmatpush.msra.mxu0 0.0
  %4801 = vmatpush.msra.mxu0 0.0
  %4802 = vmatpush.msra.mxu0 0.0
  %4803 = vmatpush.msra.mxu0 %v4477
  %4804 = vmatpush.msra.mxu0 %v4473
  %4805 = vmatpush.msra.mxu0 %v4469
  %4806 = vmatpush.msra.mxu0 %v4465
  %4807 = vmatmul.f32.gmra.mxu0 %v4563
  %v4808 = vpop.f32.mrf.mxu0
  %v4809 = vadd.f32 %v4768, %v4808
  %4810 = vmatmul.f32.gmra.mxu0 %v4566
  %v4811 = vpop.f32.mrf.mxu0
  %v4812 = vadd.f32 %v4771, %v4811
  %4813 = vmatmul.f32.gmra.mxu0 %v4569
  %v4814 = vpop.f32.mrf.mxu0
  %v4815 = vadd.f32 %v4774, %v4814
  %4816 = vmatmul.f32.gmra.mxu0 %v4572
  %v4817 = vpop.f32.mrf.mxu0
  %v4818 = vadd.f32 %v4777, %v4817
  %4819 = vmatmul.f32.gmra.mxu0 %v4575
  %v4820 = vpop.f32.mrf.mxu0
  %v4821 = vadd.f32 %v4780, %v4820
  %4822 = vmatmul.f32.gmra.mxu0 %v4578
  %v4823 = vpop.f32.mrf.mxu0
  %v4824 = vadd.f32 %v4783, %v4823
  %4825 = vmatmul.f32.gmra.mxu0 %v4581
  %v4826 = vpop.f32.mrf.mxu0
  %v4827 = vadd.f32 %v4786, %v4826
  %4828 = vmatmul.f32.gmra.mxu0 %v4584
  %v4829 = vpop.f32.mrf.mxu0
  %v4830 = vadd.f32 %v4789, %v4829
  %4831 = vdwg.mxu0
  %v4832 = vmax.f32 %v4686, 0.0
  %v4833 = vmax.f32 %v4809, 0.0
  %v4834 = vmax.f32 %v4689, 0.0
  %v4835 = vmax.f32 %v4812, 0.0
  %v4836 = vmax.f32 %v4692, 0.0
  %v4837 = vmax.f32 %v4815, 0.0
  %v4838 = vmax.f32 %v4695, 0.0
  %v4839 = vmax.f32 %v4818, 0.0
  %v4840 = vmax.f32 %v4698, 0.0
  %v4841 = vmax.f32 %v4821, 0.0
  %v4842 = vmax.f32 %v4701, 0.0
  %v4843 = vmax.f32 %v4824, 0.0
  %v4844 = vmax.f32 %v4704, 0.0
  %v4845 = vmax.f32 %v4827, 0.0
  %v4846 = vmax.f32 %v4707, 0.0
  %v4847 = vmax.f32 %v4830, 0.0
  %v4848 = vld [vmem:[%s5] sm:$0x3]
  %v4850 = vperm.slane %v4848, 0
  %v4851 = vperm.slane %v4848, 1
  %v4854 = vmul.f32 %v4832, %v4850
  %v4855 = vmul.f32 %v4833, %v4851
  %v4856 = vmul.f32 %v4834, %v4850
  %v4857 = vmul.f32 %v4835, %v4851
  %v4858 = vmul.f32 %v4836, %v4850
  %v4859 = vmul.f32 %v4837, %v4851
  %v4860 = vmul.f32 %v4838, %v4850
  %v4861 = vmul.f32 %v4839, %v4851
  %v4862 = vmul.f32 %v4840, %v4850
  %v4863 = vmul.f32 %v4841, %v4851
  %v4864 = vmul.f32 %v4842, %v4850
  %v4865 = vmul.f32 %v4843, %v4851
  %v4866 = vmul.f32 %v4844, %v4850
  %v4867 = vmul.f32 %v4845, %v4851
  %v4868 = vmul.f32 %v4846, %v4850
  %v4869 = vmul.f32 %v4847, %v4851
  %4886 = vrot.lane.b32.xlu0 %v4854, 7
  %v4887 = vpop.permute.xlu0 %4886
  %4888 = vrot.lane.b32.xlu0 %v4855, 7
  %v4889 = vpop.permute.xlu0 %4888
  %4890 = vrot.lane.b32.xlu0 %v4856, 7
  %v4891 = vpop.permute.xlu0 %4890
  %4892 = vrot.lane.b32.xlu0 %v4857, 7
  %v4893 = vpop.permute.xlu0 %4892
  %4894 = vrot.lane.b32.xlu0 %v4858, 7
  %v4895 = vpop.permute.xlu0 %4894
  %4896 = vrot.lane.b32.xlu0 %v4859, 7
  %v4897 = vpop.permute.xlu0 %4896
  %4898 = vrot.lane.b32.xlu0 %v4860, 7
  %v4899 = vpop.permute.xlu0 %4898
  %4900 = vrot.lane.b32.xlu0 %v4861, 7
  %v4901 = vpop.permute.xlu0 %4900
  %4902 = vrot.lane.b32.xlu0 %v4862, 7
  %v4903 = vpop.permute.xlu0 %4902
  %4904 = vrot.lane.b32.xlu0 %v4863, 7
  %v4905 = vpop.permute.xlu0 %4904
  %4906 = vrot.lane.b32.xlu0 %v4864, 7
  %v4907 = vpop.permute.xlu0 %4906
  %4908 = vrot.lane.b32.xlu0 %v4865, 7
  %v4909 = vpop.permute.xlu0 %4908
  %4910 = vrot.lane.b32.xlu0 %v4866, 7
  %v4911 = vpop.permute.xlu0 %4910
  %4912 = vrot.lane.b32.xlu0 %v4867, 7
  %v4913 = vpop.permute.xlu0 %4912
  %4914 = vrot.lane.b32.xlu0 %v4868, 7
  %v4915 = vpop.permute.xlu0 %4914
  %4916 = vrot.lane.b32.xlu0 %v4869, 7
  %v4917 = vpop.permute.xlu0 %4916
  %v4918 = vsel %vm3671, %v4887, %v4889
  %v4919 = vsel %vm3671, %v4891, %v4893
  %v4920 = vsel %vm3671, %v4895, %v4897
  %v4921 = vsel %vm3671, %v4899, %v4901
  %v4922 = vsel %vm3671, %v4903, %v4905
  %v4923 = vsel %vm3671, %v4907, %v4909
  %v4924 = vsel %vm3671, %v4911, %v4913
  %v4925 = vsel %vm3671, %v4915, %v4917
  %4942 = vst.msk [vmem:[#allocation4] sm:$0xff] %vm3684, %v4887
  %4943 = vst.msk [vmem:[#allocation4 + $0x8] sm:$0xff] %vm3686, %v4918
  %4944 = vst.msk [vmem:[#allocation4 + $0x10] sm:$0xff] %vm3684, %v4891
  %4945 = vst.msk [vmem:[#allocation4 + $0x18] sm:$0xff] %vm3686, %v4919
  %4946 = vst.msk [vmem:[#allocation4 + $0x20] sm:$0xff] %vm3684, %v4895
  %4947 = vst.msk [vmem:[#allocation4 + $0x28] sm:$0xff] %vm3686, %v4920
  %4948 = vst.msk [vmem:[#allocation4 + $0x30] sm:$0xff] %vm3684, %v4899
  %4949 = vst.msk [vmem:[#allocation4 + $0x38] sm:$0xff] %vm3686, %v4921
  %4950 = vst.msk [vmem:[#allocation4 + $0x40] sm:$0xff] %vm3684, %v4903
  %4951 = vst.msk [vmem:[#allocation4 + $0x48] sm:$0xff] %vm3686, %v4922
  %4952 = vst.msk [vmem:[#allocation4 + $0x50] sm:$0xff] %vm3684, %v4907
  %4953 = vst.msk [vmem:[#allocation4 + $0x58] sm:$0xff] %vm3686, %v4923
  %4954 = vst.msk [vmem:[#allocation4 + $0x60] sm:$0xff] %vm3684, %v4911
  %4955 = vst.msk [vmem:[#allocation4 + $0x68] sm:$0xff] %vm3686, %v4924
  %4956 = vst.msk [vmem:[#allocation4 + $0x70] sm:$0xff] %vm3684, %v4915
  %4957 = vst.msk [vmem:[#allocation4 + $0x78] sm:$0xff] %vm3686, %v4925
  %v4958 = vld [vmem:[#allocation4] sm:$0xff]
  %v4959 = vld [vmem:[#allocation4 + $0x8] sm:$0xff]
  %v4960 = vld [vmem:[#allocation4 + $0x10] sm:$0xff]
  %v4961 = vld [vmem:[#allocation4 + $0x18] sm:$0xff]
  %v4962 = vld [vmem:[#allocation4 + $0x20] sm:$0xff]
  %v4963 = vld [vmem:[#allocation4 + $0x28] sm:$0xff]
  %v4964 = vld [vmem:[#allocation4 + $0x30] sm:$0xff]
  %v4965 = vld [vmem:[#allocation4 + $0x38] sm:$0xff]
  %v4966 = vld [vmem:[#allocation4 + $0x40] sm:$0xff]
  %v4967 = vld [vmem:[#allocation4 + $0x48] sm:$0xff]
  %v4968 = vld [vmem:[#allocation4 + $0x50] sm:$0xff]
  %v4969 = vld [vmem:[#allocation4 + $0x58] sm:$0xff]
  %v4970 = vld [vmem:[#allocation4 + $0x60] sm:$0xff]
  %v4971 = vld [vmem:[#allocation4 + $0x68] sm:$0xff]
  %v4972 = vld [vmem:[#allocation4 + $0x70] sm:$0xff]
  %v4973 = vld [vmem:[#allocation4 + $0x78] sm:$0xff]
  %v4974 = vld [vmem:[%s1 + $0x270] sm:$0xff]
  %v4975 = vld [vmem:[%s1 + $0x288] sm:$0xff]
  %v4976 = vld [vmem:[%s1 + $0x2a0] sm:$0xff]
  %v4977 = vld [vmem:[%s1 + $0x2b8] sm:$0xff]
  %v4978 = vld [vmem:[%s1 + $0x2d0] sm:$0xff]
  %v4979 = vld [vmem:[%s1 + $0x2e8] sm:$0xff]
  %v4980 = vld [vmem:[%s1 + $0x300] sm:$0xff]
  %v4981 = vld [vmem:[%s1 + $0x318] sm:$0xff]
  %v4982 = vld [vmem:[%s2 + $0xd0] sm:$0xff]
  %v4983 = vld [vmem:[%s2 + $0xd8] sm:$0xff]
  %v4984 = vld [vmem:[%s2 + $0xe0] sm:$0xff]
  %v4985 = vld [vmem:[%s2 + $0xe8] sm:$0xff]
  %v4986 = vld [vmem:[%s2 + $0xf0] sm:$0xff]
  %v4987 = vld [vmem:[%s2 + $0xf8] sm:$0xff]
  %v4988 = vld [vmem:[%s2 + $0x100] sm:$0xff]
  %v4989 = vld [vmem:[%s2 + $0x108] sm:$0xff]
  %4991 = vset.pattern.permute.xlu0 0
  %4992 = vperm.xlu0 %4991, %v4982
  %v4993 = vpop.permute.xlu0 %4992
  %4996 = vset.pattern.permute.xlu0 0
  %4997 = vperm.xlu0 %4996, %v4983
  %v4998 = vpop.permute.xlu0 %4997
  %5001 = vset.pattern.permute.xlu0 0
  %5002 = vperm.xlu0 %5001, %v4984
  %v5003 = vpop.permute.xlu0 %5002
  %5006 = vset.pattern.permute.xlu0 0
  %5007 = vperm.xlu0 %5006, %v4985
  %v5008 = vpop.permute.xlu0 %5007
  %5011 = vset.pattern.permute.xlu0 0
  %5012 = vperm.xlu0 %5011, %v4986
  %v5013 = vpop.permute.xlu0 %5012
  %5016 = vset.pattern.permute.xlu0 0
  %5017 = vperm.xlu0 %5016, %v4987
  %v5018 = vpop.permute.xlu0 %5017
  %5021 = vset.pattern.permute.xlu0 0
  %5022 = vperm.xlu0 %5021, %v4988
  %v5023 = vpop.permute.xlu0 %5022
  %5026 = vset.pattern.permute.xlu0 0
  %5027 = vperm.xlu0 %5026, %v4989
  %v5028 = vpop.permute.xlu0 %5027
  %vm5030 = vcmask 523264
  %v5032 = vsel %vm5030, %v4974, 0
  %v5035 = vsel %vm5030, %v4975, 0
  %v5038 = vsel %vm5030, %v4976, 0
  %v5041 = vsel %vm5030, %v4977, 0
  %v5044 = vsel %vm5030, %v4978, 0
  %v5047 = vsel %vm5030, %v4979, 0
  %v5050 = vsel %vm5030, %v4980, 0
  %v5053 = vsel %vm5030, %v4981, 0
  %5055 = vmatpush.msra.mxu0 0.0
  %5056 = vmatpush.msra.mxu0 0.0
  %5057 = vmatpush.msra.mxu0 0.0
  %5058 = vmatpush.msra.mxu0 0.0
  %5059 = vmatpush.msra.mxu0 0.0
  %5060 = vmatpush.msra.mxu0 0.0
  %5061 = vmatpush.msra.mxu0 0.0
  %5062 = vmatpush.msra.mxu0 0.0
  %5063 = vmatpush.msra.mxu0 %v4972
  %5064 = vmatpush.msra.mxu0 %v4970
  %5065 = vmatpush.msra.mxu0 %v4968
  %5066 = vmatpush.msra.mxu0 %v4966
  %5067 = vmatpush.msra.mxu0 %v4964
  %5068 = vmatpush.msra.mxu0 %v4962
  %5069 = vmatpush.msra.mxu0 %v4960
  %5070 = vmatpush.msra.mxu0 %v4958
  %5071 = vmatmul.f32.gmra.mxu0 %v5032
  %v5072 = vpop.f32.mrf.mxu0
  %v5073 = vadd.f32 %v4993, %v5072
  %5074 = vmatmul.f32.gmra.mxu0 %v5035
  %v5075 = vpop.f32.mrf.mxu0
  %v5076 = vadd.f32 %v4998, %v5075
  %5077 = vmatmul.f32.gmra.mxu0 %v5038
  %v5078 = vpop.f32.mrf.mxu0
  %v5079 = vadd.f32 %v5003, %v5078
  %5080 = vmatmul.f32.gmra.mxu0 %v5041
  %v5081 = vpop.f32.mrf.mxu0
  %v5082 = vadd.f32 %v5008, %v5081
  %5083 = vmatmul.f32.gmra.mxu0 %v5044
  %v5084 = vpop.f32.mrf.mxu0
  %v5085 = vadd.f32 %v5013, %v5084
  %5086 = vmatmul.f32.gmra.mxu0 %v5047
  %v5087 = vpop.f32.mrf.mxu0
  %v5088 = vadd.f32 %v5018, %v5087
  %5089 = vmatmul.f32.gmra.mxu0 %v5050
  %v5090 = vpop.f32.mrf.mxu0
  %v5091 = vadd.f32 %v5023, %v5090
  %5092 = vmatmul.f32.gmra.mxu0 %v5053
  %v5093 = vpop.f32.mrf.mxu0
  %v5094 = vadd.f32 %v5028, %v5093
  %5095 = vdwg.mxu0
  %5096 = vmatpush.msra.mxu0 0.0
  %5097 = vmatpush.msra.mxu0 0.0
  %5098 = vmatpush.msra.mxu0 0.0
  %5099 = vmatpush.msra.mxu0 0.0
  %5100 = vmatpush.msra.mxu0 0.0
  %5101 = vmatpush.msra.mxu0 0.0
  %5102 = vmatpush.msra.mxu0 0.0
  %5103 = vmatpush.msra.mxu0 0.0
  %5104 = vmatpush.msra.mxu0 %v4973
  %5105 = vmatpush.msra.mxu0 %v4971
  %5106 = vmatpush.msra.mxu0 %v4969
  %5107 = vmatpush.msra.mxu0 %v4967
  %5108 = vmatpush.msra.mxu0 %v4965
  %5109 = vmatpush.msra.mxu0 %v4963
  %5110 = vmatpush.msra.mxu0 %v4961
  %5111 = vmatpush.msra.mxu0 %v4959
  %5112 = vmatmul.f32.gmra.mxu0 %v5032
  %v5113 = vpop.f32.mrf.mxu0
  %v5114 = vadd.f32 %v4993, %v5113
  %5115 = vmatmul.f32.gmra.mxu0 %v5035
  %v5116 = vpop.f32.mrf.mxu0
  %v5117 = vadd.f32 %v4998, %v5116
  %5118 = vmatmul.f32.gmra.mxu0 %v5038
  %v5119 = vpop.f32.mrf.mxu0
  %v5120 = vadd.f32 %v5003, %v5119
  %5121 = vmatmul.f32.gmra.mxu0 %v5041
  %v5122 = vpop.f32.mrf.mxu0
  %v5123 = vadd.f32 %v5008, %v5122
  %5124 = vmatmul.f32.gmra.mxu0 %v5044
  %v5125 = vpop.f32.mrf.mxu0
  %v5126 = vadd.f32 %v5013, %v5125
  %5127 = vmatmul.f32.gmra.mxu0 %v5047
  %v5128 = vpop.f32.mrf.mxu0
  %v5129 = vadd.f32 %v5018, %v5128
  %5130 = vmatmul.f32.gmra.mxu0 %v5050
  %v5131 = vpop.f32.mrf.mxu0
  %v5132 = vadd.f32 %v5023, %v5131
  %5133 = vmatmul.f32.gmra.mxu0 %v5053
  %v5134 = vpop.f32.mrf.mxu0
  %v5135 = vadd.f32 %v5028, %v5134
  %5136 = vdwg.mxu0
  %v5137 = vmax.f32 %v5073, 0.0
  %v5138 = vmax.f32 %v5114, 0.0
  %v5139 = vmax.f32 %v5076, 0.0
  %v5140 = vmax.f32 %v5117, 0.0
  %v5141 = vmax.f32 %v5079, 0.0
  %v5142 = vmax.f32 %v5120, 0.0
  %v5143 = vmax.f32 %v5082, 0.0
  %v5144 = vmax.f32 %v5123, 0.0
  %v5145 = vmax.f32 %v5085, 0.0
  %v5146 = vmax.f32 %v5126, 0.0
  %v5147 = vmax.f32 %v5088, 0.0
  %v5148 = vmax.f32 %v5129, 0.0
  %v5149 = vmax.f32 %v5091, 0.0
  %v5150 = vmax.f32 %v5132, 0.0
  %v5151 = vmax.f32 %v5094, 0.0
  %v5152 = vmax.f32 %v5135, 0.0
  %v5153 = vld [vmem:[%s8] sm:$0x3]
  %v5155 = vperm.slane %v5153, 0
  %v5156 = vperm.slane %v5153, 1
  %v5159 = vmul.f32 %v5137, %v5155
  %v5160 = vmul.f32 %v5138, %v5156
  %v5161 = vmul.f32 %v5139, %v5155
  %v5162 = vmul.f32 %v5140, %v5156
  %v5163 = vmul.f32 %v5141, %v5155
  %v5164 = vmul.f32 %v5142, %v5156
  %v5165 = vmul.f32 %v5143, %v5155
  %v5166 = vmul.f32 %v5144, %v5156
  %v5167 = vmul.f32 %v5145, %v5155
  %v5168 = vmul.f32 %v5146, %v5156
  %v5169 = vmul.f32 %v5147, %v5155
  %v5170 = vmul.f32 %v5148, %v5156
  %v5171 = vmul.f32 %v5149, %v5155
  %v5172 = vmul.f32 %v5150, %v5156
  %v5173 = vmul.f32 %v5151, %v5155
  %v5174 = vmul.f32 %v5152, %v5156
  %5175 = vst [vmem:[#allocation4] sm:$0xff] %v5159
  %5176 = vst [vmem:[#allocation4 + $0x8] sm:$0xff] %v5160
  %5177 = vst [vmem:[#allocation4 + $0x10] sm:$0xff] %v5161
  %5178 = vst [vmem:[#allocation4 + $0x18] sm:$0xff] %v5162
  %5179 = vst [vmem:[#allocation4 + $0x20] sm:$0xff] %v5163
  %5180 = vst [vmem:[#allocation4 + $0x28] sm:$0xff] %v5164
  %5181 = vst [vmem:[#allocation4 + $0x30] sm:$0xff] %v5165
  %5182 = vst [vmem:[#allocation4 + $0x38] sm:$0xff] %v5166
  %5183 = vst [vmem:[#allocation4 + $0x40] sm:$0xff] %v5167
  %5184 = vst [vmem:[#allocation4 + $0x48] sm:$0xff] %v5168
  %5185 = vst [vmem:[#allocation4 + $0x50] sm:$0xff] %v5169
  %5186 = vst [vmem:[#allocation4 + $0x58] sm:$0xff] %v5170
  %5187 = vst [vmem:[#allocation4 + $0x60] sm:$0xff] %v5171
  %5188 = vst [vmem:[#allocation4 + $0x68] sm:$0xff] %v5172
  %5189 = vst [vmem:[#allocation4 + $0x70] sm:$0xff] %v5173
  %5190 = vst [vmem:[#allocation4 + $0x78] sm:$0xff] %v5174
  %v5191 = vld [vmem:[#allocation4] sm:$0xff]
  %v5192 = vld [vmem:[#allocation4 + $0x8] sm:$0xff]
  %v5193 = vld [vmem:[#allocation4 + $0x10] sm:$0xff]
  %v5194 = vld [vmem:[#allocation4 + $0x18] sm:$0xff]
  %v5195 = vld [vmem:[#allocation4 + $0x20] sm:$0xff]
  %v5196 = vld [vmem:[#allocation4 + $0x28] sm:$0xff]
  %v5197 = vld [vmem:[#allocation4 + $0x30] sm:$0xff]
  %v5198 = vld [vmem:[#allocation4 + $0x38] sm:$0xff]
  %v5199 = vld [vmem:[#allocation4 + $0x40] sm:$0xff]
  %v5200 = vld [vmem:[#allocation4 + $0x48] sm:$0xff]
  %v5201 = vld [vmem:[#allocation4 + $0x50] sm:$0xff]
  %v5202 = vld [vmem:[#allocation4 + $0x58] sm:$0xff]
  %v5203 = vld [vmem:[#allocation4 + $0x60] sm:$0xff]
  %v5204 = vld [vmem:[#allocation4 + $0x68] sm:$0xff]
  %v5205 = vld [vmem:[#allocation4 + $0x70] sm:$0xff]
  %v5206 = vld [vmem:[#allocation4 + $0x78] sm:$0xff]
  %v5207 = vld [vmem:[%s1 + $0x708] sm:$0xff]
  %v5208 = vld [vmem:[%s1 + $0x720] sm:$0xff]
  %v5209 = vld [vmem:[%s1 + $0x738] sm:$0xff]
  %v5210 = vld [vmem:[%s1 + $0x750] sm:$0xff]
  %v5211 = vld [vmem:[%s1 + $0x768] sm:$0xff]
  %v5212 = vld [vmem:[%s1 + $0x780] sm:$0xff]
  %v5213 = vld [vmem:[%s1 + $0x798] sm:$0xff]
  %v5214 = vld [vmem:[%s1 + $0x7b0] sm:$0xff]
  %v5215 = vld [vmem:[%s1 + $0x7c8] sm:$0xff]
  %v5216 = vld [vmem:[%s1 + $0x7e0] sm:$0xff]
  %v5217 = vld [vmem:[%s1 + $0x7f8] sm:$0xff]
  %v5218 = vld [vmem:[%s1 + $0x810] sm:$0xff]
  %v5219 = vld [vmem:[%s1 + $0x828] sm:$0xff]
  %v5220 = vld [vmem:[%s1 + $0x840] sm:$0xff]
  %v5221 = vld [vmem:[%s1 + $0x858] sm:$0xff]
  %v5222 = vld [vmem:[%s1 + $0x870] sm:$0xff]
  %v5223 = vld [vmem:[%s1 + $0x888] sm:$0xff]
  %v5224 = vld [vmem:[%s1 + $0x8a0] sm:$0xff]
  %v5225 = vld [vmem:[%s1 + $0x8b8] sm:$0xff]
  %v5226 = vld [vmem:[%s1 + $0x8d0] sm:$0xff]
  %v5227 = vld [vmem:[%s1 + $0x8e8] sm:$0xff]
  %v5228 = vld [vmem:[%s1 + $0x900] sm:$0xff]
  %v5229 = vld [vmem:[%s1 + $0x918] sm:$0xff]
  %v5230 = vld [vmem:[%s1 + $0x930] sm:$0xff]
  %v5231 = vld [vmem:[%s1 + $0x948] sm:$0xff]
  %v5232 = vld [vmem:[%s1 + $0x960] sm:$0xff]
  %v5233 = vld [vmem:[%s1 + $0x978] sm:$0xff]
  %v5234 = vld [vmem:[%s1 + $0x990] sm:$0xff]
  %v5235 = vld [vmem:[%s1 + $0x9a8] sm:$0xff]
  %v5236 = vld [vmem:[%s1 + $0x9c0] sm:$0xff]
  %v5237 = vld [vmem:[%s1 + $0x9d8] sm:$0xff]
  %v5238 = vld [vmem:[%s1 + $0x9f0] sm:$0xff]
  %5239 = vmatpush.msra.mxu0 %v5222
  %5240 = vmatpush.msra.mxu0 %v5221
  %5241 = vmatpush.msra.mxu0 %v5220
  %5242 = vmatpush.msra.mxu0 %v5219
  %5243 = vmatpush.msra.mxu0 %v5218
  %5244 = vmatpush.msra.mxu0 %v5217
  %5245 = vmatpush.msra.mxu0 %v5216
  %5246 = vmatpush.msra.mxu0 %v5215
  %5247 = vmatpush.msra.mxu0 %v5214
  %5248 = vmatpush.msra.mxu0 %v5213
  %5249 = vmatpush.msra.mxu0 %v5212
  %5250 = vmatpush.msra.mxu0 %v5211
  %5251 = vmatpush.msra.mxu0 %v5210
  %5252 = vmatpush.msra.mxu0 %v5209
  %5253 = vmatpush.msra.mxu0 %v5208
  %5254 = vmatpush.msra.mxu0 %v5207
  %5255 = vmatmul.f32.gmra.mxu0 %v5191
  %v5256 = vpop.f32.mrf.mxu0
  %v5257 = vadd.f32 0.0, %v5256
  %5258 = vmatmul.f32.gmra.mxu0 %v5193
  %v5259 = vpop.f32.mrf.mxu0
  %v5260 = vadd.f32 0.0, %v5259
  %5261 = vmatmul.f32.gmra.mxu0 %v5195
  %v5262 = vpop.f32.mrf.mxu0
  %v5263 = vadd.f32 0.0, %v5262
  %5264 = vmatmul.f32.gmra.mxu0 %v5197
  %v5265 = vpop.f32.mrf.mxu0
  %v5266 = vadd.f32 0.0, %v5265
  %5267 = vmatmul.f32.gmra.mxu0 %v5199
  %v5268 = vpop.f32.mrf.mxu0
  %v5269 = vadd.f32 0.0, %v5268
  %5270 = vmatmul.f32.gmra.mxu0 %v5201
  %v5271 = vpop.f32.mrf.mxu0
  %v5272 = vadd.f32 0.0, %v5271
  %5273 = vmatmul.f32.gmra.mxu0 %v5203
  %v5274 = vpop.f32.mrf.mxu0
  %v5275 = vadd.f32 0.0, %v5274
  %5276 = vmatmul.f32.gmra.mxu0 %v5205
  %v5277 = vpop.f32.mrf.mxu0
  %v5278 = vadd.f32 0.0, %v5277
  %5279 = vdwg.mxu0
  %5280 = vmatpush.msra.mxu0 %v5238
  %5281 = vmatpush.msra.mxu0 %v5237
  %5282 = vmatpush.msra.mxu0 %v5236
  %5283 = vmatpush.msra.mxu0 %v5235
  %5284 = vmatpush.msra.mxu0 %v5234
  %5285 = vmatpush.msra.mxu0 %v5233
  %5286 = vmatpush.msra.mxu0 %v5232
  %5287 = vmatpush.msra.mxu0 %v5231
  %5288 = vmatpush.msra.mxu0 %v5230
  %5289 = vmatpush.msra.mxu0 %v5229
  %5290 = vmatpush.msra.mxu0 %v5228
  %5291 = vmatpush.msra.mxu0 %v5227
  %5292 = vmatpush.msra.mxu0 %v5226
  %5293 = vmatpush.msra.mxu0 %v5225
  %5294 = vmatpush.msra.mxu0 %v5224
  %5295 = vmatpush.msra.mxu0 %v5223
  %5296 = vmatmul.f32.gmra.mxu0 %v5192
  %v5297 = vpop.f32.mrf.mxu0
  %v5298 = vadd.f32 %v5257, %v5297
  %5299 = vmatmul.f32.gmra.mxu0 %v5194
  %v5300 = vpop.f32.mrf.mxu0
  %v5301 = vadd.f32 %v5260, %v5300
  %5302 = vmatmul.f32.gmra.mxu0 %v5196
  %v5303 = vpop.f32.mrf.mxu0
  %v5304 = vadd.f32 %v5263, %v5303
  %5305 = vmatmul.f32.gmra.mxu0 %v5198
  %v5306 = vpop.f32.mrf.mxu0
  %v5307 = vadd.f32 %v5266, %v5306
  %5308 = vmatmul.f32.gmra.mxu0 %v5200
  %v5309 = vpop.f32.mrf.mxu0
  %v5310 = vadd.f32 %v5269, %v5309
  %5311 = vmatmul.f32.gmra.mxu0 %v5202
  %v5312 = vpop.f32.mrf.mxu0
  %v5313 = vadd.f32 %v5272, %v5312
  %5314 = vmatmul.f32.gmra.mxu0 %v5204
  %v5315 = vpop.f32.mrf.mxu0
  %v5316 = vadd.f32 %v5275, %v5315
  %5317 = vmatmul.f32.gmra.mxu0 %v5206
  %v5318 = vpop.f32.mrf.mxu0
  %v5319 = vadd.f32 %v5278, %v5318
  %5320 = vdwg.mxu0
  %v5321 = vmul.f32 %v5298, 0.0625
  %v5322 = vmul.f32 %v5301, 0.0625
  %v5323 = vmul.f32 %v5304, 0.0625
  %v5324 = vmul.f32 %v5307, 0.0625
  %v5325 = vmul.f32 %v5310, 0.0625
  %v5326 = vmul.f32 %v5313, 0.0625
  %v5327 = vmul.f32 %v5316, 0.0625
  %v5328 = vmul.f32 %v5319, 0.0625
  %v5329 = vld [vmem:[%s1 + $0x330] sm:$0xff]
  %v5330 = vld [vmem:[%s1 + $0x348] sm:$0xff]
  %v5331 = vld [vmem:[%s2 + $0x110] sm:$0xff]
  %v5332 = vld [vmem:[%s2 + $0x118] sm:$0xff]
  %5334 = vset.pattern.permute.xlu0 0
  %5335 = vperm.xlu0 %5334, %v5331
  %v5336 = vpop.permute.xlu0 %5335
  %5339 = vset.pattern.permute.xlu0 0
  %5340 = vperm.xlu0 %5339, %v5332
  %v5341 = vpop.permute.xlu0 %5340
  %v5344 = vsel %vm5030, %v5329, 0
  %v5347 = vsel %vm5030, %v5330, 0
  %5349 = vmatpush.msra.mxu0 0.0
  %5350 = vmatpush.msra.mxu0 0.0
  %5351 = vmatpush.msra.mxu0 0.0
  %5352 = vmatpush.msra.mxu0 0.0
  %5353 = vmatpush.msra.mxu0 0.0
  %5354 = vmatpush.msra.mxu0 0.0
  %5355 = vmatpush.msra.mxu0 0.0
  %5356 = vmatpush.msra.mxu0 0.0
  %5357 = vmatpush.msra.mxu0 %v5328
  %5358 = vmatpush.msra.mxu0 %v5327
  %5359 = vmatpush.msra.mxu0 %v5326
  %5360 = vmatpush.msra.mxu0 %v5325
  %5361 = vmatpush.msra.mxu0 %v5324
  %5362 = vmatpush.msra.mxu0 %v5323
  %5363 = vmatpush.msra.mxu0 %v5322
  %5364 = vmatpush.msra.mxu0 %v5321
  %5365 = vmatmul.f32.gmra.mxu0 %v5344
  %v5366 = vpop.f32.mrf.mxu0
  %v5367 = vadd.f32 %v5336, %v5366
  %5368 = vmatmul.f32.gmra.mxu0 %v5347
  %v5369 = vpop.f32.mrf.mxu0
  %v5370 = vadd.f32 %v5341, %v5369
  %5371 = vdwg.mxu0
  %5372 = vst.msk [vmem:[%s11] sm:$0xff] %vm2097, %v5367
  %5373 = vst.msk [vmem:[%s11 + $0x8] sm:$0xff] %vm2097, %v5370
  // Predicated region
  $region46: #{forward.1} parent=0 // pred_check
    _
  $region47: #{forward.1} parent=0 // pred_check_branch
    %5375 = sbr.rel (0) target = $region49
  $region48: #{forward.1} parent=0 // pred_region
    _
  $region49: #{forward.1} parent=0 // pred_fallthru
    _
  // Predicated region
  $region50: #{forward.1} parent=0 // pred_check
    _
  $region51: #{forward.1} parent=0 // pred_check_branch
    %5377 = sbr.rel (0) target = $region53
  $region52: #{forward.1} parent=0 // pred_region
    _
  $region53: #{forward.1} parent=0 // pred_fallthru
    _

</llo_original>
